<compile_context>
chip_gen: v7x
topology: tpu7x:2x2x1
jax: 0.10.0
libtpu: 0.0.40
codegen_flags: <defaults>
</compile_context>

<pallas_src>
from functools import partial

import jax
import jax.numpy as jnp
from jax import lax
from jax.experimental import pallas as pl
from jax.experimental.pallas import tpu as pltpu

_STEP_UNROLL = 8   # explicit partial-unroll factor for the reverse step loop


def _diffusion_kernel(steps, num_chains, s_pad,
                      a_ref, abc_ref,          # scalar prefetch (SMEM): fused per-step scalars
                      x_ref, c_ref,            # (C, TM) activations, lane-dense in HW
                      w1t_ref, wct_ref,        # (Hd, C)
                      tembT_ref,               # (Hd, s_pad)   (b1 folded in, zero padded)
                      w2t_ref, b2t_ref,        # (C, Hd), (C, 1)
                      out_ref,                 # (C, TM)
                      cbase_ref):              # VMEM scratch (Hd, TM)
    C, TM = x_ref.shape
    half = TM // num_chains

    # Step-invariant conditioning term, once per tile; parked in VMEM scratch
    # instead of being held live in vregs across the whole step loop.
    cbase_ref[...] = jnp.dot(wct_ref[...], c_ref[...],
                             preferred_element_type=jnp.float32)

    def body(g, xs):
        step = steps - 1 - g                                  # t = steps-1, ..., 0

        # temb[:, step] via a 128-lane aligned window load + in-window mask/reduce:
        # O(Hd x 128) per step regardless of total step count.
        if s_pad > 128:
            win_start = pl.multiple_of((step // 128) * 128, 128)
            win = tembT_ref[:, pl.ds(win_start, 128)]          # (Hd, 128)
            lane_t = step - win_start
        else:
            win = tembT_ref[...]                               # (Hd, 128)
            lane_t = step
        lane = lax.broadcasted_iota(jnp.int32, win.shape, 1)
        temb_t = jnp.sum(jnp.where(lane == lane_t, win, 0.0),
                         axis=1, keepdims=True)                # (Hd, 1)

        # Tiny weights re-loaded per step from VMEM (vld slots are free; keeps
        # vreg pressure low). f32 operands: at these sizes bf16 buys nothing.
        w1t = w1t_ref[...]
        w2t = w2t_ref[...]
        b2t = b2t_ref[...]
        a_t = a_ref[step]
        abc_t = abc_ref[step]

        # num_chains independent lane sub-tiles: their dot chains have no mutual
        # dependency, so the scheduler overlaps one chain's MXU drain with the
        # other's pushes (hides result-FIFO latency, esp. on v5e).
        new_xs = []
        for ci in range(num_chains):
            x = xs[ci]
            cb = cbase_ref[:, ci * half:(ci + 1) * half]       # per-step VMEM load
            h = jnp.dot(w1t, x, preferred_element_type=jnp.float32) + cb + temb_t
            h = jnp.maximum(h, 0.0)
            eps = jnp.dot(w2t, h, preferred_element_type=jnp.float32) + b2t
            new_xs.append(a_t * x - abc_t * eps)
        return tuple(new_xs)

    init = tuple(x_ref[:, ci * half:(ci + 1) * half] for ci in range(num_chains))
    xs = lax.fori_loop(0, steps, body, init, unroll=min(_STEP_UNROLL, steps))
    for ci in range(num_chains):
        out_ref[:, ci * half:(ci + 1) * half] = xs[ci]


def gaussian_diffusion_forward(x_T, c, params, steps, tile_m=512):
    """x_T, c: (B, C, H, W) float32 (NCHW, PyTorch convention)."""
    B, C, H, W = x_T.shape
    HW = H * W
    Hd = params["w1"].shape[1]

    tile_m = min(tile_m, HW)
    # v7x has 2 TensorCores: keep >= 2 grid points on the "parallel" axes.
    if B * (HW // tile_m) < 2 and HW >= 256 and HW % 256 == 0:
        tile_m = HW // 2
    assert HW % tile_m == 0 and tile_m % 128 == 0, \
        "H*W must tile into multiples of 128 lanes"
    # TODO(synk): add a masked tail path for H*W not a multiple of 128.
    num_tiles = HW // tile_m
    num_chains = 2 if tile_m % 256 == 0 else 1

    # NCHW -> (B, C, HW): contiguous reshape, no HBM transpose pass (in or out).
    x_flat = x_T.reshape(B, C, HW)
    c_flat = c.reshape(B, C, HW)

    # diffusion buffers (same math as the PyTorch __init__), with per-step
    # scalar fusion:  x_{t-1} = a[t] * x_t - (a[t]*bc[t]) * eps
    betas = jnp.linspace(0.0005, 0.003, steps, dtype=jnp.float32)
    alphas = 1.0 - betas
    alphas_bar = jnp.cumprod(alphas)
    a = jnp.sqrt(1.0 / alphas)                                 # one_over_sqrt_alphas
    abc = a * (betas / jnp.sqrt(1.0 - alphas_bar))             # fused a * bc

    # transposed / pre-folded epsilon-model params (lane-dense orientation)
    w1t = params["w1"].T                                       # (Hd, C)
    wct = params["wc"].T                                       # (Hd, C)
    w2t = params["w2"].T                                       # (C, Hd)
    b2t = params["b2"].T                                       # (C, 1)
    s_pad = max(128, int(pl.cdiv(steps, 128)) * 128)           # lane-pad the step axis
    tembT = jnp.zeros((Hd, s_pad), jnp.float32).at[:, :steps].set(
        (params["temb"] + params["b1"]).T)                     # b1 folded in

    kernel = partial(_diffusion_kernel, steps, num_chains, s_pad)

    inv = lambda shape: pl.BlockSpec(shape, lambda b, i, *_: (0, 0))     # grid-invariant
    act = lambda: pl.BlockSpec((pl.Squeezed(), C, tile_m),
                               lambda b, i, *_: (b, 0, i))               # per (batch, HW-tile)

    out = pl.pallas_call(
        kernel,
        out_shape=jax.ShapeDtypeStruct((B, C, HW), jnp.float32),
        grid_spec=pltpu.PrefetchScalarGridSpec(
            num_scalar_prefetch=2,                 # a, abc -> SMEM
            grid=(B, num_tiles),
            in_specs=[
                act(),                             # x_T tile
                act(),                             # c tile
                inv((Hd, C)),                      # W1^T
                inv((Hd, C)),                      # Wc^T
                inv((Hd, s_pad)),                  # (temb + b1)^T, padded
                inv((C, Hd)),                      # W2^T
                inv((C, 1)),                       # b2^T
            ],
            out_specs=act(),
            scratch_shapes=[pltpu.VMEM((Hd, tile_m), jnp.float32)],   # cbase
        ),
        compiler_params=pltpu.CompilerParams(
            dimension_semantics=("parallel", "parallel")),   # megacore/v7x split
    )(a, abc, x_flat, c_flat, w1t, wct, tembT, w2t, b2t)

    return out.reshape(B, C, H, W)


def _reference_forward(x_T, c, params, steps):
    """Pure-JAX reference mirroring the PyTorch forward loop."""
    B, C, H, W = x_T.shape
    M = B * H * W
    to_flat = lambda t: jnp.transpose(t, (0, 2, 3, 1)).reshape(M, C)
    xt, cf = to_flat(x_T), to_flat(c)

    betas = jnp.linspace(0.0005, 0.003, steps, dtype=jnp.float32)
    alphas = 1.0 - betas
    alphas_bar = jnp.cumprod(alphas)
    a = jnp.sqrt(1.0 / alphas)
    bc = betas / jnp.sqrt(1.0 - alphas_bar)

    for step in reversed(range(steps)):
        h = jnp.maximum(
            xt @ params["w1"] + cf @ params["wc"] + params["b1"]
            + params["temb"][step], 0.0)
        eps = h @ params["w2"] + params["b2"]
        xt = a[step] * (xt - bc[step] * eps)
    return jnp.transpose(xt.reshape(B, H, W, C), (0, 3, 1, 2))


if __name__ == "__main__":
    B, C, H, W = 2, 4, 16, 16
    Hd = 32
    steps = 8

    key = jax.random.PRNGKey(0)
    k_x, k_c, k1, k2, k3, k4 = jax.random.split(key, 6)

    x_T = jax.random.normal(k_x, (B, C, H, W), dtype=jnp.float32)
    c = jax.random.normal(k_c, (B, C, H, W), dtype=jnp.float32)

    params = {
        "w1": 0.1 * jax.random.normal(k1, (C, Hd), dtype=jnp.float32),
        "wc": 0.1 * jax.random.normal(k2, (C, Hd), dtype=jnp.float32),
        "b1": jnp.zeros((1, Hd), dtype=jnp.float32),
        "temb": 0.1 * jax.random.normal(k3, (steps, Hd), dtype=jnp.float32),
        "w2": 0.1 * jax.random.normal(k4, (Hd, C), dtype=jnp.float32),
        "b2": jnp.zeros((1, C), dtype=jnp.float32),
    }

    x_0 = gaussian_diffusion_forward(x_T, c, params, steps, tile_m=512)
    jax.block_until_ready(x_0)

    x_0_ref = _reference_forward(x_T, c, params, steps)
    # tolerance accounts for scalar pre-fusion / matmul reassociation (f32 rounding only)
    assert jnp.allclose(x_0, x_0_ref, atol=1e-4, rtol=1e-4), "mismatch vs reference"

    print("KERNEL_OK")
</pallas_src>

<mosaic_0001>
module attributes {stable_mosaic.version = 11 : i64} {
  func.func @_diffusion_kernel(%arg0: i32, %arg1: i32, %arg2: memref<8xf32, #tpu.memory_space<smem>>, %arg3: memref<8xf32, #tpu.memory_space<smem>>, %arg4: memref<1x4x256xf32, #tpu.memory_space<vmem>>, %arg5: memref<1x4x256xf32, #tpu.memory_space<vmem>>, %arg6: memref<32x4xf32, #tpu.memory_space<vmem>>, %arg7: memref<32x4xf32, #tpu.memory_space<vmem>>, %arg8: memref<32x128xf32, #tpu.memory_space<vmem>>, %arg9: memref<4x32xf32, #tpu.memory_space<vmem>>, %arg10: memref<4x1xf32, #tpu.memory_space<vmem>>, %arg11: memref<1x4x256xf32, #tpu.memory_space<vmem>>, %arg12: memref<32x256xf32, #tpu.memory_space<vmem>>) attributes {dimension_semantics = [#tpu.dimension_semantics<parallel>, #tpu.dimension_semantics<parallel>], iteration_bounds = array<i64: 2, 1>, scalar_prefetch = 2 : i64, scratch_operands = 1 : i64, tpu.core_type = #tpu.core_type<tc>, window_params = [{transform_indices = @transform_0, window_bounds = array<i64: 1, 4, 256>}, {transform_indices = @transform_1, window_bounds = array<i64: 1, 4, 256>}, {pipeline_mode = #tpu.pipeline_mode<synchronous>, transform_indices = @transform_2, window_bounds = array<i64: 32, 4>}, {pipeline_mode = #tpu.pipeline_mode<synchronous>, transform_indices = @transform_3, window_bounds = array<i64: 32, 4>}, {pipeline_mode = #tpu.pipeline_mode<synchronous>, transform_indices = @transform_4, window_bounds = array<i64: 32, 128>}, {pipeline_mode = #tpu.pipeline_mode<synchronous>, transform_indices = @transform_5, window_bounds = array<i64: 4, 32>}, {pipeline_mode = #tpu.pipeline_mode<synchronous>, transform_indices = @transform_6, window_bounds = array<i64: 4, 1>}, {transform_indices = @transform_7, window_bounds = array<i64: 1, 4, 256>}]} {
    %c0 = arith.constant 0 : index
    %c0_0 = arith.constant 0 : index
    %0 = vector.load %arg7[%c0, %c0_0] : memref<32x4xf32, #tpu.memory_space<vmem>>, vector<32x4xf32>
    %c0_1 = arith.constant 0 : index
    %c0_2 = arith.constant 0 : index
    %c0_3 = arith.constant 0 : index
    %1 = vector.load %arg5[%c0_1, %c0_2, %c0_3] : memref<1x4x256xf32, #tpu.memory_space<vmem>>, vector<1x4x256xf32>
    %2 = vector.shape_cast %1 : vector<1x4x256xf32> to vector<4x256xf32>
    %cst = arith.constant dense<0.000000e+00> : vector<32x256xf32>
    %3 = tpu.matmul %0, %2, %cst {dimension_numbers = #tpu.dot_dimension_numbers<[1], [0], [0], [1], [0, 0, 1, 1], [], []>} : vector<32x4xf32>, vector<4x256xf32>, vector<32x256xf32> -> vector<32x256xf32>
    %c0_4 = arith.constant 0 : index
    %c0_5 = arith.constant 0 : index
    %4 = vector.load %arg12[%c0_4, %c0_5] : memref<32x256xf32, #tpu.memory_space<vmem>>, vector<32x256xf32>
    tpu.vector_store %arg12[%c0_4, %c0_5], %3 {strides = array<i32>} : memref<32x256xf32, #tpu.memory_space<vmem>>, vector<32x256xf32>,
    %c0_6 = arith.constant 0 : index
    %c0_7 = arith.constant 0 : index
    %c0_8 = arith.constant 0 : index
    %5 = vector.load %arg4[%c0_6, %c0_7, %c0_8] : memref<1x4x256xf32, #tpu.memory_space<vmem>>, vector<1x4x128xf32>
    %6 = vector.shape_cast %5 : vector<1x4x128xf32> to vector<4x128xf32>
    %c0_9 = arith.constant 0 : index
    %c0_10 = arith.constant 0 : index
    %c128 = arith.constant 128 : index
    %7 = vector.load %arg4[%c0_9, %c0_10, %c128] : memref<1x4x256xf32, #tpu.memory_space<vmem>>, vector<1x4x128xf32>
    %8 = vector.shape_cast %7 : vector<1x4x128xf32> to vector<4x128xf32>
    %c0_i32 = arith.constant 0 : i32
    %c7_i32 = arith.constant 7 : i32
    %9 = arith.subi %c7_i32, %c0_i32 : i32
    %c0_11 = arith.constant 0 : index
    %c0_12 = arith.constant 0 : index
    %10 = vector.load %arg8[%c0_11, %c0_12] : memref<32x128xf32, #tpu.memory_space<vmem>>, vector<32x128xf32>
    %11 = tpu.iota {dimensions = array<i32: 1>} : vector<32x128xi32>
    %12 = vector.broadcast %9 : i32 to vector<32x128xi32>
    %13 = arith.cmpi eq, %11, %12 : vector<32x128xi32>
    %cst_13 = arith.constant 0.000000e+00 : f32
    %14 = vector.broadcast %cst_13 : f32 to vector<32x128xf32>
    %15 = arith.select %13, %10, %14 : vector<32x128xi1>, vector<32x128xf32>
    %cst_14 = arith.constant dense<0.000000e+00> : vector<32xf32>
    %16 = vector.multi_reduction <add>, %15, %cst_14 [1] : vector<32x128xf32> to vector<32xf32>
    %17 = vector.shape_cast %16 : vector<32xf32> to vector<32x1xf32>
    %c0_15 = arith.constant 0 : index
    %c0_16 = arith.constant 0 : index
    %18 = vector.load %arg6[%c0_15, %c0_16] : memref<32x4xf32, #tpu.memory_space<vmem>>, vector<32x4xf32>
    %c0_17 = arith.constant 0 : index
    %c0_18 = arith.constant 0 : index
    %19 = vector.load %arg9[%c0_17, %c0_18] : memref<4x32xf32, #tpu.memory_space<vmem>>, vector<4x32xf32>
    %c0_19 = arith.constant 0 : index
    %c0_20 = arith.constant 0 : index
    %20 = vector.load %arg10[%c0_19, %c0_20] : memref<4x1xf32, #tpu.memory_space<vmem>>, vector<4x1xf32>
    %21 = arith.index_cast %9 : i32 to index
    %22 = memref.load %arg2[%21] : memref<8xf32, #tpu.memory_space<smem>>
    %23 = arith.index_cast %9 : i32 to index
    %24 = memref.load %arg3[%23] : memref<8xf32, #tpu.memory_space<smem>>
    %c0_21 = arith.constant 0 : index
    %c0_22 = arith.constant 0 : index
    %25 = vector.load %arg12[%c0_21, %c0_22] : memref<32x256xf32, #tpu.memory_space<vmem>>, vector<32x128xf32>
    %cst_23 = arith.constant dense<0.000000e+00> : vector<32x128xf32>
    %26 = tpu.matmul %18, %6, %cst_23 {dimension_numbers = #tpu.dot_dimension_numbers<[1], [0], [0], [1], [0, 0, 1, 1], [], []>} : vector<32x4xf32>, vector<4x128xf32>, vector<32x128xf32> -> vector<32x128xf32>
    %27 = arith.addf %26, %25 : vector<32x128xf32>
    %28 = vector.broadcast %17 : vector<32x1xf32> to vector<32x128xf32>
    %29 = arith.addf %27, %28 : vector<32x128xf32>
    %cst_24 = arith.constant 0.000000e+00 : f32
    %30 = vector.broadcast %cst_24 : f32 to vector<32x128xf32>
    %31 = arith.maximumf %29, %30 : vector<32x128xf32>
    %cst_25 = arith.constant dense<0.000000e+00> : vector<4x128xf32>
    %32 = tpu.matmul %19, %31, %cst_25 {dimension_numbers = #tpu.dot_dimension_numbers<[1], [0], [0], [1], [0, 0, 1, 1], [], []>} : vector<4x32xf32>, vector<32x128xf32>, vector<4x128xf32> -> vector<4x128xf32>
    %33 = vector.broadcast %20 : vector<4x1xf32> to vector<4x128xf32>
    %34 = arith.addf %32, %33 : vector<4x128xf32>
    %35 = vector.broadcast %22 : f32 to vector<4x128xf32>
    %36 = arith.mulf %35, %6 : vector<4x128xf32>
    %37 = vector.broadcast %24 : f32 to vector<4x128xf32>
    %38 = arith.mulf %37, %34 : vector<4x128xf32>
    %39 = arith.subf %36, %38 : vector<4x128xf32>
    %c0_26 = arith.constant 0 : index
    %c128_27 = arith.constant 128 : index
    %40 = vector.load %arg12[%c0_26, %c128_27] : memref<32x256xf32, #tpu.memory_space<vmem>>, vector<32x128xf32>
    %cst_28 = arith.constant dense<0.000000e+00> : vector<32x128xf32>
    %41 = tpu.matmul %18, %8, %cst_28 {dimension_numbers = #tpu.dot_dimension_numbers<[1], [0], [0], [1], [0, 0, 1, 1], [], []>} : vector<32x4xf32>, vector<4x128xf32>, vector<32x128xf32> -> vector<32x128xf32>
    %42 = arith.addf %41, %40 : vector<32x128xf32>
    %43 = vector.broadcast %17 : vector<32x1xf32> to vector<32x128xf32>
    %44 = arith.addf %42, %43 : vector<32x128xf32>
    %cst_29 = arith.constant 0.000000e+00 : f32
    %45 = vector.broadcast %cst_29 : f32 to vector<32x128xf32>
    %46 = arith.maximumf %44, %45 : vector<32x128xf32>
    %cst_30 = arith.constant dense<0.000000e+00> : vector<4x128xf32>
    %47 = tpu.matmul %19, %46, %cst_30 {dimension_numbers = #tpu.dot_dimension_numbers<[1], [0], [0], [1], [0, 0, 1, 1], [], []>} : vector<4x32xf32>, vector<32x128xf32>, vector<4x128xf32> -> vector<4x128xf32>
    %48 = vector.broadcast %20 : vector<4x1xf32> to vector<4x128xf32>
    %49 = arith.addf %47, %48 : vector<4x128xf32>
    %50 = vector.broadcast %22 : f32 to vector<4x128xf32>
    %51 = arith.mulf %50, %8 : vector<4x128xf32>
    %52 = vector.broadcast %24 : f32 to vector<4x128xf32>
    %53 = arith.mulf %52, %49 : vector<4x128xf32>
    %54 = arith.subf %51, %53 : vector<4x128xf32>
    %c1_i32 = arith.constant 1 : i32
    %c7_i32_31 = arith.constant 7 : i32
    %55 = arith.subi %c7_i32_31, %c1_i32 : i32
    %c0_32 = arith.constant 0 : index
    %c0_33 = arith.constant 0 : index
    %56 = vector.load %arg8[%c0_32, %c0_33] : memref<32x128xf32, #tpu.memory_space<vmem>>, vector<32x128xf32>
    %57 = tpu.iota {dimensions = array<i32: 1>} : vector<32x128xi32>
    %58 = vector.broadcast %55 : i32 to vector<32x128xi32>
    %59 = arith.cmpi eq, %57, %58 : vector<32x128xi32>
    %cst_34 = arith.constant 0.000000e+00 : f32
    %60 = vector.broadcast %cst_34 : f32 to vector<32x128xf32>
    %61 = arith.select %59, %56, %60 : vector<32x128xi1>, vector<32x128xf32>
    %cst_35 = arith.constant dense<0.000000e+00> : vector<32xf32>
    %62 = vector.multi_reduction <add>, %61, %cst_35 [1] : vector<32x128xf32> to vector<32xf32>
    %63 = vector.shape_cast %62 : vector<32xf32> to vector<32x1xf32>
    %c0_36 = arith.constant 0 : index
    %c0_37 = arith.constant 0 : index
    %64 = vector.load %arg6[%c0_36, %c0_37] : memref<32x4xf32, #tpu.memory_space<vmem>>, vector<32x4xf32>
    %c0_38 = arith.constant 0 : index
    %c0_39 = arith.constant 0 : index
    %65 = vector.load %arg9[%c0_38, %c0_39] : memref<4x32xf32, #tpu.memory_space<vmem>>, vector<4x32xf32>
    %c0_40 = arith.constant 0 : index
    %c0_41 = arith.constant 0 : index
    %66 = vector.load %arg10[%c0_40, %c0_41] : memref<4x1xf32, #tpu.memory_space<vmem>>, vector<4x1xf32>
    %67 = arith.index_cast %55 : i32 to index
    %68 = memref.load %arg2[%67] : memref<8xf32, #tpu.memory_space<smem>>
    %69 = arith.index_cast %55 : i32 to index
    %70 = memref.load %arg3[%69] : memref<8xf32, #tpu.memory_space<smem>>
    %c0_42 = arith.constant 0 : index
    %c0_43 = arith.constant 0 : index
    %71 = vector.load %arg12[%c0_42, %c0_43] : memref<32x256xf32, #tpu.memory_space<vmem>>, vector<32x128xf32>
    %cst_44 = arith.constant dense<0.000000e+00> : vector<32x128xf32>
    %72 = tpu.matmul %64, %39, %cst_44 {dimension_numbers = #tpu.dot_dimension_numbers<[1], [0], [0], [1], [0, 0, 1, 1], [], []>} : vector<32x4xf32>, vector<4x128xf32>, vector<32x128xf32> -> vector<32x128xf32>
    %73 = arith.addf %72, %71 : vector<32x128xf32>
    %74 = vector.broadcast %63 : vector<32x1xf32> to vector<32x128xf32>
    %75 = arith.addf %73, %74 : vector<32x128xf32>
    %cst_45 = arith.constant 0.000000e+00 : f32
    %76 = vector.broadcast %cst_45 : f32 to vector<32x128xf32>
    %77 = arith.maximumf %75, %76 : vector<32x128xf32>
    %cst_46 = arith.constant dense<0.000000e+00> : vector<4x128xf32>
    %78 = tpu.matmul %65, %77, %cst_46 {dimension_numbers = #tpu.dot_dimension_numbers<[1], [0], [0], [1], [0, 0, 1, 1], [], []>} : vector<4x32xf32>, vector<32x128xf32>, vector<4x128xf32> -> vector<4x128xf32>
    %79 = vector.broadcast %66 : vector<4x1xf32> to vector<4x128xf32>
    %80 = arith.addf %78, %79 : vector<4x128xf32>
    %81 = vector.broadcast %68 : f32 to vector<4x128xf32>
    %82 = arith.mulf %81, %39 : vector<4x128xf32>
    %83 = vector.broadcast %70 : f32 to vector<4x128xf32>
    %84 = arith.mulf %83, %80 : vector<4x128xf32>
    %85 = arith.subf %82, %84 : vector<4x128xf32>
    %c0_47 = arith.constant 0 : index
    %c128_48 = arith.constant 128 : index
    %86 = vector.load %arg12[%c0_47, %c128_48] : memref<32x256xf32, #tpu.memory_space<vmem>>, vector<32x128xf32>
    %cst_49 = arith.constant dense<0.000000e+00> : vector<32x128xf32>
    %87 = tpu.matmul %64, %54, %cst_49 {dimension_numbers = #tpu.dot_dimension_numbers<[1], [0], [0], [1], [0, 0, 1, 1], [], []>} : vector<32x4xf32>, vector<4x128xf32>, vector<32x128xf32> -> vector<32x128xf32>
    %88 = arith.addf %87, %86 : vector<32x128xf32>
    %89 = vector.broadcast %63 : vector<32x1xf32> to vector<32x128xf32>
    %90 = arith.addf %88, %89 : vector<32x128xf32>
    %cst_50 = arith.constant 0.000000e+00 : f32
    %91 = vector.broadcast %cst_50 : f32 to vector<32x128xf32>
    %92 = arith.maximumf %90, %91 : vector<32x128xf32>
    %cst_51 = arith.constant dense<0.000000e+00> : vector<4x128xf32>
    %93 = tpu.matmul %65, %92, %cst_51 {dimension_numbers = #tpu.dot_dimension_numbers<[1], [0], [0], [1], [0, 0, 1, 1], [], []>} : vector<4x32xf32>, vector<32x128xf32>, vector<4x128xf32> -> vector<4x128xf32>
    %94 = vector.broadcast %66 : vector<4x1xf32> to vector<4x128xf32>
    %95 = arith.addf %93, %94 : vector<4x128xf32>
    %96 = vector.broadcast %68 : f32 to vector<4x128xf32>
    %97 = arith.mulf %96, %54 : vector<4x128xf32>
    %98 = vector.broadcast %70 : f32 to vector<4x128xf32>
    %99 = arith.mulf %98, %95 : vector<4x128xf32>
    %100 = arith.subf %97, %99 : vector<4x128xf32>
    %c2_i32 = arith.constant 2 : i32
    %c7_i32_52 = arith.constant 7 : i32
    %101 = arith.subi %c7_i32_52, %c2_i32 : i32
    %c0_53 = arith.constant 0 : index
    %c0_54 = arith.constant 0 : index
    %102 = vector.load %arg8[%c0_53, %c0_54] : memref<32x128xf32, #tpu.memory_space<vmem>>, vector<32x128xf32>
    %103 = tpu.iota {dimensions = array<i32: 1>} : vector<32x128xi32>
    %104 = vector.broadcast %101 : i32 to vector<32x128xi32>
    %105 = arith.cmpi eq, %103, %104 : vector<32x128xi32>
    %cst_55 = arith.constant 0.000000e+00 : f32
    %106 = vector.broadcast %cst_55 : f32 to vector<32x128xf32>
    %107 = arith.select %105, %102, %106 : vector<32x128xi1>, vector<32x128xf32>
    %cst_56 = arith.constant dense<0.000000e+00> : vector<32xf32>
    %108 = vector.multi_reduction <add>, %107, %cst_56 [1] : vector<32x128xf32> to vector<32xf32>
    %109 = vector.shape_cast %108 : vector<32xf32> to vector<32x1xf32>
    %c0_57 = arith.constant 0 : index
    %c0_58 = arith.constant 0 : index
    %110 = vector.load %arg6[%c0_57, %c0_58] : memref<32x4xf32, #tpu.memory_space<vmem>>, vector<32x4xf32>
    %c0_59 = arith.constant 0 : index
    %c0_60 = arith.constant 0 : index
    %111 = vector.load %arg9[%c0_59, %c0_60] : memref<4x32xf32, #tpu.memory_space<vmem>>, vector<4x32xf32>
    %c0_61 = arith.constant 0 : index
    %c0_62 = arith.constant 0 : index
    %112 = vector.load %arg10[%c0_61, %c0_62] : memref<4x1xf32, #tpu.memory_space<vmem>>, vector<4x1xf32>
    %113 = arith.index_cast %101 : i32 to index
    %114 = memref.load %arg2[%113] : memref<8xf32, #tpu.memory_space<smem>>
    %115 = arith.index_cast %101 : i32 to index
    %116 = memref.load %arg3[%115] : memref<8xf32, #tpu.memory_space<smem>>
    %c0_63 = arith.constant 0 : index
    %c0_64 = arith.constant 0 : index
    %117 = vector.load %arg12[%c0_63, %c0_64] : memref<32x256xf32, #tpu.memory_space<vmem>>, vector<32x128xf32>
    %cst_65 = arith.constant dense<0.000000e+00> : vector<32x128xf32>
    %118 = tpu.matmul %110, %85, %cst_65 {dimension_numbers = #tpu.dot_dimension_numbers<[1], [0], [0], [1], [0, 0, 1, 1], [], []>} : vector<32x4xf32>, vector<4x128xf32>, vector<32x128xf32> -> vector<32x128xf32>
    %119 = arith.addf %118, %117 : vector<32x128xf32>
    %120 = vector.broadcast %109 : vector<32x1xf32> to vector<32x128xf32>
    %121 = arith.addf %119, %120 : vector<32x128xf32>
    %cst_66 = arith.constant 0.000000e+00 : f32
    %122 = vector.broadcast %cst_66 : f32 to vector<32x128xf32>
    %123 = arith.maximumf %121, %122 : vector<32x128xf32>
    %cst_67 = arith.constant dense<0.000000e+00> : vector<4x128xf32>
    %124 = tpu.matmul %111, %123, %cst_67 {dimension_numbers = #tpu.dot_dimension_numbers<[1], [0], [0], [1], [0, 0, 1, 1], [], []>} : vector<4x32xf32>, vector<32x128xf32>, vector<4x128xf32> -> vector<4x128xf32>
    %125 = vector.broadcast %112 : vector<4x1xf32> to vector<4x128xf32>
    %126 = arith.addf %124, %125 : vector<4x128xf32>
    %127 = vector.broadcast %114 : f32 to vector<4x128xf32>
    %128 = arith.mulf %127, %85 : vector<4x128xf32>
    %129 = vector.broadcast %116 : f32 to vector<4x128xf32>
    %130 = arith.mulf %129, %126 : vector<4x128xf32>
    %131 = arith.subf %128, %130 : vector<4x128xf32>
    %c0_68 = arith.constant 0 : index
    %c128_69 = arith.constant 128 : index
    %132 = vector.load %arg12[%c0_68, %c128_69] : memref<32x256xf32, #tpu.memory_space<vmem>>, vector<32x128xf32>
    %cst_70 = arith.constant dense<0.000000e+00> : vector<32x128xf32>
    %133 = tpu.matmul %110, %100, %cst_70 {dimension_numbers = #tpu.dot_dimension_numbers<[1], [0], [0], [1], [0, 0, 1, 1], [], []>} : vector<32x4xf32>, vector<4x128xf32>, vector<32x128xf32> -> vector<32x128xf32>
    %134 = arith.addf %133, %132 : vector<32x128xf32>
    %135 = vector.broadcast %109 : vector<32x1xf32> to vector<32x128xf32>
    %136 = arith.addf %134, %135 : vector<32x128xf32>
    %cst_71 = arith.constant 0.000000e+00 : f32
    %137 = vector.broadcast %cst_71 : f32 to vector<32x128xf32>
    %138 = arith.maximumf %136, %137 : vector<32x128xf32>
    %cst_72 = arith.constant dense<0.000000e+00> : vector<4x128xf32>
    %139 = tpu.matmul %111, %138, %cst_72 {dimension_numbers = #tpu.dot_dimension_numbers<[1], [0], [0], [1], [0, 0, 1, 1], [], []>} : vector<4x32xf32>, vector<32x128xf32>, vector<4x128xf32> -> vector<4x128xf32>
    %140 = vector.broadcast %112 : vector<4x1xf32> to vector<4x128xf32>
    %141 = arith.addf %139, %140 : vector<4x128xf32>
    %142 = vector.broadcast %114 : f32 to vector<4x128xf32>
    %143 = arith.mulf %142, %100 : vector<4x128xf32>
    %144 = vector.broadcast %116 : f32 to vector<4x128xf32>
    %145 = arith.mulf %144, %141 : vector<4x128xf32>
    %146 = arith.subf %143, %145 : vector<4x128xf32>
    %c3_i32 = arith.constant 3 : i32
    %c7_i32_73 = arith.constant 7 : i32
    %147 = arith.subi %c7_i32_73, %c3_i32 : i32
    %c0_74 = arith.constant 0 : index
    %c0_75 = arith.constant 0 : index
    %148 = vector.load %arg8[%c0_74, %c0_75] : memref<32x128xf32, #tpu.memory_space<vmem>>, vector<32x128xf32>
    %149 = tpu.iota {dimensions = array<i32: 1>} : vector<32x128xi32>
    %150 = vector.broadcast %147 : i32 to vector<32x128xi32>
    %151 = arith.cmpi eq, %149, %150 : vector<32x128xi32>
    %cst_76 = arith.constant 0.000000e+00 : f32
    %152 = vector.broadcast %cst_76 : f32 to vector<32x128xf32>
    %153 = arith.select %151, %148, %152 : vector<32x128xi1>, vector<32x128xf32>
    %cst_77 = arith.constant dense<0.000000e+00> : vector<32xf32>
    %154 = vector.multi_reduction <add>, %153, %cst_77 [1] : vector<32x128xf32> to vector<32xf32>
    %155 = vector.shape_cast %154 : vector<32xf32> to vector<32x1xf32>
    %c0_78 = arith.constant 0 : index
    %c0_79 = arith.constant 0 : index
    %156 = vector.load %arg6[%c0_78, %c0_79] : memref<32x4xf32, #tpu.memory_space<vmem>>, vector<32x4xf32>
    %c0_80 = arith.constant 0 : index
    %c0_81 = arith.constant 0 : index
    %157 = vector.load %arg9[%c0_80, %c0_81] : memref<4x32xf32, #tpu.memory_space<vmem>>, vector<4x32xf32>
    %c0_82 = arith.constant 0 : index
    %c0_83 = arith.constant 0 : index
    %158 = vector.load %arg10[%c0_82, %c0_83] : memref<4x1xf32, #tpu.memory_space<vmem>>, vector<4x1xf32>
    %159 = arith.index_cast %147 : i32 to index
    %160 = memref.load %arg2[%159] : memref<8xf32, #tpu.memory_space<smem>>
    %161 = arith.index_cast %147 : i32 to index
    %162 = memref.load %arg3[%161] : memref<8xf32, #tpu.memory_space<smem>>
    %c0_84 = arith.constant 0 : index
    %c0_85 = arith.constant 0 : index
    %163 = vector.load %arg12[%c0_84, %c0_85] : memref<32x256xf32, #tpu.memory_space<vmem>>, vector<32x128xf32>
    %cst_86 = arith.constant dense<0.000000e+00> : vector<32x128xf32>
    %164 = tpu.matmul %156, %131, %cst_86 {dimension_numbers = #tpu.dot_dimension_numbers<[1], [0], [0], [1], [0, 0, 1, 1], [], []>} : vector<32x4xf32>, vector<4x128xf32>, vector<32x128xf32> -> vector<32x128xf32>
    %165 = arith.addf %164, %163 : vector<32x128xf32>
    %166 = vector.broadcast %155 : vector<32x1xf32> to vector<32x128xf32>
    %167 = arith.addf %165, %166 : vector<32x128xf32>
    %cst_87 = arith.constant 0.000000e+00 : f32
    %168 = vector.broadcast %cst_87 : f32 to vector<32x128xf32>
    %169 = arith.maximumf %167, %168 : vector<32x128xf32>
    %cst_88 = arith.constant dense<0.000000e+00> : vector<4x128xf32>
    %170 = tpu.matmul %157, %169, %cst_88 {dimension_numbers = #tpu.dot_dimension_numbers<[1], [0], [0], [1], [0, 0, 1, 1], [], []>} : vector<4x32xf32>, vector<32x128xf32>, vector<4x128xf32> -> vector<4x128xf32>
    %171 = vector.broadcast %158 : vector<4x1xf32> to vector<4x128xf32>
    %172 = arith.addf %170, %171 : vector<4x128xf32>
    %173 = vector.broadcast %160 : f32 to vector<4x128xf32>
    %174 = arith.mulf %173, %131 : vector<4x128xf32>
    %175 = vector.broadcast %162 : f32 to vector<4x128xf32>
    %176 = arith.mulf %175, %172 : vector<4x128xf32>
    %177 = arith.subf %174, %176 : vector<4x128xf32>
    %c0_89 = arith.constant 0 : index
    %c128_90 = arith.constant 128 : index
    %178 = vector.load %arg12[%c0_89, %c128_90] : memref<32x256xf32, #tpu.memory_space<vmem>>, vector<32x128xf32>
    %cst_91 = arith.constant dense<0.000000e+00> : vector<32x128xf32>
    %179 = tpu.matmul %156, %146, %cst_91 {dimension_numbers = #tpu.dot_dimension_numbers<[1], [0], [0], [1], [0, 0, 1, 1], [], []>} : vector<32x4xf32>, vector<4x128xf32>, vector<32x128xf32> -> vector<32x128xf32>
    %180 = arith.addf %179, %178 : vector<32x128xf32>
    %181 = vector.broadcast %155 : vector<32x1xf32> to vector<32x128xf32>
    %182 = arith.addf %180, %181 : vector<32x128xf32>
    %cst_92 = arith.constant 0.000000e+00 : f32
    %183 = vector.broadcast %cst_92 : f32 to vector<32x128xf32>
    %184 = arith.maximumf %182, %183 : vector<32x128xf32>
    %cst_93 = arith.constant dense<0.000000e+00> : vector<4x128xf32>
    %185 = tpu.matmul %157, %184, %cst_93 {dimension_numbers = #tpu.dot_dimension_numbers<[1], [0], [0], [1], [0, 0, 1, 1], [], []>} : vector<4x32xf32>, vector<32x128xf32>, vector<4x128xf32> -> vector<4x128xf32>
    %186 = vector.broadcast %158 : vector<4x1xf32> to vector<4x128xf32>
    %187 = arith.addf %185, %186 : vector<4x128xf32>
    %188 = vector.broadcast %160 : f32 to vector<4x128xf32>
    %189 = arith.mulf %188, %146 : vector<4x128xf32>
    %190 = vector.broadcast %162 : f32 to vector<4x128xf32>
    %191 = arith.mulf %190, %187 : vector<4x128xf32>
    %192 = arith.subf %189, %191 : vector<4x128xf32>
    %c4_i32 = arith.constant 4 : i32
    %c7_i32_94 = arith.constant 7 : i32
    %193 = arith.subi %c7_i32_94, %c4_i32 : i32
    %c0_95 = arith.constant 0 : index
    %c0_96 = arith.constant 0 : index
    %194 = vector.load %arg8[%c0_95, %c0_96] : memref<32x128xf32, #tpu.memory_space<vmem>>, vector<32x128xf32>
    %195 = tpu.iota {dimensions = array<i32: 1>} : vector<32x128xi32>
    %196 = vector.broadcast %193 : i32 to vector<32x128xi32>
    %197 = arith.cmpi eq, %195, %196 : vector<32x128xi32>
    %cst_97 = arith.constant 0.000000e+00 : f32
    %198 = vector.broadcast %cst_97 : f32 to vector<32x128xf32>
    %199 = arith.select %197, %194, %198 : vector<32x128xi1>, vector<32x128xf32>
    %cst_98 = arith.constant dense<0.000000e+00> : vector<32xf32>
    %200 = vector.multi_reduction <add>, %199, %cst_98 [1] : vector<32x128xf32> to vector<32xf32>
    %201 = vector.shape_cast %200 : vector<32xf32> to vector<32x1xf32>
    %c0_99 = arith.constant 0 : index
    %c0_100 = arith.constant 0 : index
    %202 = vector.load %arg6[%c0_99, %c0_100] : memref<32x4xf32, #tpu.memory_space<vmem>>, vector<32x4xf32>
    %c0_101 = arith.constant 0 : index
    %c0_102 = arith.constant 0 : index
    %203 = vector.load %arg9[%c0_101, %c0_102] : memref<4x32xf32, #tpu.memory_space<vmem>>, vector<4x32xf32>
    %c0_103 = arith.constant 0 : index
    %c0_104 = arith.constant 0 : index
    %204 = vector.load %arg10[%c0_103, %c0_104] : memref<4x1xf32, #tpu.memory_space<vmem>>, vector<4x1xf32>
    %205 = arith.index_cast %193 : i32 to index
    %206 = memref.load %arg2[%205] : memref<8xf32, #tpu.memory_space<smem>>
    %207 = arith.index_cast %193 : i32 to index
    %208 = memref.load %arg3[%207] : memref<8xf32, #tpu.memory_space<smem>>
    %c0_105 = arith.constant 0 : index
    %c0_106 = arith.constant 0 : index
    %209 = vector.load %arg12[%c0_105, %c0_106] : memref<32x256xf32, #tpu.memory_space<vmem>>, vector<32x128xf32>
    %cst_107 = arith.constant dense<0.000000e+00> : vector<32x128xf32>
    %210 = tpu.matmul %202, %177, %cst_107 {dimension_numbers = #tpu.dot_dimension_numbers<[1], [0], [0], [1], [0, 0, 1, 1], [], []>} : vector<32x4xf32>, vector<4x128xf32>, vector<32x128xf32> -> vector<32x128xf32>
    %211 = arith.addf %210, %209 : vector<32x128xf32>
    %212 = vector.broadcast %201 : vector<32x1xf32> to vector<32x128xf32>
    %213 = arith.addf %211, %212 : vector<32x128xf32>
    %cst_108 = arith.constant 0.000000e+00 : f32
    %214 = vector.broadcast %cst_108 : f32 to vector<32x128xf32>
    %215 = arith.maximumf %213, %214 : vector<32x128xf32>
    %cst_109 = arith.constant dense<0.000000e+00> : vector<4x128xf32>
    %216 = tpu.matmul %203, %215, %cst_109 {dimension_numbers = #tpu.dot_dimension_numbers<[1], [0], [0], [1], [0, 0, 1, 1], [], []>} : vector<4x32xf32>, vector<32x128xf32>, vector<4x128xf32> -> vector<4x128xf32>
    %217 = vector.broadcast %204 : vector<4x1xf32> to vector<4x128xf32>
    %218 = arith.addf %216, %217 : vector<4x128xf32>
    %219 = vector.broadcast %206 : f32 to vector<4x128xf32>
    %220 = arith.mulf %219, %177 : vector<4x128xf32>
    %221 = vector.broadcast %208 : f32 to vector<4x128xf32>
    %222 = arith.mulf %221, %218 : vector<4x128xf32>
    %223 = arith.subf %220, %222 : vector<4x128xf32>
    %c0_110 = arith.constant 0 : index
    %c128_111 = arith.constant 128 : index
    %224 = vector.load %arg12[%c0_110, %c128_111] : memref<32x256xf32, #tpu.memory_space<vmem>>, vector<32x128xf32>
    %cst_112 = arith.constant dense<0.000000e+00> : vector<32x128xf32>
    %225 = tpu.matmul %202, %192, %cst_112 {dimension_numbers = #tpu.dot_dimension_numbers<[1], [0], [0], [1], [0, 0, 1, 1], [], []>} : vector<32x4xf32>, vector<4x128xf32>, vector<32x128xf32> -> vector<32x128xf32>
    %226 = arith.addf %225, %224 : vector<32x128xf32>
    %227 = vector.broadcast %201 : vector<32x1xf32> to vector<32x128xf32>
    %228 = arith.addf %226, %227 : vector<32x128xf32>
    %cst_113 = arith.constant 0.000000e+00 : f32
    %229 = vector.broadcast %cst_113 : f32 to vector<32x128xf32>
    %230 = arith.maximumf %228, %229 : vector<32x128xf32>
    %cst_114 = arith.constant dense<0.000000e+00> : vector<4x128xf32>
    %231 = tpu.matmul %203, %230, %cst_114 {dimension_numbers = #tpu.dot_dimension_numbers<[1], [0], [0], [1], [0, 0, 1, 1], [], []>} : vector<4x32xf32>, vector<32x128xf32>, vector<4x128xf32> -> vector<4x128xf32>
    %232 = vector.broadcast %204 : vector<4x1xf32> to vector<4x128xf32>
    %233 = arith.addf %231, %232 : vector<4x128xf32>
    %234 = vector.broadcast %206 : f32 to vector<4x128xf32>
    %235 = arith.mulf %234, %192 : vector<4x128xf32>
    %236 = vector.broadcast %208 : f32 to vector<4x128xf32>
    %237 = arith.mulf %236, %233 : vector<4x128xf32>
    %238 = arith.subf %235, %237 : vector<4x128xf32>
    %c5_i32 = arith.constant 5 : i32
    %c7_i32_115 = arith.constant 7 : i32
    %239 = arith.subi %c7_i32_115, %c5_i32 : i32
    %c0_116 = arith.constant 0 : index
    %c0_117 = arith.constant 0 : index
    %240 = vector.load %arg8[%c0_116, %c0_117] : memref<32x128xf32, #tpu.memory_space<vmem>>, vector<32x128xf32>
    %241 = tpu.iota {dimensions = array<i32: 1>} : vector<32x128xi32>
    %242 = vector.broadcast %239 : i32 to vector<32x128xi32>
    %243 = arith.cmpi eq, %241, %242 : vector<32x128xi32>
    %cst_118 = arith.constant 0.000000e+00 : f32
    %244 = vector.broadcast %cst_118 : f32 to vector<32x128xf32>
    %245 = arith.select %243, %240, %244 : vector<32x128xi1>, vector<32x128xf32>
    %cst_119 = arith.constant dense<0.000000e+00> : vector<32xf32>
    %246 = vector.multi_reduction <add>, %245, %cst_119 [1] : vector<32x128xf32> to vector<32xf32>
    %247 = vector.shape_cast %246 : vector<32xf32> to vector<32x1xf32>
    %c0_120 = arith.constant 0 : index
    %c0_121 = arith.constant 0 : index
    %248 = vector.load %arg6[%c0_120, %c0_121] : memref<32x4xf32, #tpu.memory_space<vmem>>, vector<32x4xf32>
    %c0_122 = arith.constant 0 : index
    %c0_123 = arith.constant 0 : index
    %249 = vector.load %arg9[%c0_122, %c0_123] : memref<4x32xf32, #tpu.memory_space<vmem>>, vector<4x32xf32>
    %c0_124 = arith.constant 0 : index
    %c0_125 = arith.constant 0 : index
    %250 = vector.load %arg10[%c0_124, %c0_125] : memref<4x1xf32, #tpu.memory_space<vmem>>, vector<4x1xf32>
    %251 = arith.index_cast %239 : i32 to index
    %252 = memref.load %arg2[%251] : memref<8xf32, #tpu.memory_space<smem>>
    %253 = arith.index_cast %239 : i32 to index
    %254 = memref.load %arg3[%253] : memref<8xf32, #tpu.memory_space<smem>>
    %c0_126 = arith.constant 0 : index
    %c0_127 = arith.constant 0 : index
    %255 = vector.load %arg12[%c0_126, %c0_127] : memref<32x256xf32, #tpu.memory_space<vmem>>, vector<32x128xf32>
    %cst_128 = arith.constant dense<0.000000e+00> : vector<32x128xf32>
    %256 = tpu.matmul %248, %223, %cst_128 {dimension_numbers = #tpu.dot_dimension_numbers<[1], [0], [0], [1], [0, 0, 1, 1], [], []>} : vector<32x4xf32>, vector<4x128xf32>, vector<32x128xf32> -> vector<32x128xf32>
    %257 = arith.addf %256, %255 : vector<32x128xf32>
    %258 = vector.broadcast %247 : vector<32x1xf32> to vector<32x128xf32>
    %259 = arith.addf %257, %258 : vector<32x128xf32>
    %cst_129 = arith.constant 0.000000e+00 : f32
    %260 = vector.broadcast %cst_129 : f32 to vector<32x128xf32>
    %261 = arith.maximumf %259, %260 : vector<32x128xf32>
    %cst_130 = arith.constant dense<0.000000e+00> : vector<4x128xf32>
    %262 = tpu.matmul %249, %261, %cst_130 {dimension_numbers = #tpu.dot_dimension_numbers<[1], [0], [0], [1], [0, 0, 1, 1], [], []>} : vector<4x32xf32>, vector<32x128xf32>, vector<4x128xf32> -> vector<4x128xf32>
    %263 = vector.broadcast %250 : vector<4x1xf32> to vector<4x128xf32>
    %264 = arith.addf %262, %263 : vector<4x128xf32>
    %265 = vector.broadcast %252 : f32 to vector<4x128xf32>
    %266 = arith.mulf %265, %223 : vector<4x128xf32>
    %267 = vector.broadcast %254 : f32 to vector<4x128xf32>
    %268 = arith.mulf %267, %264 : vector<4x128xf32>
    %269 = arith.subf %266, %268 : vector<4x128xf32>
    %c0_131 = arith.constant 0 : index
    %c128_132 = arith.constant 128 : index
    %270 = vector.load %arg12[%c0_131, %c128_132] : memref<32x256xf32, #tpu.memory_space<vmem>>, vector<32x128xf32>
    %cst_133 = arith.constant dense<0.000000e+00> : vector<32x128xf32>
    %271 = tpu.matmul %248, %238, %cst_133 {dimension_numbers = #tpu.dot_dimension_numbers<[1], [0], [0], [1], [0, 0, 1, 1], [], []>} : vector<32x4xf32>, vector<4x128xf32>, vector<32x128xf32> -> vector<32x128xf32>
    %272 = arith.addf %271, %270 : vector<32x128xf32>
    %273 = vector.broadcast %247 : vector<32x1xf32> to vector<32x128xf32>
    %274 = arith.addf %272, %273 : vector<32x128xf32>
    %cst_134 = arith.constant 0.000000e+00 : f32
    %275 = vector.broadcast %cst_134 : f32 to vector<32x128xf32>
    %276 = arith.maximumf %274, %275 : vector<32x128xf32>
    %cst_135 = arith.constant dense<0.000000e+00> : vector<4x128xf32>
    %277 = tpu.matmul %249, %276, %cst_135 {dimension_numbers = #tpu.dot_dimension_numbers<[1], [0], [0], [1], [0, 0, 1, 1], [], []>} : vector<4x32xf32>, vector<32x128xf32>, vector<4x128xf32> -> vector<4x128xf32>
    %278 = vector.broadcast %250 : vector<4x1xf32> to vector<4x128xf32>
    %279 = arith.addf %277, %278 : vector<4x128xf32>
    %280 = vector.broadcast %252 : f32 to vector<4x128xf32>
    %281 = arith.mulf %280, %238 : vector<4x128xf32>
    %282 = vector.broadcast %254 : f32 to vector<4x128xf32>
    %283 = arith.mulf %282, %279 : vector<4x128xf32>
    %284 = arith.subf %281, %283 : vector<4x128xf32>
    %c6_i32 = arith.constant 6 : i32
    %c7_i32_136 = arith.constant 7 : i32
    %285 = arith.subi %c7_i32_136, %c6_i32 : i32
    %c0_137 = arith.constant 0 : index
    %c0_138 = arith.constant 0 : index
    %286 = vector.load %arg8[%c0_137, %c0_138] : memref<32x128xf32, #tpu.memory_space<vmem>>, vector<32x128xf32>
    %287 = tpu.iota {dimensions = array<i32: 1>} : vector<32x128xi32>
    %288 = vector.broadcast %285 : i32 to vector<32x128xi32>
    %289 = arith.cmpi eq, %287, %288 : vector<32x128xi32>
    %cst_139 = arith.constant 0.000000e+00 : f32
    %290 = vector.broadcast %cst_139 : f32 to vector<32x128xf32>
    %291 = arith.select %289, %286, %290 : vector<32x128xi1>, vector<32x128xf32>
    %cst_140 = arith.constant dense<0.000000e+00> : vector<32xf32>
    %292 = vector.multi_reduction <add>, %291, %cst_140 [1] : vector<32x128xf32> to vector<32xf32>
    %293 = vector.shape_cast %292 : vector<32xf32> to vector<32x1xf32>
    %c0_141 = arith.constant 0 : index
    %c0_142 = arith.constant 0 : index
    %294 = vector.load %arg6[%c0_141, %c0_142] : memref<32x4xf32, #tpu.memory_space<vmem>>, vector<32x4xf32>
    %c0_143 = arith.constant 0 : index
    %c0_144 = arith.constant 0 : index
    %295 = vector.load %arg9[%c0_143, %c0_144] : memref<4x32xf32, #tpu.memory_space<vmem>>, vector<4x32xf32>
    %c0_145 = arith.constant 0 : index
    %c0_146 = arith.constant 0 : index
    %296 = vector.load %arg10[%c0_145, %c0_146] : memref<4x1xf32, #tpu.memory_space<vmem>>, vector<4x1xf32>
    %297 = arith.index_cast %285 : i32 to index
    %298 = memref.load %arg2[%297] : memref<8xf32, #tpu.memory_space<smem>>
    %299 = arith.index_cast %285 : i32 to index
    %300 = memref.load %arg3[%299] : memref<8xf32, #tpu.memory_space<smem>>
    %c0_147 = arith.constant 0 : index
    %c0_148 = arith.constant 0 : index
    %301 = vector.load %arg12[%c0_147, %c0_148] : memref<32x256xf32, #tpu.memory_space<vmem>>, vector<32x128xf32>
    %cst_149 = arith.constant dense<0.000000e+00> : vector<32x128xf32>
    %302 = tpu.matmul %294, %269, %cst_149 {dimension_numbers = #tpu.dot_dimension_numbers<[1], [0], [0], [1], [0, 0, 1, 1], [], []>} : vector<32x4xf32>, vector<4x128xf32>, vector<32x128xf32> -> vector<32x128xf32>
    %303 = arith.addf %302, %301 : vector<32x128xf32>
    %304 = vector.broadcast %293 : vector<32x1xf32> to vector<32x128xf32>
    %305 = arith.addf %303, %304 : vector<32x128xf32>
    %cst_150 = arith.constant 0.000000e+00 : f32
    %306 = vector.broadcast %cst_150 : f32 to vector<32x128xf32>
    %307 = arith.maximumf %305, %306 : vector<32x128xf32>
    %cst_151 = arith.constant dense<0.000000e+00> : vector<4x128xf32>
    %308 = tpu.matmul %295, %307, %cst_151 {dimension_numbers = #tpu.dot_dimension_numbers<[1], [0], [0], [1], [0, 0, 1, 1], [], []>} : vector<4x32xf32>, vector<32x128xf32>, vector<4x128xf32> -> vector<4x128xf32>
    %309 = vector.broadcast %296 : vector<4x1xf32> to vector<4x128xf32>
    %310 = arith.addf %308, %309 : vector<4x128xf32>
    %311 = vector.broadcast %298 : f32 to vector<4x128xf32>
    %312 = arith.mulf %311, %269 : vector<4x128xf32>
    %313 = vector.broadcast %300 : f32 to vector<4x128xf32>
    %314 = arith.mulf %313, %310 : vector<4x128xf32>
    %315 = arith.subf %312, %314 : vector<4x128xf32>
    %c0_152 = arith.constant 0 : index
    %c128_153 = arith.constant 128 : index
    %316 = vector.load %arg12[%c0_152, %c128_153] : memref<32x256xf32, #tpu.memory_space<vmem>>, vector<32x128xf32>
    %cst_154 = arith.constant dense<0.000000e+00> : vector<32x128xf32>
    %317 = tpu.matmul %294, %284, %cst_154 {dimension_numbers = #tpu.dot_dimension_numbers<[1], [0], [0], [1], [0, 0, 1, 1], [], []>} : vector<32x4xf32>, vector<4x128xf32>, vector<32x128xf32> -> vector<32x128xf32>
    %318 = arith.addf %317, %316 : vector<32x128xf32>
    %319 = vector.broadcast %293 : vector<32x1xf32> to vector<32x128xf32>
    %320 = arith.addf %318, %319 : vector<32x128xf32>
    %cst_155 = arith.constant 0.000000e+00 : f32
    %321 = vector.broadcast %cst_155 : f32 to vector<32x128xf32>
    %322 = arith.maximumf %320, %321 : vector<32x128xf32>
    %cst_156 = arith.constant dense<0.000000e+00> : vector<4x128xf32>
    %323 = tpu.matmul %295, %322, %cst_156 {dimension_numbers = #tpu.dot_dimension_numbers<[1], [0], [0], [1], [0, 0, 1, 1], [], []>} : vector<4x32xf32>, vector<32x128xf32>, vector<4x128xf32> -> vector<4x128xf32>
    %324 = vector.broadcast %296 : vector<4x1xf32> to vector<4x128xf32>
    %325 = arith.addf %323, %324 : vector<4x128xf32>
    %326 = vector.broadcast %298 : f32 to vector<4x128xf32>
    %327 = arith.mulf %326, %284 : vector<4x128xf32>
    %328 = vector.broadcast %300 : f32 to vector<4x128xf32>
    %329 = arith.mulf %328, %325 : vector<4x128xf32>
    %330 = arith.subf %327, %329 : vector<4x128xf32>
    %c7_i32_157 = arith.constant 7 : i32
    %c7_i32_158 = arith.constant 7 : i32
    %331 = arith.subi %c7_i32_158, %c7_i32_157 : i32
    %c0_159 = arith.constant 0 : index
    %c0_160 = arith.constant 0 : index
    %332 = vector.load %arg8[%c0_159, %c0_160] : memref<32x128xf32, #tpu.memory_space<vmem>>, vector<32x128xf32>
    %333 = tpu.iota {dimensions = array<i32: 1>} : vector<32x128xi32>
    %334 = vector.broadcast %331 : i32 to vector<32x128xi32>
    %335 = arith.cmpi eq, %333, %334 : vector<32x128xi32>
    %cst_161 = arith.constant 0.000000e+00 : f32
    %336 = vector.broadcast %cst_161 : f32 to vector<32x128xf32>
    %337 = arith.select %335, %332, %336 : vector<32x128xi1>, vector<32x128xf32>
    %cst_162 = arith.constant dense<0.000000e+00> : vector<32xf32>
    %338 = vector.multi_reduction <add>, %337, %cst_162 [1] : vector<32x128xf32> to vector<32xf32>
    %339 = vector.shape_cast %338 : vector<32xf32> to vector<32x1xf32>
    %c0_163 = arith.constant 0 : index
    %c0_164 = arith.constant 0 : index
    %340 = vector.load %arg6[%c0_163, %c0_164] : memref<32x4xf32, #tpu.memory_space<vmem>>, vector<32x4xf32>
    %c0_165 = arith.constant 0 : index
    %c0_166 = arith.constant 0 : index
    %341 = vector.load %arg9[%c0_165, %c0_166] : memref<4x32xf32, #tpu.memory_space<vmem>>, vector<4x32xf32>
    %c0_167 = arith.constant 0 : index
    %c0_168 = arith.constant 0 : index
    %342 = vector.load %arg10[%c0_167, %c0_168] : memref<4x1xf32, #tpu.memory_space<vmem>>, vector<4x1xf32>
    %343 = arith.index_cast %331 : i32 to index
    %344 = memref.load %arg2[%343] : memref<8xf32, #tpu.memory_space<smem>>
    %345 = arith.index_cast %331 : i32 to index
    %346 = memref.load %arg3[%345] : memref<8xf32, #tpu.memory_space<smem>>
    %c0_169 = arith.constant 0 : index
    %c0_170 = arith.constant 0 : index
    %347 = vector.load %arg12[%c0_169, %c0_170] : memref<32x256xf32, #tpu.memory_space<vmem>>, vector<32x128xf32>
    %cst_171 = arith.constant dense<0.000000e+00> : vector<32x128xf32>
    %348 = tpu.matmul %340, %315, %cst_171 {dimension_numbers = #tpu.dot_dimension_numbers<[1], [0], [0], [1], [0, 0, 1, 1], [], []>} : vector<32x4xf32>, vector<4x128xf32>, vector<32x128xf32> -> vector<32x128xf32>
    %349 = arith.addf %348, %347 : vector<32x128xf32>
    %350 = vector.broadcast %339 : vector<32x1xf32> to vector<32x128xf32>
    %351 = arith.addf %349, %350 : vector<32x128xf32>
    %cst_172 = arith.constant 0.000000e+00 : f32
    %352 = vector.broadcast %cst_172 : f32 to vector<32x128xf32>
    %353 = arith.maximumf %351, %352 : vector<32x128xf32>
    %cst_173 = arith.constant dense<0.000000e+00> : vector<4x128xf32>
    %354 = tpu.matmul %341, %353, %cst_173 {dimension_numbers = #tpu.dot_dimension_numbers<[1], [0], [0], [1], [0, 0, 1, 1], [], []>} : vector<4x32xf32>, vector<32x128xf32>, vector<4x128xf32> -> vector<4x128xf32>
    %355 = vector.broadcast %342 : vector<4x1xf32> to vector<4x128xf32>
    %356 = arith.addf %354, %355 : vector<4x128xf32>
    %357 = vector.broadcast %344 : f32 to vector<4x128xf32>
    %358 = arith.mulf %357, %315 : vector<4x128xf32>
    %359 = vector.broadcast %346 : f32 to vector<4x128xf32>
    %360 = arith.mulf %359, %356 : vector<4x128xf32>
    %361 = arith.subf %358, %360 : vector<4x128xf32>
    %c0_174 = arith.constant 0 : index
    %c128_175 = arith.constant 128 : index
    %362 = vector.load %arg12[%c0_174, %c128_175] : memref<32x256xf32, #tpu.memory_space<vmem>>, vector<32x128xf32>
    %cst_176 = arith.constant dense<0.000000e+00> : vector<32x128xf32>
    %363 = tpu.matmul %340, %330, %cst_176 {dimension_numbers = #tpu.dot_dimension_numbers<[1], [0], [0], [1], [0, 0, 1, 1], [], []>} : vector<32x4xf32>, vector<4x128xf32>, vector<32x128xf32> -> vector<32x128xf32>
    %364 = arith.addf %363, %362 : vector<32x128xf32>
    %365 = vector.broadcast %339 : vector<32x1xf32> to vector<32x128xf32>
    %366 = arith.addf %364, %365 : vector<32x128xf32>
    %cst_177 = arith.constant 0.000000e+00 : f32
    %367 = vector.broadcast %cst_177 : f32 to vector<32x128xf32>
    %368 = arith.maximumf %366, %367 : vector<32x128xf32>
    %cst_178 = arith.constant dense<0.000000e+00> : vector<4x128xf32>
    %369 = tpu.matmul %341, %368, %cst_178 {dimension_numbers = #tpu.dot_dimension_numbers<[1], [0], [0], [1], [0, 0, 1, 1], [], []>} : vector<4x32xf32>, vector<32x128xf32>, vector<4x128xf32> -> vector<4x128xf32>
    %370 = vector.broadcast %342 : vector<4x1xf32> to vector<4x128xf32>
    %371 = arith.addf %369, %370 : vector<4x128xf32>
    %372 = vector.broadcast %344 : f32 to vector<4x128xf32>
    %373 = arith.mulf %372, %330 : vector<4x128xf32>
    %374 = vector.broadcast %346 : f32 to vector<4x128xf32>
    %375 = arith.mulf %374, %371 : vector<4x128xf32>
    %376 = arith.subf %373, %375 : vector<4x128xf32>
    %c8_i32 = arith.constant 8 : i32
    %c0_179 = arith.constant 0 : index
    %c0_180 = arith.constant 0 : index
    %c0_181 = arith.constant 0 : index
    %377 = vector.load %arg11[%c0_179, %c0_180, %c0_181] : memref<1x4x256xf32, #tpu.memory_space<vmem>>, vector<1x4x128xf32>
    %378 = vector.shape_cast %377 : vector<1x4x128xf32> to vector<4x128xf32>
    %379 = vector.shape_cast %361 : vector<4x128xf32> to vector<1x4x128xf32>
    tpu.vector_store %arg11[%c0_179, %c0_180, %c0_181], %379 {strides = array<i32>} : memref<1x4x256xf32, #tpu.memory_space<vmem>>, vector<1x4x128xf32>,
    %c0_182 = arith.constant 0 : index
    %c0_183 = arith.constant 0 : index
    %c128_184 = arith.constant 128 : index
    %380 = vector.load %arg11[%c0_182, %c0_183, %c128_184] : memref<1x4x256xf32, #tpu.memory_space<vmem>>, vector<1x4x128xf32>
    %381 = vector.shape_cast %380 : vector<1x4x128xf32> to vector<4x128xf32>
    %382 = vector.shape_cast %376 : vector<4x128xf32> to vector<1x4x128xf32>
    tpu.vector_store %arg11[%c0_182, %c0_183, %c128_184], %382 {strides = array<i32>} : memref<1x4x256xf32, #tpu.memory_space<vmem>>, vector<1x4x128xf32>,
    return
  }
  func.func @transform_0(%arg0: i32, %arg1: i32, %arg2: memref<8xf32, #tpu.memory_space<smem>>, %arg3: memref<8xf32, #tpu.memory_space<smem>>) -> (i32, i32, i32) {
    %c0_i32 = arith.constant 0 : i32
    %c0_i32_0 = arith.constant 0 : i32
    return %arg0, %c0_i32, %arg1 : i32, i32, i32
  }
  func.func @transform_1(%arg0: i32, %arg1: i32, %arg2: memref<8xf32, #tpu.memory_space<smem>>, %arg3: memref<8xf32, #tpu.memory_space<smem>>) -> (i32, i32, i32) {
    %c0_i32 = arith.constant 0 : i32
    %c0_i32_0 = arith.constant 0 : i32
    return %arg0, %c0_i32, %arg1 : i32, i32, i32
  }
  func.func @transform_2(%arg0: i32, %arg1: i32, %arg2: memref<8xf32, #tpu.memory_space<smem>>, %arg3: memref<8xf32, #tpu.memory_space<smem>>) -> (i32, i32) {
    %c0_i32 = arith.constant 0 : i32
    %c0_i32_0 = arith.constant 0 : i32
    %c0_i32_1 = arith.constant 0 : i32
    return %c0_i32, %c0_i32_0 : i32, i32
  }
  func.func @transform_3(%arg0: i32, %arg1: i32, %arg2: memref<8xf32, #tpu.memory_space<smem>>, %arg3: memref<8xf32, #tpu.memory_space<smem>>) -> (i32, i32) {
    %c0_i32 = arith.constant 0 : i32
    %c0_i32_0 = arith.constant 0 : i32
    %c0_i32_1 = arith.constant 0 : i32
    return %c0_i32, %c0_i32_0 : i32, i32
  }
  func.func @transform_4(%arg0: i32, %arg1: i32, %arg2: memref<8xf32, #tpu.memory_space<smem>>, %arg3: memref<8xf32, #tpu.memory_space<smem>>) -> (i32, i32) {
    %c0_i32 = arith.constant 0 : i32
    %c0_i32_0 = arith.constant 0 : i32
    %c0_i32_1 = arith.constant 0 : i32
    return %c0_i32, %c0_i32_0 : i32, i32
  }
  func.func @transform_5(%arg0: i32, %arg1: i32, %arg2: memref<8xf32, #tpu.memory_space<smem>>, %arg3: memref<8xf32, #tpu.memory_space<smem>>) -> (i32, i32) {
    %c0_i32 = arith.constant 0 : i32
    %c0_i32_0 = arith.constant 0 : i32
    %c0_i32_1 = arith.constant 0 : i32
    return %c0_i32, %c0_i32_0 : i32, i32
  }
  func.func @transform_6(%arg0: i32, %arg1: i32, %arg2: memref<8xf32, #tpu.memory_space<smem>>, %arg3: memref<8xf32, #tpu.memory_space<smem>>) -> (i32, i32) {
    %c0_i32 = arith.constant 0 : i32
    %c0_i32_0 = arith.constant 0 : i32
    %c0_i32_1 = arith.constant 0 : i32
    return %c0_i32, %c0_i32_0 : i32, i32
  }
  func.func @transform_7(%arg0: i32, %arg1: i32, %arg2: memref<8xf32, #tpu.memory_space<smem>>, %arg3: memref<8xf32, #tpu.memory_space<smem>>) -> (i32, i32, i32) {
    %c0_i32 = arith.constant 0 : i32
    %c0_i32_0 = arith.constant 0 : i32
    return %arg0, %c0_i32, %arg1 : i32, i32, i32
  }
}

</mosaic_0001>

<llo_original>
// kernel: tpu_custom_call.1
$region0: #{tpu_custom_call.1}
  #allocation0 [shape = 'u32[]', space=smem, size = 0x4, offset = 0x4, fixed_abs, tag = 'smem constant byte address 0x4 - core index']
  #allocation1 [shape = 'u32[144,128]{1,0:T(1,128)}', space=vmem, size = 0x12000, scoped, tag = 'internal scratch']
  #allocation2 [shape = 'f32[32,256]{1,0:T(8,128)}', space=vmem, size = 0x8000, scoped, tag = 'scratch operand']
  #allocation3 [shape = 's32[1]{0}', space=sflag, size = 0x4, scoped, tag = 'scoped memory for tpu_custom_call.1']
  #allocation4 [shape = 'u8[512]{0}', space=smem, size = 0x200, scoped, tag = 'prefetched SMEM operand 0']
  #allocation5 [shape = 'u8[512]{0}', space=smem, size = 0x200, scoped, tag = 'prefetched SMEM operand 1']
  %s0 = inlined_call_operand.vmem [shape: f32[8], index: 0, kind: input, shape index: {}]
  %s1 = inlined_call_operand.vmem [shape: f32[8], index: 1, kind: input, shape index: {}]
  %s2 = inlined_call_operand.vmem [shape: f32[2,4,256], index: 2, kind: input, shape index: {}]
  %s3 = inlined_call_operand.vmem [shape: f32[2,4,256], index: 3, kind: input, shape index: {}]
  %s4 = inlined_call_operand.vmem [shape: f32[32,4], index: 4, kind: input, shape index: {}]
  %s5 = inlined_call_operand.vmem [shape: f32[32,4], index: 5, kind: input, shape index: {}]
  %s6 = inlined_call_operand.vmem [shape: f32[32,128], index: 6, kind: input, shape index: {}]
  %s7 = inlined_call_operand.vmem [shape: f32[4,32], index: 7, kind: input, shape index: {}]
  %s8 = inlined_call_operand.vmem [shape: f32[4,1], index: 8, kind: input, shape index: {}]
  %s9 = inlined_call_operand.hbm [shape: f32[2,4,256], index: 9, kind: output, shape index: {}]
  %s10 = sld [smem:[#allocation0]]
  $region61: #{tpu_custom_call.1} parent=0
    _
  %s12 = ssub.s32 1, %s10
  %s13 = scalar_select 0, %s12, %s10
  %s14 = sshll.u32 %s0, 4
  %s15 = int_to_ptr.vmem [resolvable:$true] %s14
  %17 = dma.vmem_to_smem %s15, 16, [#allocation4], [#allocation3]
  %s18 = sshll.u32 %s1, 4
  %s19 = int_to_ptr.vmem [resolvable:$true] %s18
  %21 = dma.vmem_to_smem %s19, 16, [#allocation5], [#allocation3]
  %22 = dma.done [#allocation3], 32
  %23 = sfence
  $region1: #{tpu_custom_call.1} parent=0
    #allocation6 [shape = 'u8[8192]{0}', space=vmem, size = 0x2000, scoped, tag = 'output window, operand 0']
    #allocation7 [shape = 's32[2]{0}', space=sflag, size = 0x8, scoped, tag = 'scoped memory for tpu_custom_call.1']
    %24 = vsyncpa [#allocation7], 0
    %s25 = scalar_lea.sflag [#allocation7], 1
    %26 = vsyncpa %s25, 0
    loop: start=0, step=1, limit=4
    $region2: #{tpu_custom_call.1} parent=1 // loop_pre_header
      _
    $region3: #{tpu_custom_call.1} parent=1 // loop_header
      %s28 = sphi 0, %s32
      %p29 = scmp.ge.s32.totalorder %s28, 4
      %s35 = sphi 0, %s47
      %s36 = sphi 0, %s43
      %s37 = sphi 0, %s35
      %s38 = sphi 0, %s36
      %s39 = sphi 0, %s37
      %s40 = sphi 0, %s38
      %s52 = sphi 0, %s54
      %s55 = sphi 0, %s52
      %s56 = sphi 0, %s55
      %s72 = sphi 0, %s56
      %s80 = sphi 0, %s82
      %s83 = sphi 0, %s80
      %s84 = sphi 0, %s83
      %s100 = sphi 0, %s84
      %s104 = sphi 0, %s104
      %s106 = sphi 0, %s104
      %s107 = sphi 0, %s106
      %s121 = sphi 0, %s107
      %s125 = sphi 0, %s125
      %s127 = sphi 0, %s125
      %s128 = sphi 0, %s127
      %s142 = sphi 0, %s128
      %s146 = sphi 0, %s146
      %s148 = sphi 0, %s146
      %s149 = sphi 0, %s148
      %s163 = sphi 0, %s149
      %s167 = sphi 0, %s167
      %s169 = sphi 0, %s167
      %s170 = sphi 0, %s169
      %s184 = sphi 0, %s170
      %s188 = sphi 0, %s188
      %s190 = sphi 0, %s188
      %s191 = sphi 0, %s190
      %s205 = sphi 0, %s191
      %s213 = sphi 0, %s215
      %s216 = sphi 0, %s213
      %s217 = sphi 0, %s216
      %s233 = sphi 0, %s217
    $region4: #{tpu_custom_call.1} parent=1 // loop_header_branch
      %31 = sbr.rel (%p29) target = $region8
    $region5: #{tpu_custom_call.1} parent=1 // loop_body
      %s33 = ssub.s32 %s28, 1
      %s34 = ssub.s32 %s28, 2
      %s41 = sadd.s32 1, %s36
      %p42 = scmp.ge.s32.totalorder %s41, 1
      %s43 = scalar_select %p42, 0, %s41
      %s44 = sadd.s32 1, %s35
      %s45 = scalar_select %p42, %s44, %s35
      %p46 = scmp.ge.s32.totalorder %s45, 2
      %s47 = scalar_select %p46, 0, %s45
      %s48 = ssub.s32 %s35, %s47
      %s49 = ssub.s32 %s36, %s43
      %s50 = sor.u32 %s48, %s49
      %p51 = scmp.eq.s32.totalorder %s50, 0
      %s53 = sadd.s32 %s52, 1
      %s54 = scalar_select %p51, %s52, %s53
      %p57 = pneg %p51
      %p58 = scmp.eq.s32.totalorder %s28, 1
      %p59 = por %p57, %p58
      %p60 = scmp.ne.s32.totalorder %s52, %s55
      %p61 = scmp.eq.s32.totalorder %s28, 0
      %p62 = por %p60, %p61
      %p63 = scmp.ne.s32.totalorder %s52, %s55
      %p64 = scmp.eq.s32.totalorder %s33, 1
      %p65 = por %p63, %p64
      %p66 = scmp.ne.s32.totalorder %s55, %s56
      %p67 = scmp.eq.s32.totalorder %s33, 0
      %p68 = por %p66, %p67
      %p69 = scmp.ne.s32.totalorder %s55, %s56
      %p70 = scmp.eq.s32.totalorder %s34, 1
      %p71 = por %p69, %p70
      %p73 = scmp.ne.s32.totalorder %s56, %s72
      %p74 = scmp.eq.s32.totalorder %s34, 0
      %p75 = por %p73, %p74
      %s76 = ssub.s32 %s35, %s47
      %s77 = ssub.s32 %s36, %s43
      %s78 = sor.u32 %s76, %s77
      %p79 = scmp.eq.s32.totalorder %s78, 0
      %s81 = sadd.s32 %s80, 1
      %s82 = scalar_select %p79, %s80, %s81
      %p85 = pneg %p79
      %p86 = scmp.eq.s32.totalorder %s28, 1
      %p87 = por %p85, %p86
      %p88 = scmp.ne.s32.totalorder %s80, %s83
      %p89 = scmp.eq.s32.totalorder %s28, 0
      %p90 = por %p88, %p89
      %p91 = scmp.ne.s32.totalorder %s80, %s83
      %p92 = scmp.eq.s32.totalorder %s33, 1
      %p93 = por %p91, %p92
      %p94 = scmp.ne.s32.totalorder %s83, %s84
      %p95 = scmp.eq.s32.totalorder %s33, 0
      %p96 = por %p94, %p95
      %p97 = scmp.ne.s32.totalorder %s83, %s84
      %p98 = scmp.eq.s32.totalorder %s34, 1
      %p99 = por %p97, %p98
      %p101 = scmp.ne.s32.totalorder %s84, %s100
      %p102 = scmp.eq.s32.totalorder %s34, 0
      %p103 = por %p101, %p102
      %s105 = sadd.s32 %s104, 1
      %p108 = scmp.eq.s32.totalorder %s28, 1
      %p109 = scmp.ne.s32.totalorder %s104, %s106
      %p110 = scmp.eq.s32.totalorder %s28, 0
      %p111 = por %p109, %p110
      %p112 = scmp.ne.s32.totalorder %s104, %s106
      %p113 = scmp.eq.s32.totalorder %s33, 1
      %p114 = por %p112, %p113
      %p115 = scmp.ne.s32.totalorder %s106, %s107
      %p116 = scmp.eq.s32.totalorder %s33, 0
      %p117 = por %p115, %p116
      %p118 = scmp.ne.s32.totalorder %s106, %s107
      %p119 = scmp.eq.s32.totalorder %s34, 1
      %p120 = por %p118, %p119
      %p122 = scmp.ne.s32.totalorder %s107, %s121
      %p123 = scmp.eq.s32.totalorder %s34, 0
      %p124 = por %p122, %p123
      %s126 = sadd.s32 %s125, 1
      %p129 = scmp.eq.s32.totalorder %s28, 1
      %p130 = scmp.ne.s32.totalorder %s125, %s127
      %p131 = scmp.eq.s32.totalorder %s28, 0
      %p132 = por %p130, %p131
      %p133 = scmp.ne.s32.totalorder %s125, %s127
      %p134 = scmp.eq.s32.totalorder %s33, 1
      %p135 = por %p133, %p134
      %p136 = scmp.ne.s32.totalorder %s127, %s128
      %p137 = scmp.eq.s32.totalorder %s33, 0
      %p138 = por %p136, %p137
      %p139 = scmp.ne.s32.totalorder %s127, %s128
      %p140 = scmp.eq.s32.totalorder %s34, 1
      %p141 = por %p139, %p140
      %p143 = scmp.ne.s32.totalorder %s128, %s142
      %p144 = scmp.eq.s32.totalorder %s34, 0
      %p145 = por %p143, %p144
      %s147 = sadd.s32 %s146, 1
      %p150 = scmp.eq.s32.totalorder %s28, 1
      %p151 = scmp.ne.s32.totalorder %s146, %s148
      %p152 = scmp.eq.s32.totalorder %s28, 0
      %p153 = por %p151, %p152
      %p154 = scmp.ne.s32.totalorder %s146, %s148
      %p155 = scmp.eq.s32.totalorder %s33, 1
      %p156 = por %p154, %p155
      %p157 = scmp.ne.s32.totalorder %s148, %s149
      %p158 = scmp.eq.s32.totalorder %s33, 0
      %p159 = por %p157, %p158
      %p160 = scmp.ne.s32.totalorder %s148, %s149
      %p161 = scmp.eq.s32.totalorder %s34, 1
      %p162 = por %p160, %p161
      %p164 = scmp.ne.s32.totalorder %s149, %s163
      %p165 = scmp.eq.s32.totalorder %s34, 0
      %p166 = por %p164, %p165
      %s168 = sadd.s32 %s167, 1
      %p171 = scmp.eq.s32.totalorder %s28, 1
      %p172 = scmp.ne.s32.totalorder %s167, %s169
      %p173 = scmp.eq.s32.totalorder %s28, 0
      %p174 = por %p172, %p173
      %p175 = scmp.ne.s32.totalorder %s167, %s169
      %p176 = scmp.eq.s32.totalorder %s33, 1
      %p177 = por %p175, %p176
      %p178 = scmp.ne.s32.totalorder %s169, %s170
      %p179 = scmp.eq.s32.totalorder %s33, 0
      %p180 = por %p178, %p179
      %p181 = scmp.ne.s32.totalorder %s169, %s170
      %p182 = scmp.eq.s32.totalorder %s34, 1
      %p183 = por %p181, %p182
      %p185 = scmp.ne.s32.totalorder %s170, %s184
      %p186 = scmp.eq.s32.totalorder %s34, 0
      %p187 = por %p185, %p186
      %s189 = sadd.s32 %s188, 1
      %p192 = scmp.eq.s32.totalorder %s28, 1
      %p193 = scmp.ne.s32.totalorder %s188, %s190
      %p194 = scmp.eq.s32.totalorder %s28, 0
      %p195 = por %p193, %p194
      %p196 = scmp.ne.s32.totalorder %s188, %s190
      %p197 = scmp.eq.s32.totalorder %s33, 1
      %p198 = por %p196, %p197
      %p199 = scmp.ne.s32.totalorder %s190, %s191
      %p200 = scmp.eq.s32.totalorder %s33, 0
      %p201 = por %p199, %p200
      %p202 = scmp.ne.s32.totalorder %s190, %s191
      %p203 = scmp.eq.s32.totalorder %s34, 1
      %p204 = por %p202, %p203
      %p206 = scmp.ne.s32.totalorder %s191, %s205
      %p207 = scmp.eq.s32.totalorder %s34, 0
      %p208 = por %p206, %p207
      %s209 = ssub.s32 %s35, %s47
      %s210 = ssub.s32 %s36, %s43
      %s211 = sor.u32 %s209, %s210
      %p212 = scmp.eq.s32.totalorder %s211, 0
      %s214 = sadd.s32 %s213, 1
      %s215 = scalar_select %p212, %s213, %s214
      %p218 = pneg %p212
      %p219 = scmp.eq.s32.totalorder %s28, 1
      %p220 = por %p218, %p219
      %p221 = scmp.ne.s32.totalorder %s213, %s216
      %p222 = scmp.eq.s32.totalorder %s28, 0
      %p223 = por %p221, %p222
      %p224 = scmp.ne.s32.totalorder %s213, %s216
      %p225 = scmp.eq.s32.totalorder %s33, 1
      %p226 = por %p224, %p225
      %p227 = scmp.ne.s32.totalorder %s216, %s217
      %p228 = scmp.eq.s32.totalorder %s33, 0
      %p229 = por %p227, %p228
      %p230 = scmp.ne.s32.totalorder %s216, %s217
      %p231 = scmp.eq.s32.totalorder %s34, 1
      %p232 = por %p230, %p231
      %p234 = scmp.ne.s32.totalorder %s217, %s233
      %p235 = scmp.eq.s32.totalorder %s34, 0
      %p236 = por %p234, %p235
      %p237 = scmp.le.s32.totalorder 1, %s28
      %p238 = scmp.lt.s32.totalorder %s28, 3
      %p239 = pnand %p237, %p238
      %p240 = pneg %p239
      // Predicated region
      $region9: #{tpu_custom_call.1} parent=5 // pred_check
        _
      $region10: #{tpu_custom_call.1} parent=5 // pred_check_branch
        %242 = sbr.rel (%p239) target = $region12
      $region11: #{tpu_custom_call.1} parent=5 // pred_region
        %s243 = ssub.s32 %s28, 1
        // Predicated region
        $region13: #{tpu_custom_call.1} parent=11 // pred_check
          %p244 = pneg %p117
        $region14: #{tpu_custom_call.1} parent=11 // pred_check_branch
          %246 = sbr.rel (%p244) target = $region16
        $region15: #{tpu_custom_call.1} parent=11 // pred_region
          _
        $region16: #{tpu_custom_call.1} parent=11 // pred_fallthru
          _
        // Predicated region
        $region17: #{tpu_custom_call.1} parent=11 // pred_check
          %p247 = pneg %p138
        $region18: #{tpu_custom_call.1} parent=11 // pred_check_branch
          %249 = sbr.rel (%p247) target = $region20
        $region19: #{tpu_custom_call.1} parent=11 // pred_region
          _
        $region20: #{tpu_custom_call.1} parent=11 // pred_fallthru
          _
        // Predicated region
        $region21: #{tpu_custom_call.1} parent=11 // pred_check
          %p250 = pneg %p159
        $region22: #{tpu_custom_call.1} parent=11 // pred_check_branch
          %252 = sbr.rel (%p250) target = $region24
        $region23: #{tpu_custom_call.1} parent=11 // pred_region
          _
        $region24: #{tpu_custom_call.1} parent=11 // pred_fallthru
          _
        // Predicated region
        $region25: #{tpu_custom_call.1} parent=11 // pred_check
          %p253 = pneg %p180
        $region26: #{tpu_custom_call.1} parent=11 // pred_check_branch
          %255 = sbr.rel (%p253) target = $region28
        $region27: #{tpu_custom_call.1} parent=11 // pred_region
          _
        $region28: #{tpu_custom_call.1} parent=11 // pred_fallthru
          _
        // Predicated region
        $region29: #{tpu_custom_call.1} parent=11 // pred_check
          %p256 = pneg %p201
        $region30: #{tpu_custom_call.1} parent=11 // pred_check_branch
          %258 = sbr.rel (%p256) target = $region32
        $region31: #{tpu_custom_call.1} parent=11 // pred_region
          _
        $region32: #{tpu_custom_call.1} parent=11 // pred_fallthru
          _
      $region12: #{tpu_custom_call.1} parent=5 // pred_fallthru
        _
      %p259 = scmp.lt.s32.totalorder %s28, 2
      // Predicated region
      $region33: #{tpu_custom_call.1} parent=5 // pred_check
        %p260 = pneg %p259
      $region34: #{tpu_custom_call.1} parent=5 // pred_check_branch
        %262 = sbr.rel (%p260) target = $region36
      $region35: #{tpu_custom_call.1} parent=5 // pred_region
        // Predicated region
        $region37: #{tpu_custom_call.1} parent=35 // pred_check
          %p263 = pneg %p62
        $region38: #{tpu_custom_call.1} parent=35 // pred_check_branch
          %265 = sbr.rel (%p263) target = $region40
        $region39: #{tpu_custom_call.1} parent=35 // pred_region
          %s266 = smul.u32 2, %s36
          %p267 = scmp.lt.s32.totalorder %s35, 1
          %s268 = scalar_select %p267, %s35, 1
          %p269 = scmp.lt.s32.totalorder %s266, 1
          %s270 = scalar_select %p269, %s266, 1
          %s271 = smul.addr %s268, 2
          %s272 = sadd.s32 %s270, %s271
          %s273 = smul.addr %s272, 4
          %s274 = scalar_lea.vmem %s2, %s273
          %s275 = smul.u32 2, %s36
        $region40: #{tpu_custom_call.1} parent=35 // pred_fallthru
          _
        // Predicated region
        $region41: #{tpu_custom_call.1} parent=35 // pred_check
          %p276 = pneg %p90
        $region42: #{tpu_custom_call.1} parent=35 // pred_check_branch
          %278 = sbr.rel (%p276) target = $region44
        $region43: #{tpu_custom_call.1} parent=35 // pred_region
          %s279 = smul.u32 2, %s36
          %p280 = scmp.lt.s32.totalorder %s35, 1
          %s281 = scalar_select %p280, %s35, 1
          %p282 = scmp.lt.s32.totalorder %s279, 1
          %s283 = scalar_select %p282, %s279, 1
          %s284 = smul.addr %s281, 2
          %s285 = sadd.s32 %s283, %s284
          %s286 = smul.addr %s285, 4
          %s287 = scalar_lea.vmem %s3, %s286
          %s288 = smul.u32 2, %s36
        $region44: #{tpu_custom_call.1} parent=35 // pred_fallthru
          _
      $region36: #{tpu_custom_call.1} parent=5 // pred_fallthru
        _
      %p289 = scmp.le.s32.totalorder 1, %s28
      %p290 = scmp.lt.s32.totalorder %s28, 3
      %p291 = pnand %p289, %p290
      %p292 = pneg %p291
      // Predicated region
      $region45: #{tpu_custom_call.1} parent=5 // pred_check
        _
      $region46: #{tpu_custom_call.1} parent=5 // pred_check_branch
        %294 = sbr.rel (%p291) target = $region48
      $region47: #{tpu_custom_call.1} parent=5 // pred_region
        %s295 = ssub.s32 %s28, 1
        %s296 = smul.u32 2, %s38
        %p297 = scmp.lt.s32.totalorder %s37, 1
        %s298 = scalar_select %p297, %s37, 1
        %p299 = scmp.lt.s32.totalorder %s296, 1
        %s300 = scalar_select %p299, %s296, 1
        %s301 = smul.addr %s298, 2
        %s302 = sadd.s32 %s300, %s301
        %s303 = smul.addr %s302, 4
        %s304 = scalar_lea.vmem %s2, %s303
        %p305 = pneg %p68
        %p306 = pneg %p65
        %s307 = smul.u32 2, %s38
        %p308 = scmp.lt.s32.totalorder %s37, 1
        %s309 = scalar_select %p308, %s37, 1
        %p310 = scmp.lt.s32.totalorder %s307, 1
        %s311 = scalar_select %p310, %s307, 1
        %s312 = smul.addr %s309, 2
        %s313 = sadd.s32 %s311, %s312
        %s314 = smul.addr %s313, 4
        %s315 = scalar_lea.vmem %s3, %s314
        %p316 = pneg %p96
        %p317 = pneg %p93
        %p318 = pneg %p117
        %p319 = pneg %p114
        %p320 = pneg %p138
        %p321 = pneg %p135
        %p322 = pneg %p159
        %p323 = pneg %p156
        %p324 = pneg %p180
        %p325 = pneg %p177
        %p326 = pneg %p201
        %p327 = pneg %p198
        %p328 = pneg %p229
        %p329 = pneg %p226
        %s330 = sand.u32 %s216, 1
        %s331 = scalar_lea.sflag [#allocation7], %s330
        %s332 = sand.u32 %s216, 1
        %s333 = smul.addr %s332, 8
        %s334 = scalar_lea.vmem [#allocation6], %s333
        %s335 = smul.u32 2, %s38
        %p336 = scmp.lt.s32.totalorder %s37, 1
        %s337 = scalar_select %p336, %s37, 1
        %p338 = scmp.lt.s32.totalorder %s335, 1
        %s339 = scalar_select %p338, %s335, 1
        %s340 = smul.addr %s337, 2
        %s341 = sadd.s32 %s339, %s340
        %s342 = smul.addr %s341, 4
        %s343 = scalar_lea.vmem %s2, %s342
        %s344 = smul.u32 2, %s38
        %s345 = smul.u32 2, %s38
        %p346 = scmp.lt.s32.totalorder %s37, 1
        %s347 = scalar_select %p346, %s37, 1
        %p348 = scmp.lt.s32.totalorder %s345, 1
        %s349 = scalar_select %p348, %s345, 1
        %s350 = smul.addr %s347, 2
        %s351 = sadd.s32 %s349, %s350
        %s352 = smul.addr %s351, 4
        %s353 = scalar_lea.vmem %s3, %s352
        %s354 = smul.u32 2, %s38
        %s355 = smul.u32 2, %s38
        %v356 = vld [vmem:[%s5] sm:$0xff]
        %v357 = vld [vmem:[%s5 + $0x8] sm:$0xff]
        %v358 = vld [vmem:[%s5 + $0x10] sm:$0xff]
        %v359 = vld [vmem:[%s5 + $0x18] sm:$0xff]
        %v360 = vld [vmem:[%s353] sm:$0xff]
        %v362 = vcombine.high %v360, %v360
        %vm363 = vcmask 31744
        %v365 = vsel %vm363, %v356, 0
        %v368 = vsel %vm363, %v357, 0
        %v371 = vsel %vm363, %v358, 0
        %v374 = vsel %vm363, %v359, 0
        %vm376 = vcmask 1043456
        %v377 = vsel %vm376, %v360, 0
        %v379 = vsel %vm376, %v362, 0
        %381 = vmatprep.subr.mxu0 %v379
        %382 = vmatpush1.msra.mxu0 %v377
        %383 = vmatprep.subr.mxu0 0.0
        %384 = vmatpush1.msra.mxu0 0.0
        %385 = vmatprep.subr.mxu0 0.0
        %386 = vmatpush1.msra.mxu0 0.0
        %387 = vmatprep.subr.mxu0 0.0
        %388 = vmatpush1.msra.mxu0 0.0
        %389 = vmatprep.subr.mxu0 0.0
        %390 = vmatpush1.msra.mxu0 0.0
        %391 = vmatprep.subr.mxu0 0.0
        %392 = vmatpush1.msra.mxu0 0.0
        %393 = vmatprep.subr.mxu0 0.0
        %394 = vmatpush1.msra.mxu0 0.0
        %395 = vmatprep.subr.mxu0 0.0
        %396 = vmatpush1.msra.mxu0 0.0
        %397 = vmatprep.subr.mxu0 0.0
        %398 = vmatpush1.msra.mxu0 0.0
        %399 = vmatprep.subr.mxu0 0.0
        %400 = vmatpush1.msra.mxu0 0.0
        %401 = vmatprep.subr.mxu0 0.0
        %402 = vmatpush1.msra.mxu0 0.0
        %403 = vmatprep.subr.mxu0 0.0
        %404 = vmatpush1.msra.mxu0 0.0
        %405 = vmatprep.subr.mxu0 0.0
        %406 = vmatpush1.msra.mxu0 0.0
        %407 = vmatprep.subr.mxu0 0.0
        %408 = vmatpush1.msra.mxu0 0.0
        %409 = vmatprep.subr.mxu0 0.0
        %410 = vmatpush1.msra.mxu0 0.0
        %411 = vmatprep.subr.mxu0 0.0
        %412 = vmatpush1.msra.mxu0 0.0
        %413 = vmatprep.subr.mxu0 0.0
        %414 = vmatpush1.msra.mxu0 0.0
        %415 = vmatprep.subr.mxu0 0.0
        %416 = vmatpush1.msra.mxu0 0.0
        %417 = vmatprep.subr.mxu0 0.0
        %418 = vmatpush1.msra.mxu0 0.0
        %419 = vmatprep.subr.mxu0 0.0
        %420 = vmatpush1.msra.mxu0 0.0
        %421 = vmatprep.subr.mxu0 0.0
        %422 = vmatpush1.msra.mxu0 0.0
        %423 = vmatprep.subr.mxu0 0.0
        %424 = vmatpush1.msra.mxu0 0.0
        %425 = vmatprep.subr.mxu0 0.0
        %426 = vmatpush1.msra.mxu0 0.0
        %427 = vmatprep.subr.mxu0 0.0
        %428 = vmatpush1.msra.mxu0 0.0
        %429 = vmatprep.subr.mxu0 0.0
        %430 = vmatpush1.msra.mxu0 0.0
        %431 = vmatprep.subr.mxu0 0.0
        %432 = vmatpush1.msra.mxu0 0.0
        %433 = vmatprep.subr.mxu0 0.0
        %434 = vmatpush1.msra.mxu0 0.0
        %435 = vmatprep.subr.mxu0 0.0
        %436 = vmatpush1.msra.mxu0 0.0
        %437 = vmatprep.subr.mxu0 0.0
        %438 = vmatpush1.msra.mxu0 0.0
        %439 = vmatprep.subr.mxu0 0.0
        %440 = vmatpush1.msra.mxu0 0.0
        %441 = vmatprep.subr.mxu0 0.0
        %442 = vmatpush1.msra.mxu0 0.0
        %443 = vmatprep.subr.mxu0 0.0
        %444 = vmatpush1.msra.mxu0 0.0
        %445 = vmatprep.mubr.f32.mxu0 0.0
        %446 = vmatmul.mubr.f32.gmra.mrb[0].mxu0 %v365
        %v447 = vpop.f32.mrb[0].mxu0
        %v448 = vadd.f32 0.0, %v447
        %v449 = vpop.f32.mrb[0].mxu0
        %v450 = vadd.f32 0.0, %v449
        %451 = vmatprep.mubr.f32.mxu0 0.0
        %452 = vmatmul.mubr.f32.gmra.mrb[0].mxu0 %v368
        %v453 = vpop.f32.mrb[0].mxu0
        %v454 = vadd.f32 0.0, %v453
        %v455 = vpop.f32.mrb[0].mxu0
        %v456 = vadd.f32 0.0, %v455
        %457 = vmatprep.mubr.f32.mxu0 0.0
        %458 = vmatmul.mubr.f32.gmra.mrb[0].mxu0 %v371
        %v459 = vpop.f32.mrb[0].mxu0
        %v460 = vadd.f32 0.0, %v459
        %v461 = vpop.f32.mrb[0].mxu0
        %v462 = vadd.f32 0.0, %v461
        %463 = vmatprep.mubr.f32.mxu0 0.0
        %464 = vmatmul.mubr.f32.gmra.mrb[0].mxu0 %v374
        %v465 = vpop.f32.mrb[0].mxu0
        %v466 = vadd.f32 0.0, %v465
        %v467 = vpop.f32.mrb[0].mxu0
        %v468 = vadd.f32 0.0, %v467
        %469 = vdwg.mxu0
        %470 = vst [vmem:[#allocation2] sm:$0xff] %v448
        %471 = vst [vmem:[#allocation2 + $0x8] sm:$0xff] %v450
        %472 = vst [vmem:[#allocation2 + $0x10] sm:$0xff] %v454
        %473 = vst [vmem:[#allocation2 + $0x18] sm:$0xff] %v456
        %474 = vst [vmem:[#allocation2 + $0x20] sm:$0xff] %v460
        %475 = vst [vmem:[#allocation2 + $0x28] sm:$0xff] %v462
        %476 = vst [vmem:[#allocation2 + $0x30] sm:$0xff] %v466
        %477 = vst [vmem:[#allocation2 + $0x38] sm:$0xff] %v468
        %v478 = vld [vmem:[%s343] sm:$0xf]
        %v479 = vld [vmem:[%s343 + $0x4] sm:$0xf]
        %v480 = vld [vmem:[%s6] sm:$0xff]
        %v481 = vld [vmem:[%s6 + $0x8] sm:$0xff]
        %v482 = vld [vmem:[%s6 + $0x10] sm:$0xff]
        %v483 = vld [vmem:[%s6 + $0x18] sm:$0xff]
        %v484 = vlaneseq
        %v485 = vand.u32 %v484, 127
        %vm486 = vcmp.eq.s32.totalorder %v485, 7
        %v487 = vsel %vm486, %v480, 0.0
        %v488 = vsel %vm486, %v481, 0.0
        %v489 = vsel %vm486, %v482, 0.0
        %v490 = vsel %vm486, %v483, 0.0
        %491 = vadd.xlane.f32.xlu0 %v487
        %v492 = vpop.xlane.xlu0 %491
        %493 = vadd.xlane.f32.xlu0 %v488
        %v494 = vpop.xlane.xlu0 %493
        %495 = vadd.xlane.f32.xlu0 %v489
        %v496 = vpop.xlane.xlu0 %495
        %497 = vadd.xlane.f32.xlu0 %v490
        %v498 = vpop.xlane.xlu0 %497
        %v499 = vld [vmem:[%s4] sm:$0xff]
        %v500 = vld [vmem:[%s4 + $0x8] sm:$0xff]
        %v501 = vld [vmem:[%s4 + $0x10] sm:$0xff]
        %v502 = vld [vmem:[%s4 + $0x18] sm:$0xff]
        %v503 = vld [vmem:[%s7] sm:$0xf]
        %v504 = vld [vmem:[%s8] sm:$0xf]
        %s505 = sld [smem:[#allocation4 + $0x7]]
        %s506 = sld [smem:[#allocation5 + $0x7]]
        %v507 = vld [vmem:[#allocation2] sm:$0xff]
        %v508 = vld [vmem:[#allocation2 + $0x10] sm:$0xff]
        %v509 = vld [vmem:[#allocation2 + $0x20] sm:$0xff]
        %v510 = vld [vmem:[#allocation2 + $0x30] sm:$0xff]
        %v512 = vsel %vm363, %v499, 0
        %v515 = vsel %vm363, %v500, 0
        %v518 = vsel %vm363, %v501, 0
        %v521 = vsel %vm363, %v502, 0
        %v524 = vsel %vm376, %v478, 0
        %526 = vmatprep.subr.mxu0 0.0
        %527 = vmatpush1.msra.mxu0 %v524
        %528 = vmatprep.subr.mxu0 0.0
        %529 = vmatpush1.msra.mxu0 0.0
        %530 = vmatprep.subr.mxu0 0.0
        %531 = vmatpush1.msra.mxu0 0.0
        %532 = vmatprep.subr.mxu0 0.0
        %533 = vmatpush1.msra.mxu0 0.0
        %534 = vmatprep.subr.mxu0 0.0
        %535 = vmatpush1.msra.mxu0 0.0
        %536 = vmatprep.subr.mxu0 0.0
        %537 = vmatpush1.msra.mxu0 0.0
        %538 = vmatprep.subr.mxu0 0.0
        %539 = vmatpush1.msra.mxu0 0.0
        %540 = vmatprep.subr.mxu0 0.0
        %541 = vmatpush1.msra.mxu0 0.0
        %542 = vmatprep.subr.mxu0 0.0
        %543 = vmatpush1.msra.mxu0 0.0
        %544 = vmatprep.subr.mxu0 0.0
        %545 = vmatpush1.msra.mxu0 0.0
        %546 = vmatprep.subr.mxu0 0.0
        %547 = vmatpush1.msra.mxu0 0.0
        %548 = vmatprep.subr.mxu0 0.0
        %549 = vmatpush1.msra.mxu0 0.0
        %550 = vmatprep.subr.mxu0 0.0
        %551 = vmatpush1.msra.mxu0 0.0
        %552 = vmatprep.subr.mxu0 0.0
        %553 = vmatpush1.msra.mxu0 0.0
        %554 = vmatprep.subr.mxu0 0.0
        %555 = vmatpush1.msra.mxu0 0.0
        %556 = vmatprep.subr.mxu0 0.0
        %557 = vmatpush1.msra.mxu0 0.0
        %558 = vmatprep.subr.mxu0 0.0
        %559 = vmatpush1.msra.mxu0 0.0
        %560 = vmatprep.subr.mxu0 0.0
        %561 = vmatpush1.msra.mxu0 0.0
        %562 = vmatprep.subr.mxu0 0.0
        %563 = vmatpush1.msra.mxu0 0.0
        %564 = vmatprep.subr.mxu0 0.0
        %565 = vmatpush1.msra.mxu0 0.0
        %566 = vmatprep.subr.mxu0 0.0
        %567 = vmatpush1.msra.mxu0 0.0
        %568 = vmatprep.subr.mxu0 0.0
        %569 = vmatpush1.msra.mxu0 0.0
        %570 = vmatprep.subr.mxu0 0.0
        %571 = vmatpush1.msra.mxu0 0.0
        %572 = vmatprep.subr.mxu0 0.0
        %573 = vmatpush1.msra.mxu0 0.0
        %574 = vmatprep.subr.mxu0 0.0
        %575 = vmatpush1.msra.mxu0 0.0
        %576 = vmatprep.subr.mxu0 0.0
        %577 = vmatpush1.msra.mxu0 0.0
        %578 = vmatprep.subr.mxu0 0.0
        %579 = vmatpush1.msra.mxu0 0.0
        %580 = vmatprep.subr.mxu0 0.0
        %581 = vmatpush1.msra.mxu0 0.0
        %582 = vmatprep.subr.mxu0 0.0
        %583 = vmatpush1.msra.mxu0 0.0
        %584 = vmatprep.subr.mxu0 0.0
        %585 = vmatpush1.msra.mxu0 0.0
        %586 = vmatprep.subr.mxu0 0.0
        %587 = vmatpush1.msra.mxu0 0.0
        %588 = vmatprep.subr.mxu0 0.0
        %589 = vmatpush1.msra.mxu0 0.0
        %590 = vmatprep.mubr.f32.mxu0 0.0
        %591 = vmatmul.mubr.f32.gmra.mrb[0].mxu0 %v512
        %v592 = vpop.f32.mrb[0].mxu0
        %v593 = vadd.f32 %v507, %v592
        %v594 = vpop.f32.mrb[0].mxu0
        %595 = vmatprep.mubr.f32.mxu0 0.0
        %596 = vmatmul.mubr.f32.gmra.mrb[0].mxu0 %v515
        %v597 = vpop.f32.mrb[0].mxu0
        %v598 = vadd.f32 %v508, %v597
        %v599 = vpop.f32.mrb[0].mxu0
        %600 = vmatprep.mubr.f32.mxu0 0.0
        %601 = vmatmul.mubr.f32.gmra.mrb[0].mxu0 %v518
        %v602 = vpop.f32.mrb[0].mxu0
        %v603 = vadd.f32 %v509, %v602
        %v604 = vpop.f32.mrb[0].mxu0
        %605 = vmatprep.mubr.f32.mxu0 0.0
        %606 = vmatmul.mubr.f32.gmra.mrb[0].mxu0 %v521
        %v607 = vpop.f32.mrb[0].mxu0
        %v608 = vadd.f32 %v510, %v607
        %v609 = vpop.f32.mrb[0].mxu0
        %610 = vdwg.mxu0
        %v611 = vadd.f32 %v593, %v492
        %v612 = vadd.f32 %v598, %v494
        %v613 = vadd.f32 %v603, %v496
        %v614 = vadd.f32 %v608, %v498
        %v615 = vmax.f32 %v611, 0.0
        %v616 = vmax.f32 %v612, 0.0
        %v617 = vmax.f32 %v613, 0.0
        %v618 = vmax.f32 %v614, 0.0
        %620 = vset.pattern.permute.xlu0 0
        %621 = vperm.xlu0 %620, %v504
        %v622 = vpop.permute.xlu0 %621
        %vm624 = vcmask 261120
        %v626 = vsel %vm624, %v503, 0
        %628 = vmatprep.subr.mxu0 0.0
        %629 = vmatpush1.msra.mxu0 %v615
        %630 = vmatprep.subr.mxu0 0.0
        %631 = vmatpush1.msra.mxu0 %v616
        %632 = vmatprep.subr.mxu0 0.0
        %633 = vmatpush1.msra.mxu0 %v617
        %634 = vmatprep.subr.mxu0 0.0
        %635 = vmatpush1.msra.mxu0 %v618
        %636 = vmatprep.subr.mxu0 0.0
        %637 = vmatpush1.msra.mxu0 0.0
        %638 = vmatprep.subr.mxu0 0.0
        %639 = vmatpush1.msra.mxu0 0.0
        %640 = vmatprep.subr.mxu0 0.0
        %641 = vmatpush1.msra.mxu0 0.0
        %642 = vmatprep.subr.mxu0 0.0
        %643 = vmatpush1.msra.mxu0 0.0
        %644 = vmatprep.subr.mxu0 0.0
        %645 = vmatpush1.msra.mxu0 0.0
        %646 = vmatprep.subr.mxu0 0.0
        %647 = vmatpush1.msra.mxu0 0.0
        %648 = vmatprep.subr.mxu0 0.0
        %649 = vmatpush1.msra.mxu0 0.0
        %650 = vmatprep.subr.mxu0 0.0
        %651 = vmatpush1.msra.mxu0 0.0
        %652 = vmatprep.subr.mxu0 0.0
        %653 = vmatpush1.msra.mxu0 0.0
        %654 = vmatprep.subr.mxu0 0.0
        %655 = vmatpush1.msra.mxu0 0.0
        %656 = vmatprep.subr.mxu0 0.0
        %657 = vmatpush1.msra.mxu0 0.0
        %658 = vmatprep.subr.mxu0 0.0
        %659 = vmatpush1.msra.mxu0 0.0
        %660 = vmatprep.subr.mxu0 0.0
        %661 = vmatpush1.msra.mxu0 0.0
        %662 = vmatprep.subr.mxu0 0.0
        %663 = vmatpush1.msra.mxu0 0.0
        %664 = vmatprep.subr.mxu0 0.0
        %665 = vmatpush1.msra.mxu0 0.0
        %666 = vmatprep.subr.mxu0 0.0
        %667 = vmatpush1.msra.mxu0 0.0
        %668 = vmatprep.subr.mxu0 0.0
        %669 = vmatpush1.msra.mxu0 0.0
        %670 = vmatprep.subr.mxu0 0.0
        %671 = vmatpush1.msra.mxu0 0.0
        %672 = vmatprep.subr.mxu0 0.0
        %673 = vmatpush1.msra.mxu0 0.0
        %674 = vmatprep.subr.mxu0 0.0
        %675 = vmatpush1.msra.mxu0 0.0
        %676 = vmatprep.subr.mxu0 0.0
        %677 = vmatpush1.msra.mxu0 0.0
        %678 = vmatprep.subr.mxu0 0.0
        %679 = vmatpush1.msra.mxu0 0.0
        %680 = vmatprep.subr.mxu0 0.0
        %681 = vmatpush1.msra.mxu0 0.0
        %682 = vmatprep.subr.mxu0 0.0
        %683 = vmatpush1.msra.mxu0 0.0
        %684 = vmatprep.subr.mxu0 0.0
        %685 = vmatpush1.msra.mxu0 0.0
        %686 = vmatprep.subr.mxu0 0.0
        %687 = vmatpush1.msra.mxu0 0.0
        %688 = vmatprep.subr.mxu0 0.0
        %689 = vmatpush1.msra.mxu0 0.0
        %690 = vmatprep.subr.mxu0 0.0
        %691 = vmatpush1.msra.mxu0 0.0
        %692 = vmatprep.mubr.f32.mxu0 0.0
        %693 = vmatmul.mubr.f32.gmra.mrb[0].mxu0 %v626
        %v694 = vpop.f32.mrb[0].mxu0
        %v695 = vadd.f32 %v622, %v694
        %v696 = vpop.f32.mrb[0].mxu0
        %697 = vdwg.mxu0
        %v698 = vstv %s505
        %v699 = vmul.f32 %v698, %v478
        %v700 = vstv %s506
        %v701 = vmul.f32 %v700, %v695
        %v702 = vsub.f32 %v699, %v701
        %v703 = vld [vmem:[#allocation2 + $0x8] sm:$0xff]
        %v704 = vld [vmem:[#allocation2 + $0x18] sm:$0xff]
        %v705 = vld [vmem:[#allocation2 + $0x28] sm:$0xff]
        %v706 = vld [vmem:[#allocation2 + $0x38] sm:$0xff]
        %v708 = vsel %vm376, %v479, 0
        %710 = vmatprep.subr.mxu0 0.0
        %711 = vmatpush1.msra.mxu0 %v708
        %712 = vmatprep.subr.mxu0 0.0
        %713 = vmatpush1.msra.mxu0 0.0
        %714 = vmatprep.subr.mxu0 0.0
        %715 = vmatpush1.msra.mxu0 0.0
        %716 = vmatprep.subr.mxu0 0.0
        %717 = vmatpush1.msra.mxu0 0.0
        %718 = vmatprep.subr.mxu0 0.0
        %719 = vmatpush1.msra.mxu0 0.0
        %720 = vmatprep.subr.mxu0 0.0
        %721 = vmatpush1.msra.mxu0 0.0
        %722 = vmatprep.subr.mxu0 0.0
        %723 = vmatpush1.msra.mxu0 0.0
        %724 = vmatprep.subr.mxu0 0.0
        %725 = vmatpush1.msra.mxu0 0.0
        %726 = vmatprep.subr.mxu0 0.0
        %727 = vmatpush1.msra.mxu0 0.0
        %728 = vmatprep.subr.mxu0 0.0
        %729 = vmatpush1.msra.mxu0 0.0
        %730 = vmatprep.subr.mxu0 0.0
        %731 = vmatpush1.msra.mxu0 0.0
        %732 = vmatprep.subr.mxu0 0.0
        %733 = vmatpush1.msra.mxu0 0.0
        %734 = vmatprep.subr.mxu0 0.0
        %735 = vmatpush1.msra.mxu0 0.0
        %736 = vmatprep.subr.mxu0 0.0
        %737 = vmatpush1.msra.mxu0 0.0
        %738 = vmatprep.subr.mxu0 0.0
        %739 = vmatpush1.msra.mxu0 0.0
        %740 = vmatprep.subr.mxu0 0.0
        %741 = vmatpush1.msra.mxu0 0.0
        %742 = vmatprep.subr.mxu0 0.0
        %743 = vmatpush1.msra.mxu0 0.0
        %744 = vmatprep.subr.mxu0 0.0
        %745 = vmatpush1.msra.mxu0 0.0
        %746 = vmatprep.subr.mxu0 0.0
        %747 = vmatpush1.msra.mxu0 0.0
        %748 = vmatprep.subr.mxu0 0.0
        %749 = vmatpush1.msra.mxu0 0.0
        %750 = vmatprep.subr.mxu0 0.0
        %751 = vmatpush1.msra.mxu0 0.0
        %752 = vmatprep.subr.mxu0 0.0
        %753 = vmatpush1.msra.mxu0 0.0
        %754 = vmatprep.subr.mxu0 0.0
        %755 = vmatpush1.msra.mxu0 0.0
        %756 = vmatprep.subr.mxu0 0.0
        %757 = vmatpush1.msra.mxu0 0.0
        %758 = vmatprep.subr.mxu0 0.0
        %759 = vmatpush1.msra.mxu0 0.0
        %760 = vmatprep.subr.mxu0 0.0
        %761 = vmatpush1.msra.mxu0 0.0
        %762 = vmatprep.subr.mxu0 0.0
        %763 = vmatpush1.msra.mxu0 0.0
        %764 = vmatprep.subr.mxu0 0.0
        %765 = vmatpush1.msra.mxu0 0.0
        %766 = vmatprep.subr.mxu0 0.0
        %767 = vmatpush1.msra.mxu0 0.0
        %768 = vmatprep.subr.mxu0 0.0
        %769 = vmatpush1.msra.mxu0 0.0
        %770 = vmatprep.subr.mxu0 0.0
        %771 = vmatpush1.msra.mxu0 0.0
        %772 = vmatprep.subr.mxu0 0.0
        %773 = vmatpush1.msra.mxu0 0.0
        %774 = vmatprep.mubr.f32.mxu0 0.0
        %775 = vmatmul.mubr.f32.gmra.mrb[0].mxu0 %v512
        %v776 = vpop.f32.mrb[0].mxu0
        %v777 = vadd.f32 %v703, %v776
        %v778 = vpop.f32.mrb[0].mxu0
        %779 = vmatprep.mubr.f32.mxu0 0.0
        %780 = vmatmul.mubr.f32.gmra.mrb[0].mxu0 %v515
        %v781 = vpop.f32.mrb[0].mxu0
        %v782 = vadd.f32 %v704, %v781
        %v783 = vpop.f32.mrb[0].mxu0
        %784 = vmatprep.mubr.f32.mxu0 0.0
        %785 = vmatmul.mubr.f32.gmra.mrb[0].mxu0 %v518
        %v786 = vpop.f32.mrb[0].mxu0
        %v787 = vadd.f32 %v705, %v786
        %v788 = vpop.f32.mrb[0].mxu0
        %789 = vmatprep.mubr.f32.mxu0 0.0
        %790 = vmatmul.mubr.f32.gmra.mrb[0].mxu0 %v521
        %v791 = vpop.f32.mrb[0].mxu0
        %v792 = vadd.f32 %v706, %v791
        %v793 = vpop.f32.mrb[0].mxu0
        %794 = vdwg.mxu0
        %v795 = vadd.f32 %v777, %v492
        %v796 = vadd.f32 %v782, %v494
        %v797 = vadd.f32 %v787, %v496
        %v798 = vadd.f32 %v792, %v498
        %v799 = vmax.f32 %v795, 0.0
        %v800 = vmax.f32 %v796, 0.0
        %v801 = vmax.f32 %v797, 0.0
        %v802 = vmax.f32 %v798, 0.0
        %803 = vmatprep.subr.mxu0 0.0
        %804 = vmatpush1.msra.mxu0 %v799
        %805 = vmatprep.subr.mxu0 0.0
        %806 = vmatpush1.msra.mxu0 %v800
        %807 = vmatprep.subr.mxu0 0.0
        %808 = vmatpush1.msra.mxu0 %v801
        %809 = vmatprep.subr.mxu0 0.0
        %810 = vmatpush1.msra.mxu0 %v802
        %811 = vmatprep.subr.mxu0 0.0
        %812 = vmatpush1.msra.mxu0 0.0
        %813 = vmatprep.subr.mxu0 0.0
        %814 = vmatpush1.msra.mxu0 0.0
        %815 = vmatprep.subr.mxu0 0.0
        %816 = vmatpush1.msra.mxu0 0.0
        %817 = vmatprep.subr.mxu0 0.0
        %818 = vmatpush1.msra.mxu0 0.0
        %819 = vmatprep.subr.mxu0 0.0
        %820 = vmatpush1.msra.mxu0 0.0
        %821 = vmatprep.subr.mxu0 0.0
        %822 = vmatpush1.msra.mxu0 0.0
        %823 = vmatprep.subr.mxu0 0.0
        %824 = vmatpush1.msra.mxu0 0.0
        %825 = vmatprep.subr.mxu0 0.0
        %826 = vmatpush1.msra.mxu0 0.0
        %827 = vmatprep.subr.mxu0 0.0
        %828 = vmatpush1.msra.mxu0 0.0
        %829 = vmatprep.subr.mxu0 0.0
        %830 = vmatpush1.msra.mxu0 0.0
        %831 = vmatprep.subr.mxu0 0.0
        %832 = vmatpush1.msra.mxu0 0.0
        %833 = vmatprep.subr.mxu0 0.0
        %834 = vmatpush1.msra.mxu0 0.0
        %835 = vmatprep.subr.mxu0 0.0
        %836 = vmatpush1.msra.mxu0 0.0
        %837 = vmatprep.subr.mxu0 0.0
        %838 = vmatpush1.msra.mxu0 0.0
        %839 = vmatprep.subr.mxu0 0.0
        %840 = vmatpush1.msra.mxu0 0.0
        %841 = vmatprep.subr.mxu0 0.0
        %842 = vmatpush1.msra.mxu0 0.0
        %843 = vmatprep.subr.mxu0 0.0
        %844 = vmatpush1.msra.mxu0 0.0
        %845 = vmatprep.subr.mxu0 0.0
        %846 = vmatpush1.msra.mxu0 0.0
        %847 = vmatprep.subr.mxu0 0.0
        %848 = vmatpush1.msra.mxu0 0.0
        %849 = vmatprep.subr.mxu0 0.0
        %850 = vmatpush1.msra.mxu0 0.0
        %851 = vmatprep.subr.mxu0 0.0
        %852 = vmatpush1.msra.mxu0 0.0
        %853 = vmatprep.subr.mxu0 0.0
        %854 = vmatpush1.msra.mxu0 0.0
        %855 = vmatprep.subr.mxu0 0.0
        %856 = vmatpush1.msra.mxu0 0.0
        %857 = vmatprep.subr.mxu0 0.0
        %858 = vmatpush1.msra.mxu0 0.0
        %859 = vmatprep.subr.mxu0 0.0
        %860 = vmatpush1.msra.mxu0 0.0
        %861 = vmatprep.subr.mxu0 0.0
        %862 = vmatpush1.msra.mxu0 0.0
        %863 = vmatprep.subr.mxu0 0.0
        %864 = vmatpush1.msra.mxu0 0.0
        %865 = vmatprep.subr.mxu0 0.0
        %866 = vmatpush1.msra.mxu0 0.0
        %867 = vmatprep.mubr.f32.mxu0 0.0
        %868 = vmatmul.mubr.f32.gmra.mrb[0].mxu0 %v626
        %v869 = vpop.f32.mrb[0].mxu0
        %v870 = vadd.f32 %v622, %v869
        %v871 = vpop.f32.mrb[0].mxu0
        %872 = vdwg.mxu0
        %v873 = vmul.f32 %v698, %v479
        %v874 = vmul.f32 %v700, %v870
        %v875 = vsub.f32 %v873, %v874
        %vm876 = vcmp.eq.s32.totalorder %v485, 6
        %v877 = vsel %vm876, %v480, 0.0
        %v878 = vsel %vm876, %v481, 0.0
        %v879 = vsel %vm876, %v482, 0.0
        %v880 = vsel %vm876, %v483, 0.0
        %881 = vadd.xlane.f32.xlu0 %v877
        %v882 = vpop.xlane.xlu0 %881
        %883 = vadd.xlane.f32.xlu0 %v878
        %v884 = vpop.xlane.xlu0 %883
        %885 = vadd.xlane.f32.xlu0 %v879
        %v886 = vpop.xlane.xlu0 %885
        %887 = vadd.xlane.f32.xlu0 %v880
        %v888 = vpop.xlane.xlu0 %887
        %s889 = sld [smem:[#allocation4 + $0x6]]
        %s890 = sld [smem:[#allocation5 + $0x6]]
        %v892 = vsel %vm376, %v702, 0
        %894 = vmatprep.subr.mxu0 0.0
        %895 = vmatpush1.msra.mxu0 %v892
        %896 = vmatprep.subr.mxu0 0.0
        %897 = vmatpush1.msra.mxu0 0.0
        %898 = vmatprep.subr.mxu0 0.0
        %899 = vmatpush1.msra.mxu0 0.0
        %900 = vmatprep.subr.mxu0 0.0
        %901 = vmatpush1.msra.mxu0 0.0
        %902 = vmatprep.subr.mxu0 0.0
        %903 = vmatpush1.msra.mxu0 0.0
        %904 = vmatprep.subr.mxu0 0.0
        %905 = vmatpush1.msra.mxu0 0.0
        %906 = vmatprep.subr.mxu0 0.0
        %907 = vmatpush1.msra.mxu0 0.0
        %908 = vmatprep.subr.mxu0 0.0
        %909 = vmatpush1.msra.mxu0 0.0
        %910 = vmatprep.subr.mxu0 0.0
        %911 = vmatpush1.msra.mxu0 0.0
        %912 = vmatprep.subr.mxu0 0.0
        %913 = vmatpush1.msra.mxu0 0.0
        %914 = vmatprep.subr.mxu0 0.0
        %915 = vmatpush1.msra.mxu0 0.0
        %916 = vmatprep.subr.mxu0 0.0
        %917 = vmatpush1.msra.mxu0 0.0
        %918 = vmatprep.subr.mxu0 0.0
        %919 = vmatpush1.msra.mxu0 0.0
        %920 = vmatprep.subr.mxu0 0.0
        %921 = vmatpush1.msra.mxu0 0.0
        %922 = vmatprep.subr.mxu0 0.0
        %923 = vmatpush1.msra.mxu0 0.0
        %924 = vmatprep.subr.mxu0 0.0
        %925 = vmatpush1.msra.mxu0 0.0
        %926 = vmatprep.subr.mxu0 0.0
        %927 = vmatpush1.msra.mxu0 0.0
        %928 = vmatprep.subr.mxu0 0.0
        %929 = vmatpush1.msra.mxu0 0.0
        %930 = vmatprep.subr.mxu0 0.0
        %931 = vmatpush1.msra.mxu0 0.0
        %932 = vmatprep.subr.mxu0 0.0
        %933 = vmatpush1.msra.mxu0 0.0
        %934 = vmatprep.subr.mxu0 0.0
        %935 = vmatpush1.msra.mxu0 0.0
        %936 = vmatprep.subr.mxu0 0.0
        %937 = vmatpush1.msra.mxu0 0.0
        %938 = vmatprep.subr.mxu0 0.0
        %939 = vmatpush1.msra.mxu0 0.0
        %940 = vmatprep.subr.mxu0 0.0
        %941 = vmatpush1.msra.mxu0 0.0
        %942 = vmatprep.subr.mxu0 0.0
        %943 = vmatpush1.msra.mxu0 0.0
        %944 = vmatprep.subr.mxu0 0.0
        %945 = vmatpush1.msra.mxu0 0.0
        %946 = vmatprep.subr.mxu0 0.0
        %947 = vmatpush1.msra.mxu0 0.0
        %948 = vmatprep.subr.mxu0 0.0
        %949 = vmatpush1.msra.mxu0 0.0
        %950 = vmatprep.subr.mxu0 0.0
        %951 = vmatpush1.msra.mxu0 0.0
        %952 = vmatprep.subr.mxu0 0.0
        %953 = vmatpush1.msra.mxu0 0.0
        %954 = vmatprep.subr.mxu0 0.0
        %955 = vmatpush1.msra.mxu0 0.0
        %956 = vmatprep.subr.mxu0 0.0
        %957 = vmatpush1.msra.mxu0 0.0
        %958 = vmatprep.mubr.f32.mxu0 0.0
        %959 = vmatmul.mubr.f32.gmra.mrb[0].mxu0 %v512
        %v960 = vpop.f32.mrb[0].mxu0
        %v961 = vadd.f32 %v507, %v960
        %v962 = vpop.f32.mrb[0].mxu0
        %963 = vmatprep.mubr.f32.mxu0 0.0
        %964 = vmatmul.mubr.f32.gmra.mrb[0].mxu0 %v515
        %v965 = vpop.f32.mrb[0].mxu0
        %v966 = vadd.f32 %v508, %v965
        %v967 = vpop.f32.mrb[0].mxu0
        %968 = vmatprep.mubr.f32.mxu0 0.0
        %969 = vmatmul.mubr.f32.gmra.mrb[0].mxu0 %v518
        %v970 = vpop.f32.mrb[0].mxu0
        %v971 = vadd.f32 %v509, %v970
        %v972 = vpop.f32.mrb[0].mxu0
        %973 = vmatprep.mubr.f32.mxu0 0.0
        %974 = vmatmul.mubr.f32.gmra.mrb[0].mxu0 %v521
        %v975 = vpop.f32.mrb[0].mxu0
        %v976 = vadd.f32 %v510, %v975
        %v977 = vpop.f32.mrb[0].mxu0
        %978 = vdwg.mxu0
        %v979 = vadd.f32 %v961, %v882
        %v980 = vadd.f32 %v966, %v884
        %v981 = vadd.f32 %v971, %v886
        %v982 = vadd.f32 %v976, %v888
        %v983 = vmax.f32 %v979, 0.0
        %v984 = vmax.f32 %v980, 0.0
        %v985 = vmax.f32 %v981, 0.0
        %v986 = vmax.f32 %v982, 0.0
        %987 = vmatprep.subr.mxu0 0.0
        %988 = vmatpush1.msra.mxu0 %v983
        %989 = vmatprep.subr.mxu0 0.0
        %990 = vmatpush1.msra.mxu0 %v984
        %991 = vmatprep.subr.mxu0 0.0
        %992 = vmatpush1.msra.mxu0 %v985
        %993 = vmatprep.subr.mxu0 0.0
        %994 = vmatpush1.msra.mxu0 %v986
        %995 = vmatprep.subr.mxu0 0.0
        %996 = vmatpush1.msra.mxu0 0.0
        %997 = vmatprep.subr.mxu0 0.0
        %998 = vmatpush1.msra.mxu0 0.0
        %999 = vmatprep.subr.mxu0 0.0
        %1000 = vmatpush1.msra.mxu0 0.0
        %1001 = vmatprep.subr.mxu0 0.0
        %1002 = vmatpush1.msra.mxu0 0.0
        %1003 = vmatprep.subr.mxu0 0.0
        %1004 = vmatpush1.msra.mxu0 0.0
        %1005 = vmatprep.subr.mxu0 0.0
        %1006 = vmatpush1.msra.mxu0 0.0
        %1007 = vmatprep.subr.mxu0 0.0
        %1008 = vmatpush1.msra.mxu0 0.0
        %1009 = vmatprep.subr.mxu0 0.0
        %1010 = vmatpush1.msra.mxu0 0.0
        %1011 = vmatprep.subr.mxu0 0.0
        %1012 = vmatpush1.msra.mxu0 0.0
        %1013 = vmatprep.subr.mxu0 0.0
        %1014 = vmatpush1.msra.mxu0 0.0
        %1015 = vmatprep.subr.mxu0 0.0
        %1016 = vmatpush1.msra.mxu0 0.0
        %1017 = vmatprep.subr.mxu0 0.0
        %1018 = vmatpush1.msra.mxu0 0.0
        %1019 = vmatprep.subr.mxu0 0.0
        %1020 = vmatpush1.msra.mxu0 0.0
        %1021 = vmatprep.subr.mxu0 0.0
        %1022 = vmatpush1.msra.mxu0 0.0
        %1023 = vmatprep.subr.mxu0 0.0
        %1024 = vmatpush1.msra.mxu0 0.0
        %1025 = vmatprep.subr.mxu0 0.0
        %1026 = vmatpush1.msra.mxu0 0.0
        %1027 = vmatprep.subr.mxu0 0.0
        %1028 = vmatpush1.msra.mxu0 0.0
        %1029 = vmatprep.subr.mxu0 0.0
        %1030 = vmatpush1.msra.mxu0 0.0
        %1031 = vmatprep.subr.mxu0 0.0
        %1032 = vmatpush1.msra.mxu0 0.0
        %1033 = vmatprep.subr.mxu0 0.0
        %1034 = vmatpush1.msra.mxu0 0.0
        %1035 = vmatprep.subr.mxu0 0.0
        %1036 = vmatpush1.msra.mxu0 0.0
        %1037 = vmatprep.subr.mxu0 0.0
        %1038 = vmatpush1.msra.mxu0 0.0
        %1039 = vmatprep.subr.mxu0 0.0
        %1040 = vmatpush1.msra.mxu0 0.0
        %1041 = vmatprep.subr.mxu0 0.0
        %1042 = vmatpush1.msra.mxu0 0.0
        %1043 = vmatprep.subr.mxu0 0.0
        %1044 = vmatpush1.msra.mxu0 0.0
        %1045 = vmatprep.subr.mxu0 0.0
        %1046 = vmatpush1.msra.mxu0 0.0
        %1047 = vmatprep.subr.mxu0 0.0
        %1048 = vmatpush1.msra.mxu0 0.0
        %1049 = vmatprep.subr.mxu0 0.0
        %1050 = vmatpush1.msra.mxu0 0.0
        %1051 = vmatprep.mubr.f32.mxu0 0.0
        %1052 = vmatmul.mubr.f32.gmra.mrb[0].mxu0 %v626
        %v1053 = vpop.f32.mrb[0].mxu0
        %v1054 = vadd.f32 %v622, %v1053
        %v1055 = vpop.f32.mrb[0].mxu0
        %1056 = vdwg.mxu0
        %v1057 = vstv %s889
        %v1058 = vmul.f32 %v1057, %v702
        %v1059 = vstv %s890
        %v1060 = vmul.f32 %v1059, %v1054
        %v1061 = vsub.f32 %v1058, %v1060
        %v1063 = vsel %vm376, %v875, 0
        %1065 = vmatprep.subr.mxu0 0.0
        %1066 = vmatpush1.msra.mxu0 %v1063
        %1067 = vmatprep.subr.mxu0 0.0
        %1068 = vmatpush1.msra.mxu0 0.0
        %1069 = vmatprep.subr.mxu0 0.0
        %1070 = vmatpush1.msra.mxu0 0.0
        %1071 = vmatprep.subr.mxu0 0.0
        %1072 = vmatpush1.msra.mxu0 0.0
        %1073 = vmatprep.subr.mxu0 0.0
        %1074 = vmatpush1.msra.mxu0 0.0
        %1075 = vmatprep.subr.mxu0 0.0
        %1076 = vmatpush1.msra.mxu0 0.0
        %1077 = vmatprep.subr.mxu0 0.0
        %1078 = vmatpush1.msra.mxu0 0.0
        %1079 = vmatprep.subr.mxu0 0.0
        %1080 = vmatpush1.msra.mxu0 0.0
        %1081 = vmatprep.subr.mxu0 0.0
        %1082 = vmatpush1.msra.mxu0 0.0
        %1083 = vmatprep.subr.mxu0 0.0
        %1084 = vmatpush1.msra.mxu0 0.0
        %1085 = vmatprep.subr.mxu0 0.0
        %1086 = vmatpush1.msra.mxu0 0.0
        %1087 = vmatprep.subr.mxu0 0.0
        %1088 = vmatpush1.msra.mxu0 0.0
        %1089 = vmatprep.subr.mxu0 0.0
        %1090 = vmatpush1.msra.mxu0 0.0
        %1091 = vmatprep.subr.mxu0 0.0
        %1092 = vmatpush1.msra.mxu0 0.0
        %1093 = vmatprep.subr.mxu0 0.0
        %1094 = vmatpush1.msra.mxu0 0.0
        %1095 = vmatprep.subr.mxu0 0.0
        %1096 = vmatpush1.msra.mxu0 0.0
        %1097 = vmatprep.subr.mxu0 0.0
        %1098 = vmatpush1.msra.mxu0 0.0
        %1099 = vmatprep.subr.mxu0 0.0
        %1100 = vmatpush1.msra.mxu0 0.0
        %1101 = vmatprep.subr.mxu0 0.0
        %1102 = vmatpush1.msra.mxu0 0.0
        %1103 = vmatprep.subr.mxu0 0.0
        %1104 = vmatpush1.msra.mxu0 0.0
        %1105 = vmatprep.subr.mxu0 0.0
        %1106 = vmatpush1.msra.mxu0 0.0
        %1107 = vmatprep.subr.mxu0 0.0
        %1108 = vmatpush1.msra.mxu0 0.0
        %1109 = vmatprep.subr.mxu0 0.0
        %1110 = vmatpush1.msra.mxu0 0.0
        %1111 = vmatprep.subr.mxu0 0.0
        %1112 = vmatpush1.msra.mxu0 0.0
        %1113 = vmatprep.subr.mxu0 0.0
        %1114 = vmatpush1.msra.mxu0 0.0
        %1115 = vmatprep.subr.mxu0 0.0
        %1116 = vmatpush1.msra.mxu0 0.0
        %1117 = vmatprep.subr.mxu0 0.0
        %1118 = vmatpush1.msra.mxu0 0.0
        %1119 = vmatprep.subr.mxu0 0.0
        %1120 = vmatpush1.msra.mxu0 0.0
        %1121 = vmatprep.subr.mxu0 0.0
        %1122 = vmatpush1.msra.mxu0 0.0
        %1123 = vmatprep.subr.mxu0 0.0
        %1124 = vmatpush1.msra.mxu0 0.0
        %1125 = vmatprep.subr.mxu0 0.0
        %1126 = vmatpush1.msra.mxu0 0.0
        %1127 = vmatprep.subr.mxu0 0.0
        %1128 = vmatpush1.msra.mxu0 0.0
        %1129 = vmatprep.mubr.f32.mxu0 0.0
        %1130 = vmatmul.mubr.f32.gmra.mrb[0].mxu0 %v512
        %v1131 = vpop.f32.mrb[0].mxu0
        %v1132 = vadd.f32 %v703, %v1131
        %v1133 = vpop.f32.mrb[0].mxu0
        %1134 = vmatprep.mubr.f32.mxu0 0.0
        %1135 = vmatmul.mubr.f32.gmra.mrb[0].mxu0 %v515
        %v1136 = vpop.f32.mrb[0].mxu0
        %v1137 = vadd.f32 %v704, %v1136
        %v1138 = vpop.f32.mrb[0].mxu0
        %1139 = vmatprep.mubr.f32.mxu0 0.0
        %1140 = vmatmul.mubr.f32.gmra.mrb[0].mxu0 %v518
        %v1141 = vpop.f32.mrb[0].mxu0
        %v1142 = vadd.f32 %v705, %v1141
        %v1143 = vpop.f32.mrb[0].mxu0
        %1144 = vmatprep.mubr.f32.mxu0 0.0
        %1145 = vmatmul.mubr.f32.gmra.mrb[0].mxu0 %v521
        %v1146 = vpop.f32.mrb[0].mxu0
        %v1147 = vadd.f32 %v706, %v1146
        %v1148 = vpop.f32.mrb[0].mxu0
        %1149 = vdwg.mxu0
        %v1150 = vadd.f32 %v1132, %v882
        %v1151 = vadd.f32 %v1137, %v884
        %v1152 = vadd.f32 %v1142, %v886
        %v1153 = vadd.f32 %v1147, %v888
        %v1154 = vmax.f32 %v1150, 0.0
        %v1155 = vmax.f32 %v1151, 0.0
        %v1156 = vmax.f32 %v1152, 0.0
        %v1157 = vmax.f32 %v1153, 0.0
        %1158 = vmatprep.subr.mxu0 0.0
        %1159 = vmatpush1.msra.mxu0 %v1154
        %1160 = vmatprep.subr.mxu0 0.0
        %1161 = vmatpush1.msra.mxu0 %v1155
        %1162 = vmatprep.subr.mxu0 0.0
        %1163 = vmatpush1.msra.mxu0 %v1156
        %1164 = vmatprep.subr.mxu0 0.0
        %1165 = vmatpush1.msra.mxu0 %v1157
        %1166 = vmatprep.subr.mxu0 0.0
        %1167 = vmatpush1.msra.mxu0 0.0
        %1168 = vmatprep.subr.mxu0 0.0
        %1169 = vmatpush1.msra.mxu0 0.0
        %1170 = vmatprep.subr.mxu0 0.0
        %1171 = vmatpush1.msra.mxu0 0.0
        %1172 = vmatprep.subr.mxu0 0.0
        %1173 = vmatpush1.msra.mxu0 0.0
        %1174 = vmatprep.subr.mxu0 0.0
        %1175 = vmatpush1.msra.mxu0 0.0
        %1176 = vmatprep.subr.mxu0 0.0
        %1177 = vmatpush1.msra.mxu0 0.0
        %1178 = vmatprep.subr.mxu0 0.0
        %1179 = vmatpush1.msra.mxu0 0.0
        %1180 = vmatprep.subr.mxu0 0.0
        %1181 = vmatpush1.msra.mxu0 0.0
        %1182 = vmatprep.subr.mxu0 0.0
        %1183 = vmatpush1.msra.mxu0 0.0
        %1184 = vmatprep.subr.mxu0 0.0
        %1185 = vmatpush1.msra.mxu0 0.0
        %1186 = vmatprep.subr.mxu0 0.0
        %1187 = vmatpush1.msra.mxu0 0.0
        %1188 = vmatprep.subr.mxu0 0.0
        %1189 = vmatpush1.msra.mxu0 0.0
        %1190 = vmatprep.subr.mxu0 0.0
        %1191 = vmatpush1.msra.mxu0 0.0
        %1192 = vmatprep.subr.mxu0 0.0
        %1193 = vmatpush1.msra.mxu0 0.0
        %1194 = vmatprep.subr.mxu0 0.0
        %1195 = vmatpush1.msra.mxu0 0.0
        %1196 = vmatprep.subr.mxu0 0.0
        %1197 = vmatpush1.msra.mxu0 0.0
        %1198 = vmatprep.subr.mxu0 0.0
        %1199 = vmatpush1.msra.mxu0 0.0
        %1200 = vmatprep.subr.mxu0 0.0
        %1201 = vmatpush1.msra.mxu0 0.0
        %1202 = vmatprep.subr.mxu0 0.0
        %1203 = vmatpush1.msra.mxu0 0.0
        %1204 = vmatprep.subr.mxu0 0.0
        %1205 = vmatpush1.msra.mxu0 0.0
        %1206 = vmatprep.subr.mxu0 0.0
        %1207 = vmatpush1.msra.mxu0 0.0
        %1208 = vmatprep.subr.mxu0 0.0
        %1209 = vmatpush1.msra.mxu0 0.0
        %1210 = vmatprep.subr.mxu0 0.0
        %1211 = vmatpush1.msra.mxu0 0.0
        %1212 = vmatprep.subr.mxu0 0.0
        %1213 = vmatpush1.msra.mxu0 0.0
        %1214 = vmatprep.subr.mxu0 0.0
        %1215 = vmatpush1.msra.mxu0 0.0
        %1216 = vmatprep.subr.mxu0 0.0
        %1217 = vmatpush1.msra.mxu0 0.0
        %1218 = vmatprep.subr.mxu0 0.0
        %1219 = vmatpush1.msra.mxu0 0.0
        %1220 = vmatprep.subr.mxu0 0.0
        %1221 = vmatpush1.msra.mxu0 0.0
        %1222 = vmatprep.mubr.f32.mxu0 0.0
        %1223 = vmatmul.mubr.f32.gmra.mrb[0].mxu0 %v626
        %v1224 = vpop.f32.mrb[0].mxu0
        %v1225 = vadd.f32 %v622, %v1224
        %v1226 = vpop.f32.mrb[0].mxu0
        %1227 = vdwg.mxu0
        %v1228 = vmul.f32 %v1057, %v875
        %v1229 = vmul.f32 %v1059, %v1225
        %v1230 = vsub.f32 %v1228, %v1229
        %vm1231 = vcmp.eq.s32.totalorder %v485, 5
        %v1232 = vsel %vm1231, %v480, 0.0
        %v1233 = vsel %vm1231, %v481, 0.0
        %v1234 = vsel %vm1231, %v482, 0.0
        %v1235 = vsel %vm1231, %v483, 0.0
        %1236 = vadd.xlane.f32.xlu0 %v1232
        %v1237 = vpop.xlane.xlu0 %1236
        %1238 = vadd.xlane.f32.xlu0 %v1233
        %v1239 = vpop.xlane.xlu0 %1238
        %1240 = vadd.xlane.f32.xlu0 %v1234
        %v1241 = vpop.xlane.xlu0 %1240
        %1242 = vadd.xlane.f32.xlu0 %v1235
        %v1243 = vpop.xlane.xlu0 %1242
        %s1244 = sld [smem:[#allocation4 + $0x5]]
        %s1245 = sld [smem:[#allocation5 + $0x5]]
        %v1247 = vsel %vm376, %v1061, 0
        %1249 = vmatprep.subr.mxu0 0.0
        %1250 = vmatpush1.msra.mxu0 %v1247
        %1251 = vmatprep.subr.mxu0 0.0
        %1252 = vmatpush1.msra.mxu0 0.0
        %1253 = vmatprep.subr.mxu0 0.0
        %1254 = vmatpush1.msra.mxu0 0.0
        %1255 = vmatprep.subr.mxu0 0.0
        %1256 = vmatpush1.msra.mxu0 0.0
        %1257 = vmatprep.subr.mxu0 0.0
        %1258 = vmatpush1.msra.mxu0 0.0
        %1259 = vmatprep.subr.mxu0 0.0
        %1260 = vmatpush1.msra.mxu0 0.0
        %1261 = vmatprep.subr.mxu0 0.0
        %1262 = vmatpush1.msra.mxu0 0.0
        %1263 = vmatprep.subr.mxu0 0.0
        %1264 = vmatpush1.msra.mxu0 0.0
        %1265 = vmatprep.subr.mxu0 0.0
        %1266 = vmatpush1.msra.mxu0 0.0
        %1267 = vmatprep.subr.mxu0 0.0
        %1268 = vmatpush1.msra.mxu0 0.0
        %1269 = vmatprep.subr.mxu0 0.0
        %1270 = vmatpush1.msra.mxu0 0.0
        %1271 = vmatprep.subr.mxu0 0.0
        %1272 = vmatpush1.msra.mxu0 0.0
        %1273 = vmatprep.subr.mxu0 0.0
        %1274 = vmatpush1.msra.mxu0 0.0
        %1275 = vmatprep.subr.mxu0 0.0
        %1276 = vmatpush1.msra.mxu0 0.0
        %1277 = vmatprep.subr.mxu0 0.0
        %1278 = vmatpush1.msra.mxu0 0.0
        %1279 = vmatprep.subr.mxu0 0.0
        %1280 = vmatpush1.msra.mxu0 0.0
        %1281 = vmatprep.subr.mxu0 0.0
        %1282 = vmatpush1.msra.mxu0 0.0
        %1283 = vmatprep.subr.mxu0 0.0
        %1284 = vmatpush1.msra.mxu0 0.0
        %1285 = vmatprep.subr.mxu0 0.0
        %1286 = vmatpush1.msra.mxu0 0.0
        %1287 = vmatprep.subr.mxu0 0.0
        %1288 = vmatpush1.msra.mxu0 0.0
        %1289 = vmatprep.subr.mxu0 0.0
        %1290 = vmatpush1.msra.mxu0 0.0
        %1291 = vmatprep.subr.mxu0 0.0
        %1292 = vmatpush1.msra.mxu0 0.0
        %1293 = vmatprep.subr.mxu0 0.0
        %1294 = vmatpush1.msra.mxu0 0.0
        %1295 = vmatprep.subr.mxu0 0.0
        %1296 = vmatpush1.msra.mxu0 0.0
        %1297 = vmatprep.subr.mxu0 0.0
        %1298 = vmatpush1.msra.mxu0 0.0
        %1299 = vmatprep.subr.mxu0 0.0
        %1300 = vmatpush1.msra.mxu0 0.0
        %1301 = vmatprep.subr.mxu0 0.0
        %1302 = vmatpush1.msra.mxu0 0.0
        %1303 = vmatprep.subr.mxu0 0.0
        %1304 = vmatpush1.msra.mxu0 0.0
        %1305 = vmatprep.subr.mxu0 0.0
        %1306 = vmatpush1.msra.mxu0 0.0
        %1307 = vmatprep.subr.mxu0 0.0
        %1308 = vmatpush1.msra.mxu0 0.0
        %1309 = vmatprep.subr.mxu0 0.0
        %1310 = vmatpush1.msra.mxu0 0.0
        %1311 = vmatprep.subr.mxu0 0.0
        %1312 = vmatpush1.msra.mxu0 0.0
        %1313 = vmatprep.mubr.f32.mxu0 0.0
        %1314 = vmatmul.mubr.f32.gmra.mrb[0].mxu0 %v512
        %v1315 = vpop.f32.mrb[0].mxu0
        %v1316 = vadd.f32 %v507, %v1315
        %v1317 = vpop.f32.mrb[0].mxu0
        %1318 = vmatprep.mubr.f32.mxu0 0.0
        %1319 = vmatmul.mubr.f32.gmra.mrb[0].mxu0 %v515
        %v1320 = vpop.f32.mrb[0].mxu0
        %v1321 = vadd.f32 %v508, %v1320
        %v1322 = vpop.f32.mrb[0].mxu0
        %1323 = vmatprep.mubr.f32.mxu0 0.0
        %1324 = vmatmul.mubr.f32.gmra.mrb[0].mxu0 %v518
        %v1325 = vpop.f32.mrb[0].mxu0
        %v1326 = vadd.f32 %v509, %v1325
        %v1327 = vpop.f32.mrb[0].mxu0
        %1328 = vmatprep.mubr.f32.mxu0 0.0
        %1329 = vmatmul.mubr.f32.gmra.mrb[0].mxu0 %v521
        %v1330 = vpop.f32.mrb[0].mxu0
        %v1331 = vadd.f32 %v510, %v1330
        %v1332 = vpop.f32.mrb[0].mxu0
        %1333 = vdwg.mxu0
        %v1334 = vadd.f32 %v1316, %v1237
        %v1335 = vadd.f32 %v1321, %v1239
        %v1336 = vadd.f32 %v1326, %v1241
        %v1337 = vadd.f32 %v1331, %v1243
        %v1338 = vmax.f32 %v1334, 0.0
        %v1339 = vmax.f32 %v1335, 0.0
        %v1340 = vmax.f32 %v1336, 0.0
        %v1341 = vmax.f32 %v1337, 0.0
        %1342 = vmatprep.subr.mxu0 0.0
        %1343 = vmatpush1.msra.mxu0 %v1338
        %1344 = vmatprep.subr.mxu0 0.0
        %1345 = vmatpush1.msra.mxu0 %v1339
        %1346 = vmatprep.subr.mxu0 0.0
        %1347 = vmatpush1.msra.mxu0 %v1340
        %1348 = vmatprep.subr.mxu0 0.0
        %1349 = vmatpush1.msra.mxu0 %v1341
        %1350 = vmatprep.subr.mxu0 0.0
        %1351 = vmatpush1.msra.mxu0 0.0
        %1352 = vmatprep.subr.mxu0 0.0
        %1353 = vmatpush1.msra.mxu0 0.0
        %1354 = vmatprep.subr.mxu0 0.0
        %1355 = vmatpush1.msra.mxu0 0.0
        %1356 = vmatprep.subr.mxu0 0.0
        %1357 = vmatpush1.msra.mxu0 0.0
        %1358 = vmatprep.subr.mxu0 0.0
        %1359 = vmatpush1.msra.mxu0 0.0
        %1360 = vmatprep.subr.mxu0 0.0
        %1361 = vmatpush1.msra.mxu0 0.0
        %1362 = vmatprep.subr.mxu0 0.0
        %1363 = vmatpush1.msra.mxu0 0.0
        %1364 = vmatprep.subr.mxu0 0.0
        %1365 = vmatpush1.msra.mxu0 0.0
        %1366 = vmatprep.subr.mxu0 0.0
        %1367 = vmatpush1.msra.mxu0 0.0
        %1368 = vmatprep.subr.mxu0 0.0
        %1369 = vmatpush1.msra.mxu0 0.0
        %1370 = vmatprep.subr.mxu0 0.0
        %1371 = vmatpush1.msra.mxu0 0.0
        %1372 = vmatprep.subr.mxu0 0.0
        %1373 = vmatpush1.msra.mxu0 0.0
        %1374 = vmatprep.subr.mxu0 0.0
        %1375 = vmatpush1.msra.mxu0 0.0
        %1376 = vmatprep.subr.mxu0 0.0
        %1377 = vmatpush1.msra.mxu0 0.0
        %1378 = vmatprep.subr.mxu0 0.0
        %1379 = vmatpush1.msra.mxu0 0.0
        %1380 = vmatprep.subr.mxu0 0.0
        %1381 = vmatpush1.msra.mxu0 0.0
        %1382 = vmatprep.subr.mxu0 0.0
        %1383 = vmatpush1.msra.mxu0 0.0
        %1384 = vmatprep.subr.mxu0 0.0
        %1385 = vmatpush1.msra.mxu0 0.0
        %1386 = vmatprep.subr.mxu0 0.0
        %1387 = vmatpush1.msra.mxu0 0.0
        %1388 = vmatprep.subr.mxu0 0.0
        %1389 = vmatpush1.msra.mxu0 0.0
        %1390 = vmatprep.subr.mxu0 0.0
        %1391 = vmatpush1.msra.mxu0 0.0
        %1392 = vmatprep.subr.mxu0 0.0
        %1393 = vmatpush1.msra.mxu0 0.0
        %1394 = vmatprep.subr.mxu0 0.0
        %1395 = vmatpush1.msra.mxu0 0.0
        %1396 = vmatprep.subr.mxu0 0.0
        %1397 = vmatpush1.msra.mxu0 0.0
        %1398 = vmatprep.subr.mxu0 0.0
        %1399 = vmatpush1.msra.mxu0 0.0
        %1400 = vmatprep.subr.mxu0 0.0
        %1401 = vmatpush1.msra.mxu0 0.0
        %1402 = vmatprep.subr.mxu0 0.0
        %1403 = vmatpush1.msra.mxu0 0.0
        %1404 = vmatprep.subr.mxu0 0.0
        %1405 = vmatpush1.msra.mxu0 0.0
        %1406 = vmatprep.mubr.f32.mxu0 0.0
        %1407 = vmatmul.mubr.f32.gmra.mrb[0].mxu0 %v626
        %v1408 = vpop.f32.mrb[0].mxu0
        %v1409 = vadd.f32 %v622, %v1408
        %v1410 = vpop.f32.mrb[0].mxu0
        %1411 = vdwg.mxu0
        %v1412 = vstv %s1244
        %v1413 = vmul.f32 %v1412, %v1061
        %v1414 = vstv %s1245
        %v1415 = vmul.f32 %v1414, %v1409
        %v1416 = vsub.f32 %v1413, %v1415
        %v1418 = vsel %vm376, %v1230, 0
        %1420 = vmatprep.subr.mxu0 0.0
        %1421 = vmatpush1.msra.mxu0 %v1418
        %1422 = vmatprep.subr.mxu0 0.0
        %1423 = vmatpush1.msra.mxu0 0.0
        %1424 = vmatprep.subr.mxu0 0.0
        %1425 = vmatpush1.msra.mxu0 0.0
        %1426 = vmatprep.subr.mxu0 0.0
        %1427 = vmatpush1.msra.mxu0 0.0
        %1428 = vmatprep.subr.mxu0 0.0
        %1429 = vmatpush1.msra.mxu0 0.0
        %1430 = vmatprep.subr.mxu0 0.0
        %1431 = vmatpush1.msra.mxu0 0.0
        %1432 = vmatprep.subr.mxu0 0.0
        %1433 = vmatpush1.msra.mxu0 0.0
        %1434 = vmatprep.subr.mxu0 0.0
        %1435 = vmatpush1.msra.mxu0 0.0
        %1436 = vmatprep.subr.mxu0 0.0
        %1437 = vmatpush1.msra.mxu0 0.0
        %1438 = vmatprep.subr.mxu0 0.0
        %1439 = vmatpush1.msra.mxu0 0.0
        %1440 = vmatprep.subr.mxu0 0.0
        %1441 = vmatpush1.msra.mxu0 0.0
        %1442 = vmatprep.subr.mxu0 0.0
        %1443 = vmatpush1.msra.mxu0 0.0
        %1444 = vmatprep.subr.mxu0 0.0
        %1445 = vmatpush1.msra.mxu0 0.0
        %1446 = vmatprep.subr.mxu0 0.0
        %1447 = vmatpush1.msra.mxu0 0.0
        %1448 = vmatprep.subr.mxu0 0.0
        %1449 = vmatpush1.msra.mxu0 0.0
        %1450 = vmatprep.subr.mxu0 0.0
        %1451 = vmatpush1.msra.mxu0 0.0
        %1452 = vmatprep.subr.mxu0 0.0
        %1453 = vmatpush1.msra.mxu0 0.0
        %1454 = vmatprep.subr.mxu0 0.0
        %1455 = vmatpush1.msra.mxu0 0.0
        %1456 = vmatprep.subr.mxu0 0.0
        %1457 = vmatpush1.msra.mxu0 0.0
        %1458 = vmatprep.subr.mxu0 0.0
        %1459 = vmatpush1.msra.mxu0 0.0
        %1460 = vmatprep.subr.mxu0 0.0
        %1461 = vmatpush1.msra.mxu0 0.0
        %1462 = vmatprep.subr.mxu0 0.0
        %1463 = vmatpush1.msra.mxu0 0.0
        %1464 = vmatprep.subr.mxu0 0.0
        %1465 = vmatpush1.msra.mxu0 0.0
        %1466 = vmatprep.subr.mxu0 0.0
        %1467 = vmatpush1.msra.mxu0 0.0
        %1468 = vmatprep.subr.mxu0 0.0
        %1469 = vmatpush1.msra.mxu0 0.0
        %1470 = vmatprep.subr.mxu0 0.0
        %1471 = vmatpush1.msra.mxu0 0.0
        %1472 = vmatprep.subr.mxu0 0.0
        %1473 = vmatpush1.msra.mxu0 0.0
        %1474 = vmatprep.subr.mxu0 0.0
        %1475 = vmatpush1.msra.mxu0 0.0
        %1476 = vmatprep.subr.mxu0 0.0
        %1477 = vmatpush1.msra.mxu0 0.0
        %1478 = vmatprep.subr.mxu0 0.0
        %1479 = vmatpush1.msra.mxu0 0.0
        %1480 = vmatprep.subr.mxu0 0.0
        %1481 = vmatpush1.msra.mxu0 0.0
        %1482 = vmatprep.subr.mxu0 0.0
        %1483 = vmatpush1.msra.mxu0 0.0
        %1484 = vmatprep.mubr.f32.mxu0 0.0
        %1485 = vmatmul.mubr.f32.gmra.mrb[0].mxu0 %v512
        %v1486 = vpop.f32.mrb[0].mxu0
        %v1487 = vadd.f32 %v703, %v1486
        %v1488 = vpop.f32.mrb[0].mxu0
        %1489 = vmatprep.mubr.f32.mxu0 0.0
        %1490 = vmatmul.mubr.f32.gmra.mrb[0].mxu0 %v515
        %v1491 = vpop.f32.mrb[0].mxu0
        %v1492 = vadd.f32 %v704, %v1491
        %v1493 = vpop.f32.mrb[0].mxu0
        %1494 = vmatprep.mubr.f32.mxu0 0.0
        %1495 = vmatmul.mubr.f32.gmra.mrb[0].mxu0 %v518
        %v1496 = vpop.f32.mrb[0].mxu0
        %v1497 = vadd.f32 %v705, %v1496
        %v1498 = vpop.f32.mrb[0].mxu0
        %1499 = vmatprep.mubr.f32.mxu0 0.0
        %1500 = vmatmul.mubr.f32.gmra.mrb[0].mxu0 %v521
        %v1501 = vpop.f32.mrb[0].mxu0
        %v1502 = vadd.f32 %v706, %v1501
        %v1503 = vpop.f32.mrb[0].mxu0
        %1504 = vdwg.mxu0
        %v1505 = vadd.f32 %v1487, %v1237
        %v1506 = vadd.f32 %v1492, %v1239
        %v1507 = vadd.f32 %v1497, %v1241
        %v1508 = vadd.f32 %v1502, %v1243
        %v1509 = vmax.f32 %v1505, 0.0
        %v1510 = vmax.f32 %v1506, 0.0
        %v1511 = vmax.f32 %v1507, 0.0
        %v1512 = vmax.f32 %v1508, 0.0
        %1513 = vmatprep.subr.mxu0 0.0
        %1514 = vmatpush1.msra.mxu0 %v1509
        %1515 = vmatprep.subr.mxu0 0.0
        %1516 = vmatpush1.msra.mxu0 %v1510
        %1517 = vmatprep.subr.mxu0 0.0
        %1518 = vmatpush1.msra.mxu0 %v1511
        %1519 = vmatprep.subr.mxu0 0.0
        %1520 = vmatpush1.msra.mxu0 %v1512
        %1521 = vmatprep.subr.mxu0 0.0
        %1522 = vmatpush1.msra.mxu0 0.0
        %1523 = vmatprep.subr.mxu0 0.0
        %1524 = vmatpush1.msra.mxu0 0.0
        %1525 = vmatprep.subr.mxu0 0.0
        %1526 = vmatpush1.msra.mxu0 0.0
        %1527 = vmatprep.subr.mxu0 0.0
        %1528 = vmatpush1.msra.mxu0 0.0
        %1529 = vmatprep.subr.mxu0 0.0
        %1530 = vmatpush1.msra.mxu0 0.0
        %1531 = vmatprep.subr.mxu0 0.0
        %1532 = vmatpush1.msra.mxu0 0.0
        %1533 = vmatprep.subr.mxu0 0.0
        %1534 = vmatpush1.msra.mxu0 0.0
        %1535 = vmatprep.subr.mxu0 0.0
        %1536 = vmatpush1.msra.mxu0 0.0
        %1537 = vmatprep.subr.mxu0 0.0
        %1538 = vmatpush1.msra.mxu0 0.0
        %1539 = vmatprep.subr.mxu0 0.0
        %1540 = vmatpush1.msra.mxu0 0.0
        %1541 = vmatprep.subr.mxu0 0.0
        %1542 = vmatpush1.msra.mxu0 0.0
        %1543 = vmatprep.subr.mxu0 0.0
        %1544 = vmatpush1.msra.mxu0 0.0
        %1545 = vmatprep.subr.mxu0 0.0
        %1546 = vmatpush1.msra.mxu0 0.0
        %1547 = vmatprep.subr.mxu0 0.0
        %1548 = vmatpush1.msra.mxu0 0.0
        %1549 = vmatprep.subr.mxu0 0.0
        %1550 = vmatpush1.msra.mxu0 0.0
        %1551 = vmatprep.subr.mxu0 0.0
        %1552 = vmatpush1.msra.mxu0 0.0
        %1553 = vmatprep.subr.mxu0 0.0
        %1554 = vmatpush1.msra.mxu0 0.0
        %1555 = vmatprep.subr.mxu0 0.0
        %1556 = vmatpush1.msra.mxu0 0.0
        %1557 = vmatprep.subr.mxu0 0.0
        %1558 = vmatpush1.msra.mxu0 0.0
        %1559 = vmatprep.subr.mxu0 0.0
        %1560 = vmatpush1.msra.mxu0 0.0
        %1561 = vmatprep.subr.mxu0 0.0
        %1562 = vmatpush1.msra.mxu0 0.0
        %1563 = vmatprep.subr.mxu0 0.0
        %1564 = vmatpush1.msra.mxu0 0.0
        %1565 = vmatprep.subr.mxu0 0.0
        %1566 = vmatpush1.msra.mxu0 0.0
        %1567 = vmatprep.subr.mxu0 0.0
        %1568 = vmatpush1.msra.mxu0 0.0
        %1569 = vmatprep.subr.mxu0 0.0
        %1570 = vmatpush1.msra.mxu0 0.0
        %1571 = vmatprep.subr.mxu0 0.0
        %1572 = vmatpush1.msra.mxu0 0.0
        %1573 = vmatprep.subr.mxu0 0.0
        %1574 = vmatpush1.msra.mxu0 0.0
        %1575 = vmatprep.subr.mxu0 0.0
        %1576 = vmatpush1.msra.mxu0 0.0
        %1577 = vmatprep.mubr.f32.mxu0 0.0
        %1578 = vmatmul.mubr.f32.gmra.mrb[0].mxu0 %v626
        %v1579 = vpop.f32.mrb[0].mxu0
        %v1580 = vadd.f32 %v622, %v1579
        %v1581 = vpop.f32.mrb[0].mxu0
        %1582 = vdwg.mxu0
        %v1583 = vmul.f32 %v1412, %v1230
        %v1584 = vmul.f32 %v1414, %v1580
        %v1585 = vsub.f32 %v1583, %v1584
        %vm1586 = vcmp.eq.s32.totalorder %v485, 4
        %v1587 = vsel %vm1586, %v480, 0.0
        %v1588 = vsel %vm1586, %v481, 0.0
        %v1589 = vsel %vm1586, %v482, 0.0
        %v1590 = vsel %vm1586, %v483, 0.0
        %1591 = vadd.xlane.f32.xlu0 %v1587
        %v1592 = vpop.xlane.xlu0 %1591
        %1593 = vadd.xlane.f32.xlu0 %v1588
        %v1594 = vpop.xlane.xlu0 %1593
        %1595 = vadd.xlane.f32.xlu0 %v1589
        %v1596 = vpop.xlane.xlu0 %1595
        %1597 = vadd.xlane.f32.xlu0 %v1590
        %v1598 = vpop.xlane.xlu0 %1597
        %s1599 = sld [smem:[#allocation4 + $0x4]]
        %s1600 = sld [smem:[#allocation5 + $0x4]]
        %v1602 = vsel %vm376, %v1416, 0
        %1604 = vmatprep.subr.mxu0 0.0
        %1605 = vmatpush1.msra.mxu0 %v1602
        %1606 = vmatprep.subr.mxu0 0.0
        %1607 = vmatpush1.msra.mxu0 0.0
        %1608 = vmatprep.subr.mxu0 0.0
        %1609 = vmatpush1.msra.mxu0 0.0
        %1610 = vmatprep.subr.mxu0 0.0
        %1611 = vmatpush1.msra.mxu0 0.0
        %1612 = vmatprep.subr.mxu0 0.0
        %1613 = vmatpush1.msra.mxu0 0.0
        %1614 = vmatprep.subr.mxu0 0.0
        %1615 = vmatpush1.msra.mxu0 0.0
        %1616 = vmatprep.subr.mxu0 0.0
        %1617 = vmatpush1.msra.mxu0 0.0
        %1618 = vmatprep.subr.mxu0 0.0
        %1619 = vmatpush1.msra.mxu0 0.0
        %1620 = vmatprep.subr.mxu0 0.0
        %1621 = vmatpush1.msra.mxu0 0.0
        %1622 = vmatprep.subr.mxu0 0.0
        %1623 = vmatpush1.msra.mxu0 0.0
        %1624 = vmatprep.subr.mxu0 0.0
        %1625 = vmatpush1.msra.mxu0 0.0
        %1626 = vmatprep.subr.mxu0 0.0
        %1627 = vmatpush1.msra.mxu0 0.0
        %1628 = vmatprep.subr.mxu0 0.0
        %1629 = vmatpush1.msra.mxu0 0.0
        %1630 = vmatprep.subr.mxu0 0.0
        %1631 = vmatpush1.msra.mxu0 0.0
        %1632 = vmatprep.subr.mxu0 0.0
        %1633 = vmatpush1.msra.mxu0 0.0
        %1634 = vmatprep.subr.mxu0 0.0
        %1635 = vmatpush1.msra.mxu0 0.0
        %1636 = vmatprep.subr.mxu0 0.0
        %1637 = vmatpush1.msra.mxu0 0.0
        %1638 = vmatprep.subr.mxu0 0.0
        %1639 = vmatpush1.msra.mxu0 0.0
        %1640 = vmatprep.subr.mxu0 0.0
        %1641 = vmatpush1.msra.mxu0 0.0
        %1642 = vmatprep.subr.mxu0 0.0
        %1643 = vmatpush1.msra.mxu0 0.0
        %1644 = vmatprep.subr.mxu0 0.0
        %1645 = vmatpush1.msra.mxu0 0.0
        %1646 = vmatprep.subr.mxu0 0.0
        %1647 = vmatpush1.msra.mxu0 0.0
        %1648 = vmatprep.subr.mxu0 0.0
        %1649 = vmatpush1.msra.mxu0 0.0
        %1650 = vmatprep.subr.mxu0 0.0
        %1651 = vmatpush1.msra.mxu0 0.0
        %1652 = vmatprep.subr.mxu0 0.0
        %1653 = vmatpush1.msra.mxu0 0.0
        %1654 = vmatprep.subr.mxu0 0.0
        %1655 = vmatpush1.msra.mxu0 0.0
        %1656 = vmatprep.subr.mxu0 0.0
        %1657 = vmatpush1.msra.mxu0 0.0
        %1658 = vmatprep.subr.mxu0 0.0
        %1659 = vmatpush1.msra.mxu0 0.0
        %1660 = vmatprep.subr.mxu0 0.0
        %1661 = vmatpush1.msra.mxu0 0.0
        %1662 = vmatprep.subr.mxu0 0.0
        %1663 = vmatpush1.msra.mxu0 0.0
        %1664 = vmatprep.subr.mxu0 0.0
        %1665 = vmatpush1.msra.mxu0 0.0
        %1666 = vmatprep.subr.mxu0 0.0
        %1667 = vmatpush1.msra.mxu0 0.0
        %1668 = vmatprep.mubr.f32.mxu0 0.0
        %1669 = vmatmul.mubr.f32.gmra.mrb[0].mxu0 %v512
        %v1670 = vpop.f32.mrb[0].mxu0
        %v1671 = vadd.f32 %v507, %v1670
        %v1672 = vpop.f32.mrb[0].mxu0
        %1673 = vmatprep.mubr.f32.mxu0 0.0
        %1674 = vmatmul.mubr.f32.gmra.mrb[0].mxu0 %v515
        %v1675 = vpop.f32.mrb[0].mxu0
        %v1676 = vadd.f32 %v508, %v1675
        %v1677 = vpop.f32.mrb[0].mxu0
        %1678 = vmatprep.mubr.f32.mxu0 0.0
        %1679 = vmatmul.mubr.f32.gmra.mrb[0].mxu0 %v518
        %v1680 = vpop.f32.mrb[0].mxu0
        %v1681 = vadd.f32 %v509, %v1680
        %v1682 = vpop.f32.mrb[0].mxu0
        %1683 = vmatprep.mubr.f32.mxu0 0.0
        %1684 = vmatmul.mubr.f32.gmra.mrb[0].mxu0 %v521
        %v1685 = vpop.f32.mrb[0].mxu0
        %v1686 = vadd.f32 %v510, %v1685
        %v1687 = vpop.f32.mrb[0].mxu0
        %1688 = vdwg.mxu0
        %v1689 = vadd.f32 %v1671, %v1592
        %v1690 = vadd.f32 %v1676, %v1594
        %v1691 = vadd.f32 %v1681, %v1596
        %v1692 = vadd.f32 %v1686, %v1598
        %v1693 = vmax.f32 %v1689, 0.0
        %v1694 = vmax.f32 %v1690, 0.0
        %v1695 = vmax.f32 %v1691, 0.0
        %v1696 = vmax.f32 %v1692, 0.0
        %1697 = vmatprep.subr.mxu0 0.0
        %1698 = vmatpush1.msra.mxu0 %v1693
        %1699 = vmatprep.subr.mxu0 0.0
        %1700 = vmatpush1.msra.mxu0 %v1694
        %1701 = vmatprep.subr.mxu0 0.0
        %1702 = vmatpush1.msra.mxu0 %v1695
        %1703 = vmatprep.subr.mxu0 0.0
        %1704 = vmatpush1.msra.mxu0 %v1696
        %1705 = vmatprep.subr.mxu0 0.0
        %1706 = vmatpush1.msra.mxu0 0.0
        %1707 = vmatprep.subr.mxu0 0.0
        %1708 = vmatpush1.msra.mxu0 0.0
        %1709 = vmatprep.subr.mxu0 0.0
        %1710 = vmatpush1.msra.mxu0 0.0
        %1711 = vmatprep.subr.mxu0 0.0
        %1712 = vmatpush1.msra.mxu0 0.0
        %1713 = vmatprep.subr.mxu0 0.0
        %1714 = vmatpush1.msra.mxu0 0.0
        %1715 = vmatprep.subr.mxu0 0.0
        %1716 = vmatpush1.msra.mxu0 0.0
        %1717 = vmatprep.subr.mxu0 0.0
        %1718 = vmatpush1.msra.mxu0 0.0
        %1719 = vmatprep.subr.mxu0 0.0
        %1720 = vmatpush1.msra.mxu0 0.0
        %1721 = vmatprep.subr.mxu0 0.0
        %1722 = vmatpush1.msra.mxu0 0.0
        %1723 = vmatprep.subr.mxu0 0.0
        %1724 = vmatpush1.msra.mxu0 0.0
        %1725 = vmatprep.subr.mxu0 0.0
        %1726 = vmatpush1.msra.mxu0 0.0
        %1727 = vmatprep.subr.mxu0 0.0
        %1728 = vmatpush1.msra.mxu0 0.0
        %1729 = vmatprep.subr.mxu0 0.0
        %1730 = vmatpush1.msra.mxu0 0.0
        %1731 = vmatprep.subr.mxu0 0.0
        %1732 = vmatpush1.msra.mxu0 0.0
        %1733 = vmatprep.subr.mxu0 0.0
        %1734 = vmatpush1.msra.mxu0 0.0
        %1735 = vmatprep.subr.mxu0 0.0
        %1736 = vmatpush1.msra.mxu0 0.0
        %1737 = vmatprep.subr.mxu0 0.0
        %1738 = vmatpush1.msra.mxu0 0.0
        %1739 = vmatprep.subr.mxu0 0.0
        %1740 = vmatpush1.msra.mxu0 0.0
        %1741 = vmatprep.subr.mxu0 0.0
        %1742 = vmatpush1.msra.mxu0 0.0
        %1743 = vmatprep.subr.mxu0 0.0
        %1744 = vmatpush1.msra.mxu0 0.0
        %1745 = vmatprep.subr.mxu0 0.0
        %1746 = vmatpush1.msra.mxu0 0.0
        %1747 = vmatprep.subr.mxu0 0.0
        %1748 = vmatpush1.msra.mxu0 0.0
        %1749 = vmatprep.subr.mxu0 0.0
        %1750 = vmatpush1.msra.mxu0 0.0
        %1751 = vmatprep.subr.mxu0 0.0
        %1752 = vmatpush1.msra.mxu0 0.0
        %1753 = vmatprep.subr.mxu0 0.0
        %1754 = vmatpush1.msra.mxu0 0.0
        %1755 = vmatprep.subr.mxu0 0.0
        %1756 = vmatpush1.msra.mxu0 0.0
        %1757 = vmatprep.subr.mxu0 0.0
        %1758 = vmatpush1.msra.mxu0 0.0
        %1759 = vmatprep.subr.mxu0 0.0
        %1760 = vmatpush1.msra.mxu0 0.0
        %1761 = vmatprep.mubr.f32.mxu0 0.0
        %1762 = vmatmul.mubr.f32.gmra.mrb[0].mxu0 %v626
        %v1763 = vpop.f32.mrb[0].mxu0
        %v1764 = vadd.f32 %v622, %v1763
        %v1765 = vpop.f32.mrb[0].mxu0
        %1766 = vdwg.mxu0
        %v1767 = vstv %s1599
        %v1768 = vmul.f32 %v1767, %v1416
        %v1769 = vstv %s1600
        %v1770 = vmul.f32 %v1769, %v1764
        %v1771 = vsub.f32 %v1768, %v1770
        %v1773 = vsel %vm376, %v1585, 0
        %1775 = vmatprep.subr.mxu0 0.0
        %1776 = vmatpush1.msra.mxu0 %v1773
        %1777 = vmatprep.subr.mxu0 0.0
        %1778 = vmatpush1.msra.mxu0 0.0
        %1779 = vmatprep.subr.mxu0 0.0
        %1780 = vmatpush1.msra.mxu0 0.0
        %1781 = vmatprep.subr.mxu0 0.0
        %1782 = vmatpush1.msra.mxu0 0.0
        %1783 = vmatprep.subr.mxu0 0.0
        %1784 = vmatpush1.msra.mxu0 0.0
        %1785 = vmatprep.subr.mxu0 0.0
        %1786 = vmatpush1.msra.mxu0 0.0
        %1787 = vmatprep.subr.mxu0 0.0
        %1788 = vmatpush1.msra.mxu0 0.0
        %1789 = vmatprep.subr.mxu0 0.0
        %1790 = vmatpush1.msra.mxu0 0.0
        %1791 = vmatprep.subr.mxu0 0.0
        %1792 = vmatpush1.msra.mxu0 0.0
        %1793 = vmatprep.subr.mxu0 0.0
        %1794 = vmatpush1.msra.mxu0 0.0
        %1795 = vmatprep.subr.mxu0 0.0
        %1796 = vmatpush1.msra.mxu0 0.0
        %1797 = vmatprep.subr.mxu0 0.0
        %1798 = vmatpush1.msra.mxu0 0.0
        %1799 = vmatprep.subr.mxu0 0.0
        %1800 = vmatpush1.msra.mxu0 0.0
        %1801 = vmatprep.subr.mxu0 0.0
        %1802 = vmatpush1.msra.mxu0 0.0
        %1803 = vmatprep.subr.mxu0 0.0
        %1804 = vmatpush1.msra.mxu0 0.0
        %1805 = vmatprep.subr.mxu0 0.0
        %1806 = vmatpush1.msra.mxu0 0.0
        %1807 = vmatprep.subr.mxu0 0.0
        %1808 = vmatpush1.msra.mxu0 0.0
        %1809 = vmatprep.subr.mxu0 0.0
        %1810 = vmatpush1.msra.mxu0 0.0
        %1811 = vmatprep.subr.mxu0 0.0
        %1812 = vmatpush1.msra.mxu0 0.0
        %1813 = vmatprep.subr.mxu0 0.0
        %1814 = vmatpush1.msra.mxu0 0.0
        %1815 = vmatprep.subr.mxu0 0.0
        %1816 = vmatpush1.msra.mxu0 0.0
        %1817 = vmatprep.subr.mxu0 0.0
        %1818 = vmatpush1.msra.mxu0 0.0
        %1819 = vmatprep.subr.mxu0 0.0
        %1820 = vmatpush1.msra.mxu0 0.0
        %1821 = vmatprep.subr.mxu0 0.0
        %1822 = vmatpush1.msra.mxu0 0.0
        %1823 = vmatprep.subr.mxu0 0.0
        %1824 = vmatpush1.msra.mxu0 0.0
        %1825 = vmatprep.subr.mxu0 0.0
        %1826 = vmatpush1.msra.mxu0 0.0
        %1827 = vmatprep.subr.mxu0 0.0
        %1828 = vmatpush1.msra.mxu0 0.0
        %1829 = vmatprep.subr.mxu0 0.0
        %1830 = vmatpush1.msra.mxu0 0.0
        %1831 = vmatprep.subr.mxu0 0.0
        %1832 = vmatpush1.msra.mxu0 0.0
        %1833 = vmatprep.subr.mxu0 0.0
        %1834 = vmatpush1.msra.mxu0 0.0
        %1835 = vmatprep.subr.mxu0 0.0
        %1836 = vmatpush1.msra.mxu0 0.0
        %1837 = vmatprep.subr.mxu0 0.0
        %1838 = vmatpush1.msra.mxu0 0.0
        %1839 = vmatprep.mubr.f32.mxu0 0.0
        %1840 = vmatmul.mubr.f32.gmra.mrb[0].mxu0 %v512
        %v1841 = vpop.f32.mrb[0].mxu0
        %v1842 = vadd.f32 %v703, %v1841
        %v1843 = vpop.f32.mrb[0].mxu0
        %1844 = vmatprep.mubr.f32.mxu0 0.0
        %1845 = vmatmul.mubr.f32.gmra.mrb[0].mxu0 %v515
        %v1846 = vpop.f32.mrb[0].mxu0
        %v1847 = vadd.f32 %v704, %v1846
        %v1848 = vpop.f32.mrb[0].mxu0
        %1849 = vmatprep.mubr.f32.mxu0 0.0
        %1850 = vmatmul.mubr.f32.gmra.mrb[0].mxu0 %v518
        %v1851 = vpop.f32.mrb[0].mxu0
        %v1852 = vadd.f32 %v705, %v1851
        %v1853 = vpop.f32.mrb[0].mxu0
        %1854 = vmatprep.mubr.f32.mxu0 0.0
        %1855 = vmatmul.mubr.f32.gmra.mrb[0].mxu0 %v521
        %v1856 = vpop.f32.mrb[0].mxu0
        %v1857 = vadd.f32 %v706, %v1856
        %v1858 = vpop.f32.mrb[0].mxu0
        %1859 = vdwg.mxu0
        %v1860 = vadd.f32 %v1842, %v1592
        %v1861 = vadd.f32 %v1847, %v1594
        %v1862 = vadd.f32 %v1852, %v1596
        %v1863 = vadd.f32 %v1857, %v1598
        %v1864 = vmax.f32 %v1860, 0.0
        %v1865 = vmax.f32 %v1861, 0.0
        %v1866 = vmax.f32 %v1862, 0.0
        %v1867 = vmax.f32 %v1863, 0.0
        %1868 = vmatprep.subr.mxu0 0.0
        %1869 = vmatpush1.msra.mxu0 %v1864
        %1870 = vmatprep.subr.mxu0 0.0
        %1871 = vmatpush1.msra.mxu0 %v1865
        %1872 = vmatprep.subr.mxu0 0.0
        %1873 = vmatpush1.msra.mxu0 %v1866
        %1874 = vmatprep.subr.mxu0 0.0
        %1875 = vmatpush1.msra.mxu0 %v1867
        %1876 = vmatprep.subr.mxu0 0.0
        %1877 = vmatpush1.msra.mxu0 0.0
        %1878 = vmatprep.subr.mxu0 0.0
        %1879 = vmatpush1.msra.mxu0 0.0
        %1880 = vmatprep.subr.mxu0 0.0
        %1881 = vmatpush1.msra.mxu0 0.0
        %1882 = vmatprep.subr.mxu0 0.0
        %1883 = vmatpush1.msra.mxu0 0.0
        %1884 = vmatprep.subr.mxu0 0.0
        %1885 = vmatpush1.msra.mxu0 0.0
        %1886 = vmatprep.subr.mxu0 0.0
        %1887 = vmatpush1.msra.mxu0 0.0
        %1888 = vmatprep.subr.mxu0 0.0
        %1889 = vmatpush1.msra.mxu0 0.0
        %1890 = vmatprep.subr.mxu0 0.0
        %1891 = vmatpush1.msra.mxu0 0.0
        %1892 = vmatprep.subr.mxu0 0.0
        %1893 = vmatpush1.msra.mxu0 0.0
        %1894 = vmatprep.subr.mxu0 0.0
        %1895 = vmatpush1.msra.mxu0 0.0
        %1896 = vmatprep.subr.mxu0 0.0
        %1897 = vmatpush1.msra.mxu0 0.0
        %1898 = vmatprep.subr.mxu0 0.0
        %1899 = vmatpush1.msra.mxu0 0.0
        %1900 = vmatprep.subr.mxu0 0.0
        %1901 = vmatpush1.msra.mxu0 0.0
        %1902 = vmatprep.subr.mxu0 0.0
        %1903 = vmatpush1.msra.mxu0 0.0
        %1904 = vmatprep.subr.mxu0 0.0
        %1905 = vmatpush1.msra.mxu0 0.0
        %1906 = vmatprep.subr.mxu0 0.0
        %1907 = vmatpush1.msra.mxu0 0.0
        %1908 = vmatprep.subr.mxu0 0.0
        %1909 = vmatpush1.msra.mxu0 0.0
        %1910 = vmatprep.subr.mxu0 0.0
        %1911 = vmatpush1.msra.mxu0 0.0
        %1912 = vmatprep.subr.mxu0 0.0
        %1913 = vmatpush1.msra.mxu0 0.0
        %1914 = vmatprep.subr.mxu0 0.0
        %1915 = vmatpush1.msra.mxu0 0.0
        %1916 = vmatprep.subr.mxu0 0.0
        %1917 = vmatpush1.msra.mxu0 0.0
        %1918 = vmatprep.subr.mxu0 0.0
        %1919 = vmatpush1.msra.mxu0 0.0
        %1920 = vmatprep.subr.mxu0 0.0
        %1921 = vmatpush1.msra.mxu0 0.0
        %1922 = vmatprep.subr.mxu0 0.0
        %1923 = vmatpush1.msra.mxu0 0.0
        %1924 = vmatprep.subr.mxu0 0.0
        %1925 = vmatpush1.msra.mxu0 0.0
        %1926 = vmatprep.subr.mxu0 0.0
        %1927 = vmatpush1.msra.mxu0 0.0
        %1928 = vmatprep.subr.mxu0 0.0
        %1929 = vmatpush1.msra.mxu0 0.0
        %1930 = vmatprep.subr.mxu0 0.0
        %1931 = vmatpush1.msra.mxu0 0.0
        %1932 = vmatprep.mubr.f32.mxu0 0.0
        %1933 = vmatmul.mubr.f32.gmra.mrb[0].mxu0 %v626
        %v1934 = vpop.f32.mrb[0].mxu0
        %v1935 = vadd.f32 %v622, %v1934
        %v1936 = vpop.f32.mrb[0].mxu0
        %1937 = vdwg.mxu0
        %v1938 = vmul.f32 %v1767, %v1585
        %v1939 = vmul.f32 %v1769, %v1935
        %v1940 = vsub.f32 %v1938, %v1939
        %vm1941 = vcmp.eq.s32.totalorder %v485, 3
        %v1942 = vsel %vm1941, %v480, 0.0
        %v1943 = vsel %vm1941, %v481, 0.0
        %v1944 = vsel %vm1941, %v482, 0.0
        %v1945 = vsel %vm1941, %v483, 0.0
        %1946 = vadd.xlane.f32.xlu0 %v1942
        %v1947 = vpop.xlane.xlu0 %1946
        %1948 = vadd.xlane.f32.xlu0 %v1943
        %v1949 = vpop.xlane.xlu0 %1948
        %1950 = vadd.xlane.f32.xlu0 %v1944
        %v1951 = vpop.xlane.xlu0 %1950
        %1952 = vadd.xlane.f32.xlu0 %v1945
        %v1953 = vpop.xlane.xlu0 %1952
        %s1954 = sld [smem:[#allocation4 + $0x3]]
        %s1955 = sld [smem:[#allocation5 + $0x3]]
        %v1957 = vsel %vm376, %v1771, 0
        %1959 = vmatprep.subr.mxu0 0.0
        %1960 = vmatpush1.msra.mxu0 %v1957
        %1961 = vmatprep.subr.mxu0 0.0
        %1962 = vmatpush1.msra.mxu0 0.0
        %1963 = vmatprep.subr.mxu0 0.0
        %1964 = vmatpush1.msra.mxu0 0.0
        %1965 = vmatprep.subr.mxu0 0.0
        %1966 = vmatpush1.msra.mxu0 0.0
        %1967 = vmatprep.subr.mxu0 0.0
        %1968 = vmatpush1.msra.mxu0 0.0
        %1969 = vmatprep.subr.mxu0 0.0
        %1970 = vmatpush1.msra.mxu0 0.0
        %1971 = vmatprep.subr.mxu0 0.0
        %1972 = vmatpush1.msra.mxu0 0.0
        %1973 = vmatprep.subr.mxu0 0.0
        %1974 = vmatpush1.msra.mxu0 0.0
        %1975 = vmatprep.subr.mxu0 0.0
        %1976 = vmatpush1.msra.mxu0 0.0
        %1977 = vmatprep.subr.mxu0 0.0
        %1978 = vmatpush1.msra.mxu0 0.0
        %1979 = vmatprep.subr.mxu0 0.0
        %1980 = vmatpush1.msra.mxu0 0.0
        %1981 = vmatprep.subr.mxu0 0.0
        %1982 = vmatpush1.msra.mxu0 0.0
        %1983 = vmatprep.subr.mxu0 0.0
        %1984 = vmatpush1.msra.mxu0 0.0
        %1985 = vmatprep.subr.mxu0 0.0
        %1986 = vmatpush1.msra.mxu0 0.0
        %1987 = vmatprep.subr.mxu0 0.0
        %1988 = vmatpush1.msra.mxu0 0.0
        %1989 = vmatprep.subr.mxu0 0.0
        %1990 = vmatpush1.msra.mxu0 0.0
        %1991 = vmatprep.subr.mxu0 0.0
        %1992 = vmatpush1.msra.mxu0 0.0
        %1993 = vmatprep.subr.mxu0 0.0
        %1994 = vmatpush1.msra.mxu0 0.0
        %1995 = vmatprep.subr.mxu0 0.0
        %1996 = vmatpush1.msra.mxu0 0.0
        %1997 = vmatprep.subr.mxu0 0.0
        %1998 = vmatpush1.msra.mxu0 0.0
        %1999 = vmatprep.subr.mxu0 0.0
        %2000 = vmatpush1.msra.mxu0 0.0
        %2001 = vmatprep.subr.mxu0 0.0
        %2002 = vmatpush1.msra.mxu0 0.0
        %2003 = vmatprep.subr.mxu0 0.0
        %2004 = vmatpush1.msra.mxu0 0.0
        %2005 = vmatprep.subr.mxu0 0.0
        %2006 = vmatpush1.msra.mxu0 0.0
        %2007 = vmatprep.subr.mxu0 0.0
        %2008 = vmatpush1.msra.mxu0 0.0
        %2009 = vmatprep.subr.mxu0 0.0
        %2010 = vmatpush1.msra.mxu0 0.0
        %2011 = vmatprep.subr.mxu0 0.0
        %2012 = vmatpush1.msra.mxu0 0.0
        %2013 = vmatprep.subr.mxu0 0.0
        %2014 = vmatpush1.msra.mxu0 0.0
        %2015 = vmatprep.subr.mxu0 0.0
        %2016 = vmatpush1.msra.mxu0 0.0
        %2017 = vmatprep.subr.mxu0 0.0
        %2018 = vmatpush1.msra.mxu0 0.0
        %2019 = vmatprep.subr.mxu0 0.0
        %2020 = vmatpush1.msra.mxu0 0.0
        %2021 = vmatprep.subr.mxu0 0.0
        %2022 = vmatpush1.msra.mxu0 0.0
        %2023 = vmatprep.mubr.f32.mxu0 0.0
        %2024 = vmatmul.mubr.f32.gmra.mrb[0].mxu0 %v512
        %v2025 = vpop.f32.mrb[0].mxu0
        %v2026 = vadd.f32 %v507, %v2025
        %v2027 = vpop.f32.mrb[0].mxu0
        %2028 = vmatprep.mubr.f32.mxu0 0.0
        %2029 = vmatmul.mubr.f32.gmra.mrb[0].mxu0 %v515
        %v2030 = vpop.f32.mrb[0].mxu0
        %v2031 = vadd.f32 %v508, %v2030
        %v2032 = vpop.f32.mrb[0].mxu0
        %2033 = vmatprep.mubr.f32.mxu0 0.0
        %2034 = vmatmul.mubr.f32.gmra.mrb[0].mxu0 %v518
        %v2035 = vpop.f32.mrb[0].mxu0
        %v2036 = vadd.f32 %v509, %v2035
        %v2037 = vpop.f32.mrb[0].mxu0
        %2038 = vmatprep.mubr.f32.mxu0 0.0
        %2039 = vmatmul.mubr.f32.gmra.mrb[0].mxu0 %v521
        %v2040 = vpop.f32.mrb[0].mxu0
        %v2041 = vadd.f32 %v510, %v2040
        %v2042 = vpop.f32.mrb[0].mxu0
        %2043 = vdwg.mxu0
        %v2044 = vadd.f32 %v2026, %v1947
        %v2045 = vadd.f32 %v2031, %v1949
        %v2046 = vadd.f32 %v2036, %v1951
        %v2047 = vadd.f32 %v2041, %v1953
        %v2048 = vmax.f32 %v2044, 0.0
        %v2049 = vmax.f32 %v2045, 0.0
        %v2050 = vmax.f32 %v2046, 0.0
        %v2051 = vmax.f32 %v2047, 0.0
        %2052 = vmatprep.subr.mxu0 0.0
        %2053 = vmatpush1.msra.mxu0 %v2048
        %2054 = vmatprep.subr.mxu0 0.0
        %2055 = vmatpush1.msra.mxu0 %v2049
        %2056 = vmatprep.subr.mxu0 0.0
        %2057 = vmatpush1.msra.mxu0 %v2050
        %2058 = vmatprep.subr.mxu0 0.0
        %2059 = vmatpush1.msra.mxu0 %v2051
        %2060 = vmatprep.subr.mxu0 0.0
        %2061 = vmatpush1.msra.mxu0 0.0
        %2062 = vmatprep.subr.mxu0 0.0
        %2063 = vmatpush1.msra.mxu0 0.0
        %2064 = vmatprep.subr.mxu0 0.0
        %2065 = vmatpush1.msra.mxu0 0.0
        %2066 = vmatprep.subr.mxu0 0.0
        %2067 = vmatpush1.msra.mxu0 0.0
        %2068 = vmatprep.subr.mxu0 0.0
        %2069 = vmatpush1.msra.mxu0 0.0
        %2070 = vmatprep.subr.mxu0 0.0
        %2071 = vmatpush1.msra.mxu0 0.0
        %2072 = vmatprep.subr.mxu0 0.0
        %2073 = vmatpush1.msra.mxu0 0.0
        %2074 = vmatprep.subr.mxu0 0.0
        %2075 = vmatpush1.msra.mxu0 0.0
        %2076 = vmatprep.subr.mxu0 0.0
        %2077 = vmatpush1.msra.mxu0 0.0
        %2078 = vmatprep.subr.mxu0 0.0
        %2079 = vmatpush1.msra.mxu0 0.0
        %2080 = vmatprep.subr.mxu0 0.0
        %2081 = vmatpush1.msra.mxu0 0.0
        %2082 = vmatprep.subr.mxu0 0.0
        %2083 = vmatpush1.msra.mxu0 0.0
        %2084 = vmatprep.subr.mxu0 0.0
        %2085 = vmatpush1.msra.mxu0 0.0
        %2086 = vmatprep.subr.mxu0 0.0
        %2087 = vmatpush1.msra.mxu0 0.0
        %2088 = vmatprep.subr.mxu0 0.0
        %2089 = vmatpush1.msra.mxu0 0.0
        %2090 = vmatprep.subr.mxu0 0.0
        %2091 = vmatpush1.msra.mxu0 0.0
        %2092 = vmatprep.subr.mxu0 0.0
        %2093 = vmatpush1.msra.mxu0 0.0
        %2094 = vmatprep.subr.mxu0 0.0
        %2095 = vmatpush1.msra.mxu0 0.0
        %2096 = vmatprep.subr.mxu0 0.0
        %2097 = vmatpush1.msra.mxu0 0.0
        %2098 = vmatprep.subr.mxu0 0.0
        %2099 = vmatpush1.msra.mxu0 0.0
        %2100 = vmatprep.subr.mxu0 0.0
        %2101 = vmatpush1.msra.mxu0 0.0
        %2102 = vmatprep.subr.mxu0 0.0
        %2103 = vmatpush1.msra.mxu0 0.0
        %2104 = vmatprep.subr.mxu0 0.0
        %2105 = vmatpush1.msra.mxu0 0.0
        %2106 = vmatprep.subr.mxu0 0.0
        %2107 = vmatpush1.msra.mxu0 0.0
        %2108 = vmatprep.subr.mxu0 0.0
        %2109 = vmatpush1.msra.mxu0 0.0
        %2110 = vmatprep.subr.mxu0 0.0
        %2111 = vmatpush1.msra.mxu0 0.0
        %2112 = vmatprep.subr.mxu0 0.0
        %2113 = vmatpush1.msra.mxu0 0.0
        %2114 = vmatprep.subr.mxu0 0.0
        %2115 = vmatpush1.msra.mxu0 0.0
        %2116 = vmatprep.mubr.f32.mxu0 0.0
        %2117 = vmatmul.mubr.f32.gmra.mrb[0].mxu0 %v626
        %v2118 = vpop.f32.mrb[0].mxu0
        %v2119 = vadd.f32 %v622, %v2118
        %v2120 = vpop.f32.mrb[0].mxu0
        %2121 = vdwg.mxu0
        %v2122 = vstv %s1954
        %v2123 = vmul.f32 %v2122, %v1771
        %v2124 = vstv %s1955
        %v2125 = vmul.f32 %v2124, %v2119
        %v2126 = vsub.f32 %v2123, %v2125
        %v2128 = vsel %vm376, %v1940, 0
        %2130 = vmatprep.subr.mxu0 0.0
        %2131 = vmatpush1.msra.mxu0 %v2128
        %2132 = vmatprep.subr.mxu0 0.0
        %2133 = vmatpush1.msra.mxu0 0.0
        %2134 = vmatprep.subr.mxu0 0.0
        %2135 = vmatpush1.msra.mxu0 0.0
        %2136 = vmatprep.subr.mxu0 0.0
        %2137 = vmatpush1.msra.mxu0 0.0
        %2138 = vmatprep.subr.mxu0 0.0
        %2139 = vmatpush1.msra.mxu0 0.0
        %2140 = vmatprep.subr.mxu0 0.0
        %2141 = vmatpush1.msra.mxu0 0.0
        %2142 = vmatprep.subr.mxu0 0.0
        %2143 = vmatpush1.msra.mxu0 0.0
        %2144 = vmatprep.subr.mxu0 0.0
        %2145 = vmatpush1.msra.mxu0 0.0
        %2146 = vmatprep.subr.mxu0 0.0
        %2147 = vmatpush1.msra.mxu0 0.0
        %2148 = vmatprep.subr.mxu0 0.0
        %2149 = vmatpush1.msra.mxu0 0.0
        %2150 = vmatprep.subr.mxu0 0.0
        %2151 = vmatpush1.msra.mxu0 0.0
        %2152 = vmatprep.subr.mxu0 0.0
        %2153 = vmatpush1.msra.mxu0 0.0
        %2154 = vmatprep.subr.mxu0 0.0
        %2155 = vmatpush1.msra.mxu0 0.0
        %2156 = vmatprep.subr.mxu0 0.0
        %2157 = vmatpush1.msra.mxu0 0.0
        %2158 = vmatprep.subr.mxu0 0.0
        %2159 = vmatpush1.msra.mxu0 0.0
        %2160 = vmatprep.subr.mxu0 0.0
        %2161 = vmatpush1.msra.mxu0 0.0
        %2162 = vmatprep.subr.mxu0 0.0
        %2163 = vmatpush1.msra.mxu0 0.0
        %2164 = vmatprep.subr.mxu0 0.0
        %2165 = vmatpush1.msra.mxu0 0.0
        %2166 = vmatprep.subr.mxu0 0.0
        %2167 = vmatpush1.msra.mxu0 0.0
        %2168 = vmatprep.subr.mxu0 0.0
        %2169 = vmatpush1.msra.mxu0 0.0
        %2170 = vmatprep.subr.mxu0 0.0
        %2171 = vmatpush1.msra.mxu0 0.0
        %2172 = vmatprep.subr.mxu0 0.0
        %2173 = vmatpush1.msra.mxu0 0.0
        %2174 = vmatprep.subr.mxu0 0.0
        %2175 = vmatpush1.msra.mxu0 0.0
        %2176 = vmatprep.subr.mxu0 0.0
        %2177 = vmatpush1.msra.mxu0 0.0
        %2178 = vmatprep.subr.mxu0 0.0
        %2179 = vmatpush1.msra.mxu0 0.0
        %2180 = vmatprep.subr.mxu0 0.0
        %2181 = vmatpush1.msra.mxu0 0.0
        %2182 = vmatprep.subr.mxu0 0.0
        %2183 = vmatpush1.msra.mxu0 0.0
        %2184 = vmatprep.subr.mxu0 0.0
        %2185 = vmatpush1.msra.mxu0 0.0
        %2186 = vmatprep.subr.mxu0 0.0
        %2187 = vmatpush1.msra.mxu0 0.0
        %2188 = vmatprep.subr.mxu0 0.0
        %2189 = vmatpush1.msra.mxu0 0.0
        %2190 = vmatprep.subr.mxu0 0.0
        %2191 = vmatpush1.msra.mxu0 0.0
        %2192 = vmatprep.subr.mxu0 0.0
        %2193 = vmatpush1.msra.mxu0 0.0
        %2194 = vmatprep.mubr.f32.mxu0 0.0
        %2195 = vmatmul.mubr.f32.gmra.mrb[0].mxu0 %v512
        %v2196 = vpop.f32.mrb[0].mxu0
        %v2197 = vadd.f32 %v703, %v2196
        %v2198 = vpop.f32.mrb[0].mxu0
        %2199 = vmatprep.mubr.f32.mxu0 0.0
        %2200 = vmatmul.mubr.f32.gmra.mrb[0].mxu0 %v515
        %v2201 = vpop.f32.mrb[0].mxu0
        %v2202 = vadd.f32 %v704, %v2201
        %v2203 = vpop.f32.mrb[0].mxu0
        %2204 = vmatprep.mubr.f32.mxu0 0.0
        %2205 = vmatmul.mubr.f32.gmra.mrb[0].mxu0 %v518
        %v2206 = vpop.f32.mrb[0].mxu0
        %v2207 = vadd.f32 %v705, %v2206
        %v2208 = vpop.f32.mrb[0].mxu0
        %2209 = vmatprep.mubr.f32.mxu0 0.0
        %2210 = vmatmul.mubr.f32.gmra.mrb[0].mxu0 %v521
        %v2211 = vpop.f32.mrb[0].mxu0
        %v2212 = vadd.f32 %v706, %v2211
        %v2213 = vpop.f32.mrb[0].mxu0
        %2214 = vdwg.mxu0
        %v2215 = vadd.f32 %v2197, %v1947
        %v2216 = vadd.f32 %v2202, %v1949
        %v2217 = vadd.f32 %v2207, %v1951
        %v2218 = vadd.f32 %v2212, %v1953
        %v2219 = vmax.f32 %v2215, 0.0
        %v2220 = vmax.f32 %v2216, 0.0
        %v2221 = vmax.f32 %v2217, 0.0
        %v2222 = vmax.f32 %v2218, 0.0
        %2223 = vmatprep.subr.mxu0 0.0
        %2224 = vmatpush1.msra.mxu0 %v2219
        %2225 = vmatprep.subr.mxu0 0.0
        %2226 = vmatpush1.msra.mxu0 %v2220
        %2227 = vmatprep.subr.mxu0 0.0
        %2228 = vmatpush1.msra.mxu0 %v2221
        %2229 = vmatprep.subr.mxu0 0.0
        %2230 = vmatpush1.msra.mxu0 %v2222
        %2231 = vmatprep.subr.mxu0 0.0
        %2232 = vmatpush1.msra.mxu0 0.0
        %2233 = vmatprep.subr.mxu0 0.0
        %2234 = vmatpush1.msra.mxu0 0.0
        %2235 = vmatprep.subr.mxu0 0.0
        %2236 = vmatpush1.msra.mxu0 0.0
        %2237 = vmatprep.subr.mxu0 0.0
        %2238 = vmatpush1.msra.mxu0 0.0
        %2239 = vmatprep.subr.mxu0 0.0
        %2240 = vmatpush1.msra.mxu0 0.0
        %2241 = vmatprep.subr.mxu0 0.0
        %2242 = vmatpush1.msra.mxu0 0.0
        %2243 = vmatprep.subr.mxu0 0.0
        %2244 = vmatpush1.msra.mxu0 0.0
        %2245 = vmatprep.subr.mxu0 0.0
        %2246 = vmatpush1.msra.mxu0 0.0
        %2247 = vmatprep.subr.mxu0 0.0
        %2248 = vmatpush1.msra.mxu0 0.0
        %2249 = vmatprep.subr.mxu0 0.0
        %2250 = vmatpush1.msra.mxu0 0.0
        %2251 = vmatprep.subr.mxu0 0.0
        %2252 = vmatpush1.msra.mxu0 0.0
        %2253 = vmatprep.subr.mxu0 0.0
        %2254 = vmatpush1.msra.mxu0 0.0
        %2255 = vmatprep.subr.mxu0 0.0
        %2256 = vmatpush1.msra.mxu0 0.0
        %2257 = vmatprep.subr.mxu0 0.0
        %2258 = vmatpush1.msra.mxu0 0.0
        %2259 = vmatprep.subr.mxu0 0.0
        %2260 = vmatpush1.msra.mxu0 0.0
        %2261 = vmatprep.subr.mxu0 0.0
        %2262 = vmatpush1.msra.mxu0 0.0
        %2263 = vmatprep.subr.mxu0 0.0
        %2264 = vmatpush1.msra.mxu0 0.0
        %2265 = vmatprep.subr.mxu0 0.0
        %2266 = vmatpush1.msra.mxu0 0.0
        %2267 = vmatprep.subr.mxu0 0.0
        %2268 = vmatpush1.msra.mxu0 0.0
        %2269 = vmatprep.subr.mxu0 0.0
        %2270 = vmatpush1.msra.mxu0 0.0
        %2271 = vmatprep.subr.mxu0 0.0
        %2272 = vmatpush1.msra.mxu0 0.0
        %2273 = vmatprep.subr.mxu0 0.0
        %2274 = vmatpush1.msra.mxu0 0.0
        %2275 = vmatprep.subr.mxu0 0.0
        %2276 = vmatpush1.msra.mxu0 0.0
        %2277 = vmatprep.subr.mxu0 0.0
        %2278 = vmatpush1.msra.mxu0 0.0
        %2279 = vmatprep.subr.mxu0 0.0
        %2280 = vmatpush1.msra.mxu0 0.0
        %2281 = vmatprep.subr.mxu0 0.0
        %2282 = vmatpush1.msra.mxu0 0.0
        %2283 = vmatprep.subr.mxu0 0.0
        %2284 = vmatpush1.msra.mxu0 0.0
        %2285 = vmatprep.subr.mxu0 0.0
        %2286 = vmatpush1.msra.mxu0 0.0
        %2287 = vmatprep.mubr.f32.mxu0 0.0
        %2288 = vmatmul.mubr.f32.gmra.mrb[0].mxu0 %v626
        %v2289 = vpop.f32.mrb[0].mxu0
        %v2290 = vadd.f32 %v622, %v2289
        %v2291 = vpop.f32.mrb[0].mxu0
        %2292 = vdwg.mxu0
        %v2293 = vmul.f32 %v2122, %v1940
        %v2294 = vmul.f32 %v2124, %v2290
        %v2295 = vsub.f32 %v2293, %v2294
        %vm2296 = vcmp.eq.s32.totalorder %v485, 2
        %v2297 = vsel %vm2296, %v480, 0.0
        %v2298 = vsel %vm2296, %v481, 0.0
        %v2299 = vsel %vm2296, %v482, 0.0
        %v2300 = vsel %vm2296, %v483, 0.0
        %2301 = vadd.xlane.f32.xlu0 %v2297
        %v2302 = vpop.xlane.xlu0 %2301
        %2303 = vadd.xlane.f32.xlu0 %v2298
        %v2304 = vpop.xlane.xlu0 %2303
        %2305 = vadd.xlane.f32.xlu0 %v2299
        %v2306 = vpop.xlane.xlu0 %2305
        %2307 = vadd.xlane.f32.xlu0 %v2300
        %v2308 = vpop.xlane.xlu0 %2307
        %s2309 = sld [smem:[#allocation4 + $0x2]]
        %s2310 = sld [smem:[#allocation5 + $0x2]]
        %v2312 = vsel %vm376, %v2126, 0
        %2314 = vmatprep.subr.mxu0 0.0
        %2315 = vmatpush1.msra.mxu0 %v2312
        %2316 = vmatprep.subr.mxu0 0.0
        %2317 = vmatpush1.msra.mxu0 0.0
        %2318 = vmatprep.subr.mxu0 0.0
        %2319 = vmatpush1.msra.mxu0 0.0
        %2320 = vmatprep.subr.mxu0 0.0
        %2321 = vmatpush1.msra.mxu0 0.0
        %2322 = vmatprep.subr.mxu0 0.0
        %2323 = vmatpush1.msra.mxu0 0.0
        %2324 = vmatprep.subr.mxu0 0.0
        %2325 = vmatpush1.msra.mxu0 0.0
        %2326 = vmatprep.subr.mxu0 0.0
        %2327 = vmatpush1.msra.mxu0 0.0
        %2328 = vmatprep.subr.mxu0 0.0
        %2329 = vmatpush1.msra.mxu0 0.0
        %2330 = vmatprep.subr.mxu0 0.0
        %2331 = vmatpush1.msra.mxu0 0.0
        %2332 = vmatprep.subr.mxu0 0.0
        %2333 = vmatpush1.msra.mxu0 0.0
        %2334 = vmatprep.subr.mxu0 0.0
        %2335 = vmatpush1.msra.mxu0 0.0
        %2336 = vmatprep.subr.mxu0 0.0
        %2337 = vmatpush1.msra.mxu0 0.0
        %2338 = vmatprep.subr.mxu0 0.0
        %2339 = vmatpush1.msra.mxu0 0.0
        %2340 = vmatprep.subr.mxu0 0.0
        %2341 = vmatpush1.msra.mxu0 0.0
        %2342 = vmatprep.subr.mxu0 0.0
        %2343 = vmatpush1.msra.mxu0 0.0
        %2344 = vmatprep.subr.mxu0 0.0
        %2345 = vmatpush1.msra.mxu0 0.0
        %2346 = vmatprep.subr.mxu0 0.0
        %2347 = vmatpush1.msra.mxu0 0.0
        %2348 = vmatprep.subr.mxu0 0.0
        %2349 = vmatpush1.msra.mxu0 0.0
        %2350 = vmatprep.subr.mxu0 0.0
        %2351 = vmatpush1.msra.mxu0 0.0
        %2352 = vmatprep.subr.mxu0 0.0
        %2353 = vmatpush1.msra.mxu0 0.0
        %2354 = vmatprep.subr.mxu0 0.0
        %2355 = vmatpush1.msra.mxu0 0.0
        %2356 = vmatprep.subr.mxu0 0.0
        %2357 = vmatpush1.msra.mxu0 0.0
        %2358 = vmatprep.subr.mxu0 0.0
        %2359 = vmatpush1.msra.mxu0 0.0
        %2360 = vmatprep.subr.mxu0 0.0
        %2361 = vmatpush1.msra.mxu0 0.0
        %2362 = vmatprep.subr.mxu0 0.0
        %2363 = vmatpush1.msra.mxu0 0.0
        %2364 = vmatprep.subr.mxu0 0.0
        %2365 = vmatpush1.msra.mxu0 0.0
        %2366 = vmatprep.subr.mxu0 0.0
        %2367 = vmatpush1.msra.mxu0 0.0
        %2368 = vmatprep.subr.mxu0 0.0
        %2369 = vmatpush1.msra.mxu0 0.0
        %2370 = vmatprep.subr.mxu0 0.0
        %2371 = vmatpush1.msra.mxu0 0.0
        %2372 = vmatprep.subr.mxu0 0.0
        %2373 = vmatpush1.msra.mxu0 0.0
        %2374 = vmatprep.subr.mxu0 0.0
        %2375 = vmatpush1.msra.mxu0 0.0
        %2376 = vmatprep.subr.mxu0 0.0
        %2377 = vmatpush1.msra.mxu0 0.0
        %2378 = vmatprep.mubr.f32.mxu0 0.0
        %2379 = vmatmul.mubr.f32.gmra.mrb[0].mxu0 %v512
        %v2380 = vpop.f32.mrb[0].mxu0
        %v2381 = vadd.f32 %v507, %v2380
        %v2382 = vpop.f32.mrb[0].mxu0
        %2383 = vmatprep.mubr.f32.mxu0 0.0
        %2384 = vmatmul.mubr.f32.gmra.mrb[0].mxu0 %v515
        %v2385 = vpop.f32.mrb[0].mxu0
        %v2386 = vadd.f32 %v508, %v2385
        %v2387 = vpop.f32.mrb[0].mxu0
        %2388 = vmatprep.mubr.f32.mxu0 0.0
        %2389 = vmatmul.mubr.f32.gmra.mrb[0].mxu0 %v518
        %v2390 = vpop.f32.mrb[0].mxu0
        %v2391 = vadd.f32 %v509, %v2390
        %v2392 = vpop.f32.mrb[0].mxu0
        %2393 = vmatprep.mubr.f32.mxu0 0.0
        %2394 = vmatmul.mubr.f32.gmra.mrb[0].mxu0 %v521
        %v2395 = vpop.f32.mrb[0].mxu0
        %v2396 = vadd.f32 %v510, %v2395
        %v2397 = vpop.f32.mrb[0].mxu0
        %2398 = vdwg.mxu0
        %v2399 = vadd.f32 %v2381, %v2302
        %v2400 = vadd.f32 %v2386, %v2304
        %v2401 = vadd.f32 %v2391, %v2306
        %v2402 = vadd.f32 %v2396, %v2308
        %v2403 = vmax.f32 %v2399, 0.0
        %v2404 = vmax.f32 %v2400, 0.0
        %v2405 = vmax.f32 %v2401, 0.0
        %v2406 = vmax.f32 %v2402, 0.0
        %2407 = vmatprep.subr.mxu0 0.0
        %2408 = vmatpush1.msra.mxu0 %v2403
        %2409 = vmatprep.subr.mxu0 0.0
        %2410 = vmatpush1.msra.mxu0 %v2404
        %2411 = vmatprep.subr.mxu0 0.0
        %2412 = vmatpush1.msra.mxu0 %v2405
        %2413 = vmatprep.subr.mxu0 0.0
        %2414 = vmatpush1.msra.mxu0 %v2406
        %2415 = vmatprep.subr.mxu0 0.0
        %2416 = vmatpush1.msra.mxu0 0.0
        %2417 = vmatprep.subr.mxu0 0.0
        %2418 = vmatpush1.msra.mxu0 0.0
        %2419 = vmatprep.subr.mxu0 0.0
        %2420 = vmatpush1.msra.mxu0 0.0
        %2421 = vmatprep.subr.mxu0 0.0
        %2422 = vmatpush1.msra.mxu0 0.0
        %2423 = vmatprep.subr.mxu0 0.0
        %2424 = vmatpush1.msra.mxu0 0.0
        %2425 = vmatprep.subr.mxu0 0.0
        %2426 = vmatpush1.msra.mxu0 0.0
        %2427 = vmatprep.subr.mxu0 0.0
        %2428 = vmatpush1.msra.mxu0 0.0
        %2429 = vmatprep.subr.mxu0 0.0
        %2430 = vmatpush1.msra.mxu0 0.0
        %2431 = vmatprep.subr.mxu0 0.0
        %2432 = vmatpush1.msra.mxu0 0.0
        %2433 = vmatprep.subr.mxu0 0.0
        %2434 = vmatpush1.msra.mxu0 0.0
        %2435 = vmatprep.subr.mxu0 0.0
        %2436 = vmatpush1.msra.mxu0 0.0
        %2437 = vmatprep.subr.mxu0 0.0
        %2438 = vmatpush1.msra.mxu0 0.0
        %2439 = vmatprep.subr.mxu0 0.0
        %2440 = vmatpush1.msra.mxu0 0.0
        %2441 = vmatprep.subr.mxu0 0.0
        %2442 = vmatpush1.msra.mxu0 0.0
        %2443 = vmatprep.subr.mxu0 0.0
        %2444 = vmatpush1.msra.mxu0 0.0
        %2445 = vmatprep.subr.mxu0 0.0
        %2446 = vmatpush1.msra.mxu0 0.0
        %2447 = vmatprep.subr.mxu0 0.0
        %2448 = vmatpush1.msra.mxu0 0.0
        %2449 = vmatprep.subr.mxu0 0.0
        %2450 = vmatpush1.msra.mxu0 0.0
        %2451 = vmatprep.subr.mxu0 0.0
        %2452 = vmatpush1.msra.mxu0 0.0
        %2453 = vmatprep.subr.mxu0 0.0
        %2454 = vmatpush1.msra.mxu0 0.0
        %2455 = vmatprep.subr.mxu0 0.0
        %2456 = vmatpush1.msra.mxu0 0.0
        %2457 = vmatprep.subr.mxu0 0.0
        %2458 = vmatpush1.msra.mxu0 0.0
        %2459 = vmatprep.subr.mxu0 0.0
        %2460 = vmatpush1.msra.mxu0 0.0
        %2461 = vmatprep.subr.mxu0 0.0
        %2462 = vmatpush1.msra.mxu0 0.0
        %2463 = vmatprep.subr.mxu0 0.0
        %2464 = vmatpush1.msra.mxu0 0.0
        %2465 = vmatprep.subr.mxu0 0.0
        %2466 = vmatpush1.msra.mxu0 0.0
        %2467 = vmatprep.subr.mxu0 0.0
        %2468 = vmatpush1.msra.mxu0 0.0
        %2469 = vmatprep.subr.mxu0 0.0
        %2470 = vmatpush1.msra.mxu0 0.0
        %2471 = vmatprep.mubr.f32.mxu0 0.0
        %2472 = vmatmul.mubr.f32.gmra.mrb[0].mxu0 %v626
        %v2473 = vpop.f32.mrb[0].mxu0
        %v2474 = vadd.f32 %v622, %v2473
        %v2475 = vpop.f32.mrb[0].mxu0
        %2476 = vdwg.mxu0
        %v2477 = vstv %s2309
        %v2478 = vmul.f32 %v2477, %v2126
        %v2479 = vstv %s2310
        %v2480 = vmul.f32 %v2479, %v2474
        %v2481 = vsub.f32 %v2478, %v2480
        %v2483 = vsel %vm376, %v2295, 0
        %2485 = vmatprep.subr.mxu0 0.0
        %2486 = vmatpush1.msra.mxu0 %v2483
        %2487 = vmatprep.subr.mxu0 0.0
        %2488 = vmatpush1.msra.mxu0 0.0
        %2489 = vmatprep.subr.mxu0 0.0
        %2490 = vmatpush1.msra.mxu0 0.0
        %2491 = vmatprep.subr.mxu0 0.0
        %2492 = vmatpush1.msra.mxu0 0.0
        %2493 = vmatprep.subr.mxu0 0.0
        %2494 = vmatpush1.msra.mxu0 0.0
        %2495 = vmatprep.subr.mxu0 0.0
        %2496 = vmatpush1.msra.mxu0 0.0
        %2497 = vmatprep.subr.mxu0 0.0
        %2498 = vmatpush1.msra.mxu0 0.0
        %2499 = vmatprep.subr.mxu0 0.0
        %2500 = vmatpush1.msra.mxu0 0.0
        %2501 = vmatprep.subr.mxu0 0.0
        %2502 = vmatpush1.msra.mxu0 0.0
        %2503 = vmatprep.subr.mxu0 0.0
        %2504 = vmatpush1.msra.mxu0 0.0
        %2505 = vmatprep.subr.mxu0 0.0
        %2506 = vmatpush1.msra.mxu0 0.0
        %2507 = vmatprep.subr.mxu0 0.0
        %2508 = vmatpush1.msra.mxu0 0.0
        %2509 = vmatprep.subr.mxu0 0.0
        %2510 = vmatpush1.msra.mxu0 0.0
        %2511 = vmatprep.subr.mxu0 0.0
        %2512 = vmatpush1.msra.mxu0 0.0
        %2513 = vmatprep.subr.mxu0 0.0
        %2514 = vmatpush1.msra.mxu0 0.0
        %2515 = vmatprep.subr.mxu0 0.0
        %2516 = vmatpush1.msra.mxu0 0.0
        %2517 = vmatprep.subr.mxu0 0.0
        %2518 = vmatpush1.msra.mxu0 0.0
        %2519 = vmatprep.subr.mxu0 0.0
        %2520 = vmatpush1.msra.mxu0 0.0
        %2521 = vmatprep.subr.mxu0 0.0
        %2522 = vmatpush1.msra.mxu0 0.0
        %2523 = vmatprep.subr.mxu0 0.0
        %2524 = vmatpush1.msra.mxu0 0.0
        %2525 = vmatprep.subr.mxu0 0.0
        %2526 = vmatpush1.msra.mxu0 0.0
        %2527 = vmatprep.subr.mxu0 0.0
        %2528 = vmatpush1.msra.mxu0 0.0
        %2529 = vmatprep.subr.mxu0 0.0
        %2530 = vmatpush1.msra.mxu0 0.0
        %2531 = vmatprep.subr.mxu0 0.0
        %2532 = vmatpush1.msra.mxu0 0.0
        %2533 = vmatprep.subr.mxu0 0.0
        %2534 = vmatpush1.msra.mxu0 0.0
        %2535 = vmatprep.subr.mxu0 0.0
        %2536 = vmatpush1.msra.mxu0 0.0
        %2537 = vmatprep.subr.mxu0 0.0
        %2538 = vmatpush1.msra.mxu0 0.0
        %2539 = vmatprep.subr.mxu0 0.0
        %2540 = vmatpush1.msra.mxu0 0.0
        %2541 = vmatprep.subr.mxu0 0.0
        %2542 = vmatpush1.msra.mxu0 0.0
        %2543 = vmatprep.subr.mxu0 0.0
        %2544 = vmatpush1.msra.mxu0 0.0
        %2545 = vmatprep.subr.mxu0 0.0
        %2546 = vmatpush1.msra.mxu0 0.0
        %2547 = vmatprep.subr.mxu0 0.0
        %2548 = vmatpush1.msra.mxu0 0.0
        %2549 = vmatprep.mubr.f32.mxu0 0.0
        %2550 = vmatmul.mubr.f32.gmra.mrb[0].mxu0 %v512
        %v2551 = vpop.f32.mrb[0].mxu0
        %v2552 = vadd.f32 %v703, %v2551
        %v2553 = vpop.f32.mrb[0].mxu0
        %2554 = vmatprep.mubr.f32.mxu0 0.0
        %2555 = vmatmul.mubr.f32.gmra.mrb[0].mxu0 %v515
        %v2556 = vpop.f32.mrb[0].mxu0
        %v2557 = vadd.f32 %v704, %v2556
        %v2558 = vpop.f32.mrb[0].mxu0
        %2559 = vmatprep.mubr.f32.mxu0 0.0
        %2560 = vmatmul.mubr.f32.gmra.mrb[0].mxu0 %v518
        %v2561 = vpop.f32.mrb[0].mxu0
        %v2562 = vadd.f32 %v705, %v2561
        %v2563 = vpop.f32.mrb[0].mxu0
        %2564 = vmatprep.mubr.f32.mxu0 0.0
        %2565 = vmatmul.mubr.f32.gmra.mrb[0].mxu0 %v521
        %v2566 = vpop.f32.mrb[0].mxu0
        %v2567 = vadd.f32 %v706, %v2566
        %v2568 = vpop.f32.mrb[0].mxu0
        %2569 = vdwg.mxu0
        %v2570 = vadd.f32 %v2552, %v2302
        %v2571 = vadd.f32 %v2557, %v2304
        %v2572 = vadd.f32 %v2562, %v2306
        %v2573 = vadd.f32 %v2567, %v2308
        %v2574 = vmax.f32 %v2570, 0.0
        %v2575 = vmax.f32 %v2571, 0.0
        %v2576 = vmax.f32 %v2572, 0.0
        %v2577 = vmax.f32 %v2573, 0.0
        %2578 = vmatprep.subr.mxu0 0.0
        %2579 = vmatpush1.msra.mxu0 %v2574
        %2580 = vmatprep.subr.mxu0 0.0
        %2581 = vmatpush1.msra.mxu0 %v2575
        %2582 = vmatprep.subr.mxu0 0.0
        %2583 = vmatpush1.msra.mxu0 %v2576
        %2584 = vmatprep.subr.mxu0 0.0
        %2585 = vmatpush1.msra.mxu0 %v2577
        %2586 = vmatprep.subr.mxu0 0.0
        %2587 = vmatpush1.msra.mxu0 0.0
        %2588 = vmatprep.subr.mxu0 0.0
        %2589 = vmatpush1.msra.mxu0 0.0
        %2590 = vmatprep.subr.mxu0 0.0
        %2591 = vmatpush1.msra.mxu0 0.0
        %2592 = vmatprep.subr.mxu0 0.0
        %2593 = vmatpush1.msra.mxu0 0.0
        %2594 = vmatprep.subr.mxu0 0.0
        %2595 = vmatpush1.msra.mxu0 0.0
        %2596 = vmatprep.subr.mxu0 0.0
        %2597 = vmatpush1.msra.mxu0 0.0
        %2598 = vmatprep.subr.mxu0 0.0
        %2599 = vmatpush1.msra.mxu0 0.0
        %2600 = vmatprep.subr.mxu0 0.0
        %2601 = vmatpush1.msra.mxu0 0.0
        %2602 = vmatprep.subr.mxu0 0.0
        %2603 = vmatpush1.msra.mxu0 0.0
        %2604 = vmatprep.subr.mxu0 0.0
        %2605 = vmatpush1.msra.mxu0 0.0
        %2606 = vmatprep.subr.mxu0 0.0
        %2607 = vmatpush1.msra.mxu0 0.0
        %2608 = vmatprep.subr.mxu0 0.0
        %2609 = vmatpush1.msra.mxu0 0.0
        %2610 = vmatprep.subr.mxu0 0.0
        %2611 = vmatpush1.msra.mxu0 0.0
        %2612 = vmatprep.subr.mxu0 0.0
        %2613 = vmatpush1.msra.mxu0 0.0
        %2614 = vmatprep.subr.mxu0 0.0
        %2615 = vmatpush1.msra.mxu0 0.0
        %2616 = vmatprep.subr.mxu0 0.0
        %2617 = vmatpush1.msra.mxu0 0.0
        %2618 = vmatprep.subr.mxu0 0.0
        %2619 = vmatpush1.msra.mxu0 0.0
        %2620 = vmatprep.subr.mxu0 0.0
        %2621 = vmatpush1.msra.mxu0 0.0
        %2622 = vmatprep.subr.mxu0 0.0
        %2623 = vmatpush1.msra.mxu0 0.0
        %2624 = vmatprep.subr.mxu0 0.0
        %2625 = vmatpush1.msra.mxu0 0.0
        %2626 = vmatprep.subr.mxu0 0.0
        %2627 = vmatpush1.msra.mxu0 0.0
        %2628 = vmatprep.subr.mxu0 0.0
        %2629 = vmatpush1.msra.mxu0 0.0
        %2630 = vmatprep.subr.mxu0 0.0
        %2631 = vmatpush1.msra.mxu0 0.0
        %2632 = vmatprep.subr.mxu0 0.0
        %2633 = vmatpush1.msra.mxu0 0.0
        %2634 = vmatprep.subr.mxu0 0.0
        %2635 = vmatpush1.msra.mxu0 0.0
        %2636 = vmatprep.subr.mxu0 0.0
        %2637 = vmatpush1.msra.mxu0 0.0
        %2638 = vmatprep.subr.mxu0 0.0
        %2639 = vmatpush1.msra.mxu0 0.0
        %2640 = vmatprep.subr.mxu0 0.0
        %2641 = vmatpush1.msra.mxu0 0.0
        %2642 = vmatprep.mubr.f32.mxu0 0.0
        %2643 = vmatmul.mubr.f32.gmra.mrb[0].mxu0 %v626
        %v2644 = vpop.f32.mrb[0].mxu0
        %v2645 = vadd.f32 %v622, %v2644
        %v2646 = vpop.f32.mrb[0].mxu0
        %2647 = vdwg.mxu0
        %v2648 = vmul.f32 %v2477, %v2295
        %v2649 = vmul.f32 %v2479, %v2645
        %v2650 = vsub.f32 %v2648, %v2649
        %vm2651 = vcmp.eq.s32.totalorder %v485, 1
        %v2652 = vsel %vm2651, %v480, 0.0
        %v2653 = vsel %vm2651, %v481, 0.0
        %v2654 = vsel %vm2651, %v482, 0.0
        %v2655 = vsel %vm2651, %v483, 0.0
        %2656 = vadd.xlane.f32.xlu0 %v2652
        %v2657 = vpop.xlane.xlu0 %2656
        %2658 = vadd.xlane.f32.xlu0 %v2653
        %v2659 = vpop.xlane.xlu0 %2658
        %2660 = vadd.xlane.f32.xlu0 %v2654
        %v2661 = vpop.xlane.xlu0 %2660
        %2662 = vadd.xlane.f32.xlu0 %v2655
        %v2663 = vpop.xlane.xlu0 %2662
        %s2664 = sld [smem:[#allocation4 + $0x1]]
        %s2665 = sld [smem:[#allocation5 + $0x1]]
        %v2667 = vsel %vm376, %v2481, 0
        %2669 = vmatprep.subr.mxu0 0.0
        %2670 = vmatpush1.msra.mxu0 %v2667
        %2671 = vmatprep.subr.mxu0 0.0
        %2672 = vmatpush1.msra.mxu0 0.0
        %2673 = vmatprep.subr.mxu0 0.0
        %2674 = vmatpush1.msra.mxu0 0.0
        %2675 = vmatprep.subr.mxu0 0.0
        %2676 = vmatpush1.msra.mxu0 0.0
        %2677 = vmatprep.subr.mxu0 0.0
        %2678 = vmatpush1.msra.mxu0 0.0
        %2679 = vmatprep.subr.mxu0 0.0
        %2680 = vmatpush1.msra.mxu0 0.0
        %2681 = vmatprep.subr.mxu0 0.0
        %2682 = vmatpush1.msra.mxu0 0.0
        %2683 = vmatprep.subr.mxu0 0.0
        %2684 = vmatpush1.msra.mxu0 0.0
        %2685 = vmatprep.subr.mxu0 0.0
        %2686 = vmatpush1.msra.mxu0 0.0
        %2687 = vmatprep.subr.mxu0 0.0
        %2688 = vmatpush1.msra.mxu0 0.0
        %2689 = vmatprep.subr.mxu0 0.0
        %2690 = vmatpush1.msra.mxu0 0.0
        %2691 = vmatprep.subr.mxu0 0.0
        %2692 = vmatpush1.msra.mxu0 0.0
        %2693 = vmatprep.subr.mxu0 0.0
        %2694 = vmatpush1.msra.mxu0 0.0
        %2695 = vmatprep.subr.mxu0 0.0
        %2696 = vmatpush1.msra.mxu0 0.0
        %2697 = vmatprep.subr.mxu0 0.0
        %2698 = vmatpush1.msra.mxu0 0.0
        %2699 = vmatprep.subr.mxu0 0.0
        %2700 = vmatpush1.msra.mxu0 0.0
        %2701 = vmatprep.subr.mxu0 0.0
        %2702 = vmatpush1.msra.mxu0 0.0
        %2703 = vmatprep.subr.mxu0 0.0
        %2704 = vmatpush1.msra.mxu0 0.0
        %2705 = vmatprep.subr.mxu0 0.0
        %2706 = vmatpush1.msra.mxu0 0.0
        %2707 = vmatprep.subr.mxu0 0.0
        %2708 = vmatpush1.msra.mxu0 0.0
        %2709 = vmatprep.subr.mxu0 0.0
        %2710 = vmatpush1.msra.mxu0 0.0
        %2711 = vmatprep.subr.mxu0 0.0
        %2712 = vmatpush1.msra.mxu0 0.0
        %2713 = vmatprep.subr.mxu0 0.0
        %2714 = vmatpush1.msra.mxu0 0.0
        %2715 = vmatprep.subr.mxu0 0.0
        %2716 = vmatpush1.msra.mxu0 0.0
        %2717 = vmatprep.subr.mxu0 0.0
        %2718 = vmatpush1.msra.mxu0 0.0
        %2719 = vmatprep.subr.mxu0 0.0
        %2720 = vmatpush1.msra.mxu0 0.0
        %2721 = vmatprep.subr.mxu0 0.0
        %2722 = vmatpush1.msra.mxu0 0.0
        %2723 = vmatprep.subr.mxu0 0.0
        %2724 = vmatpush1.msra.mxu0 0.0
        %2725 = vmatprep.subr.mxu0 0.0
        %2726 = vmatpush1.msra.mxu0 0.0
        %2727 = vmatprep.subr.mxu0 0.0
        %2728 = vmatpush1.msra.mxu0 0.0
        %2729 = vmatprep.subr.mxu0 0.0
        %2730 = vmatpush1.msra.mxu0 0.0
        %2731 = vmatprep.subr.mxu0 0.0
        %2732 = vmatpush1.msra.mxu0 0.0
        %2733 = vmatprep.mubr.f32.mxu0 0.0
        %2734 = vmatmul.mubr.f32.gmra.mrb[0].mxu0 %v512
        %v2735 = vpop.f32.mrb[0].mxu0
        %v2736 = vadd.f32 %v507, %v2735
        %v2737 = vpop.f32.mrb[0].mxu0
        %2738 = vmatprep.mubr.f32.mxu0 0.0
        %2739 = vmatmul.mubr.f32.gmra.mrb[0].mxu0 %v515
        %v2740 = vpop.f32.mrb[0].mxu0
        %v2741 = vadd.f32 %v508, %v2740
        %v2742 = vpop.f32.mrb[0].mxu0
        %2743 = vmatprep.mubr.f32.mxu0 0.0
        %2744 = vmatmul.mubr.f32.gmra.mrb[0].mxu0 %v518
        %v2745 = vpop.f32.mrb[0].mxu0
        %v2746 = vadd.f32 %v509, %v2745
        %v2747 = vpop.f32.mrb[0].mxu0
        %2748 = vmatprep.mubr.f32.mxu0 0.0
        %2749 = vmatmul.mubr.f32.gmra.mrb[0].mxu0 %v521
        %v2750 = vpop.f32.mrb[0].mxu0
        %v2751 = vadd.f32 %v510, %v2750
        %v2752 = vpop.f32.mrb[0].mxu0
        %2753 = vdwg.mxu0
        %v2754 = vadd.f32 %v2736, %v2657
        %v2755 = vadd.f32 %v2741, %v2659
        %v2756 = vadd.f32 %v2746, %v2661
        %v2757 = vadd.f32 %v2751, %v2663
        %v2758 = vmax.f32 %v2754, 0.0
        %v2759 = vmax.f32 %v2755, 0.0
        %v2760 = vmax.f32 %v2756, 0.0
        %v2761 = vmax.f32 %v2757, 0.0
        %2762 = vmatprep.subr.mxu0 0.0
        %2763 = vmatpush1.msra.mxu0 %v2758
        %2764 = vmatprep.subr.mxu0 0.0
        %2765 = vmatpush1.msra.mxu0 %v2759
        %2766 = vmatprep.subr.mxu0 0.0
        %2767 = vmatpush1.msra.mxu0 %v2760
        %2768 = vmatprep.subr.mxu0 0.0
        %2769 = vmatpush1.msra.mxu0 %v2761
        %2770 = vmatprep.subr.mxu0 0.0
        %2771 = vmatpush1.msra.mxu0 0.0
        %2772 = vmatprep.subr.mxu0 0.0
        %2773 = vmatpush1.msra.mxu0 0.0
        %2774 = vmatprep.subr.mxu0 0.0
        %2775 = vmatpush1.msra.mxu0 0.0
        %2776 = vmatprep.subr.mxu0 0.0
        %2777 = vmatpush1.msra.mxu0 0.0
        %2778 = vmatprep.subr.mxu0 0.0
        %2779 = vmatpush1.msra.mxu0 0.0
        %2780 = vmatprep.subr.mxu0 0.0
        %2781 = vmatpush1.msra.mxu0 0.0
        %2782 = vmatprep.subr.mxu0 0.0
        %2783 = vmatpush1.msra.mxu0 0.0
        %2784 = vmatprep.subr.mxu0 0.0
        %2785 = vmatpush1.msra.mxu0 0.0
        %2786 = vmatprep.subr.mxu0 0.0
        %2787 = vmatpush1.msra.mxu0 0.0
        %2788 = vmatprep.subr.mxu0 0.0
        %2789 = vmatpush1.msra.mxu0 0.0
        %2790 = vmatprep.subr.mxu0 0.0
        %2791 = vmatpush1.msra.mxu0 0.0
        %2792 = vmatprep.subr.mxu0 0.0
        %2793 = vmatpush1.msra.mxu0 0.0
        %2794 = vmatprep.subr.mxu0 0.0
        %2795 = vmatpush1.msra.mxu0 0.0
        %2796 = vmatprep.subr.mxu0 0.0
        %2797 = vmatpush1.msra.mxu0 0.0
        %2798 = vmatprep.subr.mxu0 0.0
        %2799 = vmatpush1.msra.mxu0 0.0
        %2800 = vmatprep.subr.mxu0 0.0
        %2801 = vmatpush1.msra.mxu0 0.0
        %2802 = vmatprep.subr.mxu0 0.0
        %2803 = vmatpush1.msra.mxu0 0.0
        %2804 = vmatprep.subr.mxu0 0.0
        %2805 = vmatpush1.msra.mxu0 0.0
        %2806 = vmatprep.subr.mxu0 0.0
        %2807 = vmatpush1.msra.mxu0 0.0
        %2808 = vmatprep.subr.mxu0 0.0
        %2809 = vmatpush1.msra.mxu0 0.0
        %2810 = vmatprep.subr.mxu0 0.0
        %2811 = vmatpush1.msra.mxu0 0.0
        %2812 = vmatprep.subr.mxu0 0.0
        %2813 = vmatpush1.msra.mxu0 0.0
        %2814 = vmatprep.subr.mxu0 0.0
        %2815 = vmatpush1.msra.mxu0 0.0
        %2816 = vmatprep.subr.mxu0 0.0
        %2817 = vmatpush1.msra.mxu0 0.0
        %2818 = vmatprep.subr.mxu0 0.0
        %2819 = vmatpush1.msra.mxu0 0.0
        %2820 = vmatprep.subr.mxu0 0.0
        %2821 = vmatpush1.msra.mxu0 0.0
        %2822 = vmatprep.subr.mxu0 0.0
        %2823 = vmatpush1.msra.mxu0 0.0
        %2824 = vmatprep.subr.mxu0 0.0
        %2825 = vmatpush1.msra.mxu0 0.0
        %2826 = vmatprep.mubr.f32.mxu0 0.0
        %2827 = vmatmul.mubr.f32.gmra.mrb[0].mxu0 %v626
        %v2828 = vpop.f32.mrb[0].mxu0
        %v2829 = vadd.f32 %v622, %v2828
        %v2830 = vpop.f32.mrb[0].mxu0
        %2831 = vdwg.mxu0
        %v2832 = vstv %s2664
        %v2833 = vmul.f32 %v2832, %v2481
        %v2834 = vstv %s2665
        %v2835 = vmul.f32 %v2834, %v2829
        %v2836 = vsub.f32 %v2833, %v2835
        %v2838 = vsel %vm376, %v2650, 0
        %2840 = vmatprep.subr.mxu0 0.0
        %2841 = vmatpush1.msra.mxu0 %v2838
        %2842 = vmatprep.subr.mxu0 0.0
        %2843 = vmatpush1.msra.mxu0 0.0
        %2844 = vmatprep.subr.mxu0 0.0
        %2845 = vmatpush1.msra.mxu0 0.0
        %2846 = vmatprep.subr.mxu0 0.0
        %2847 = vmatpush1.msra.mxu0 0.0
        %2848 = vmatprep.subr.mxu0 0.0
        %2849 = vmatpush1.msra.mxu0 0.0
        %2850 = vmatprep.subr.mxu0 0.0
        %2851 = vmatpush1.msra.mxu0 0.0
        %2852 = vmatprep.subr.mxu0 0.0
        %2853 = vmatpush1.msra.mxu0 0.0
        %2854 = vmatprep.subr.mxu0 0.0
        %2855 = vmatpush1.msra.mxu0 0.0
        %2856 = vmatprep.subr.mxu0 0.0
        %2857 = vmatpush1.msra.mxu0 0.0
        %2858 = vmatprep.subr.mxu0 0.0
        %2859 = vmatpush1.msra.mxu0 0.0
        %2860 = vmatprep.subr.mxu0 0.0
        %2861 = vmatpush1.msra.mxu0 0.0
        %2862 = vmatprep.subr.mxu0 0.0
        %2863 = vmatpush1.msra.mxu0 0.0
        %2864 = vmatprep.subr.mxu0 0.0
        %2865 = vmatpush1.msra.mxu0 0.0
        %2866 = vmatprep.subr.mxu0 0.0
        %2867 = vmatpush1.msra.mxu0 0.0
        %2868 = vmatprep.subr.mxu0 0.0
        %2869 = vmatpush1.msra.mxu0 0.0
        %2870 = vmatprep.subr.mxu0 0.0
        %2871 = vmatpush1.msra.mxu0 0.0
        %2872 = vmatprep.subr.mxu0 0.0
        %2873 = vmatpush1.msra.mxu0 0.0
        %2874 = vmatprep.subr.mxu0 0.0
        %2875 = vmatpush1.msra.mxu0 0.0
        %2876 = vmatprep.subr.mxu0 0.0
        %2877 = vmatpush1.msra.mxu0 0.0
        %2878 = vmatprep.subr.mxu0 0.0
        %2879 = vmatpush1.msra.mxu0 0.0
        %2880 = vmatprep.subr.mxu0 0.0
        %2881 = vmatpush1.msra.mxu0 0.0
        %2882 = vmatprep.subr.mxu0 0.0
        %2883 = vmatpush1.msra.mxu0 0.0
        %2884 = vmatprep.subr.mxu0 0.0
        %2885 = vmatpush1.msra.mxu0 0.0
        %2886 = vmatprep.subr.mxu0 0.0
        %2887 = vmatpush1.msra.mxu0 0.0
        %2888 = vmatprep.subr.mxu0 0.0
        %2889 = vmatpush1.msra.mxu0 0.0
        %2890 = vmatprep.subr.mxu0 0.0
        %2891 = vmatpush1.msra.mxu0 0.0
        %2892 = vmatprep.subr.mxu0 0.0
        %2893 = vmatpush1.msra.mxu0 0.0
        %2894 = vmatprep.subr.mxu0 0.0
        %2895 = vmatpush1.msra.mxu0 0.0
        %2896 = vmatprep.subr.mxu0 0.0
        %2897 = vmatpush1.msra.mxu0 0.0
        %2898 = vmatprep.subr.mxu0 0.0
        %2899 = vmatpush1.msra.mxu0 0.0
        %2900 = vmatprep.subr.mxu0 0.0
        %2901 = vmatpush1.msra.mxu0 0.0
        %2902 = vmatprep.subr.mxu0 0.0
        %2903 = vmatpush1.msra.mxu0 0.0
        %2904 = vmatprep.mubr.f32.mxu0 0.0
        %2905 = vmatmul.mubr.f32.gmra.mrb[0].mxu0 %v512
        %v2906 = vpop.f32.mrb[0].mxu0
        %v2907 = vadd.f32 %v703, %v2906
        %v2908 = vpop.f32.mrb[0].mxu0
        %2909 = vmatprep.mubr.f32.mxu0 0.0
        %2910 = vmatmul.mubr.f32.gmra.mrb[0].mxu0 %v515
        %v2911 = vpop.f32.mrb[0].mxu0
        %v2912 = vadd.f32 %v704, %v2911
        %v2913 = vpop.f32.mrb[0].mxu0
        %2914 = vmatprep.mubr.f32.mxu0 0.0
        %2915 = vmatmul.mubr.f32.gmra.mrb[0].mxu0 %v518
        %v2916 = vpop.f32.mrb[0].mxu0
        %v2917 = vadd.f32 %v705, %v2916
        %v2918 = vpop.f32.mrb[0].mxu0
        %2919 = vmatprep.mubr.f32.mxu0 0.0
        %2920 = vmatmul.mubr.f32.gmra.mrb[0].mxu0 %v521
        %v2921 = vpop.f32.mrb[0].mxu0
        %v2922 = vadd.f32 %v706, %v2921
        %v2923 = vpop.f32.mrb[0].mxu0
        %2924 = vdwg.mxu0
        %v2925 = vadd.f32 %v2907, %v2657
        %v2926 = vadd.f32 %v2912, %v2659
        %v2927 = vadd.f32 %v2917, %v2661
        %v2928 = vadd.f32 %v2922, %v2663
        %v2929 = vmax.f32 %v2925, 0.0
        %v2930 = vmax.f32 %v2926, 0.0
        %v2931 = vmax.f32 %v2927, 0.0
        %v2932 = vmax.f32 %v2928, 0.0
        %2933 = vmatprep.subr.mxu0 0.0
        %2934 = vmatpush1.msra.mxu0 %v2929
        %2935 = vmatprep.subr.mxu0 0.0
        %2936 = vmatpush1.msra.mxu0 %v2930
        %2937 = vmatprep.subr.mxu0 0.0
        %2938 = vmatpush1.msra.mxu0 %v2931
        %2939 = vmatprep.subr.mxu0 0.0
        %2940 = vmatpush1.msra.mxu0 %v2932
        %2941 = vmatprep.subr.mxu0 0.0
        %2942 = vmatpush1.msra.mxu0 0.0
        %2943 = vmatprep.subr.mxu0 0.0
        %2944 = vmatpush1.msra.mxu0 0.0
        %2945 = vmatprep.subr.mxu0 0.0
        %2946 = vmatpush1.msra.mxu0 0.0
        %2947 = vmatprep.subr.mxu0 0.0
        %2948 = vmatpush1.msra.mxu0 0.0
        %2949 = vmatprep.subr.mxu0 0.0
        %2950 = vmatpush1.msra.mxu0 0.0
        %2951 = vmatprep.subr.mxu0 0.0
        %2952 = vmatpush1.msra.mxu0 0.0
        %2953 = vmatprep.subr.mxu0 0.0
        %2954 = vmatpush1.msra.mxu0 0.0
        %2955 = vmatprep.subr.mxu0 0.0
        %2956 = vmatpush1.msra.mxu0 0.0
        %2957 = vmatprep.subr.mxu0 0.0
        %2958 = vmatpush1.msra.mxu0 0.0
        %2959 = vmatprep.subr.mxu0 0.0
        %2960 = vmatpush1.msra.mxu0 0.0
        %2961 = vmatprep.subr.mxu0 0.0
        %2962 = vmatpush1.msra.mxu0 0.0
        %2963 = vmatprep.subr.mxu0 0.0
        %2964 = vmatpush1.msra.mxu0 0.0
        %2965 = vmatprep.subr.mxu0 0.0
        %2966 = vmatpush1.msra.mxu0 0.0
        %2967 = vmatprep.subr.mxu0 0.0
        %2968 = vmatpush1.msra.mxu0 0.0
        %2969 = vmatprep.subr.mxu0 0.0
        %2970 = vmatpush1.msra.mxu0 0.0
        %2971 = vmatprep.subr.mxu0 0.0
        %2972 = vmatpush1.msra.mxu0 0.0
        %2973 = vmatprep.subr.mxu0 0.0
        %2974 = vmatpush1.msra.mxu0 0.0
        %2975 = vmatprep.subr.mxu0 0.0
        %2976 = vmatpush1.msra.mxu0 0.0
        %2977 = vmatprep.subr.mxu0 0.0
        %2978 = vmatpush1.msra.mxu0 0.0
        %2979 = vmatprep.subr.mxu0 0.0
        %2980 = vmatpush1.msra.mxu0 0.0
        %2981 = vmatprep.subr.mxu0 0.0
        %2982 = vmatpush1.msra.mxu0 0.0
        %2983 = vmatprep.subr.mxu0 0.0
        %2984 = vmatpush1.msra.mxu0 0.0
        %2985 = vmatprep.subr.mxu0 0.0
        %2986 = vmatpush1.msra.mxu0 0.0
        %2987 = vmatprep.subr.mxu0 0.0
        %2988 = vmatpush1.msra.mxu0 0.0
        %2989 = vmatprep.subr.mxu0 0.0
        %2990 = vmatpush1.msra.mxu0 0.0
        %2991 = vmatprep.subr.mxu0 0.0
        %2992 = vmatpush1.msra.mxu0 0.0
        %2993 = vmatprep.subr.mxu0 0.0
        %2994 = vmatpush1.msra.mxu0 0.0
        %2995 = vmatprep.subr.mxu0 0.0
        %2996 = vmatpush1.msra.mxu0 0.0
        %2997 = vmatprep.mubr.f32.mxu0 0.0
        %2998 = vmatmul.mubr.f32.gmra.mrb[0].mxu0 %v626
        %v2999 = vpop.f32.mrb[0].mxu0
        %v3000 = vadd.f32 %v622, %v2999
        %v3001 = vpop.f32.mrb[0].mxu0
        %3002 = vdwg.mxu0
        %v3003 = vmul.f32 %v2832, %v2650
        %v3004 = vmul.f32 %v2834, %v3000
        %v3005 = vsub.f32 %v3003, %v3004
        %vm3006 = vcmp.eq.s32.totalorder %v485, 0
        %v3007 = vsel %vm3006, %v480, 0.0
        %v3008 = vsel %vm3006, %v481, 0.0
        %v3009 = vsel %vm3006, %v482, 0.0
        %v3010 = vsel %vm3006, %v483, 0.0
        %3011 = vadd.xlane.f32.xlu0 %v3007
        %v3012 = vpop.xlane.xlu0 %3011
        %3013 = vadd.xlane.f32.xlu0 %v3008
        %v3014 = vpop.xlane.xlu0 %3013
        %3015 = vadd.xlane.f32.xlu0 %v3009
        %v3016 = vpop.xlane.xlu0 %3015
        %3017 = vadd.xlane.f32.xlu0 %v3010
        %v3018 = vpop.xlane.xlu0 %3017
        %s3019 = sld [smem:[#allocation4]]
        %s3020 = sld [smem:[#allocation5]]
        %v3022 = vsel %vm376, %v2836, 0
        %3024 = vmatprep.subr.mxu0 0.0
        %3025 = vmatpush1.msra.mxu0 %v3022
        %3026 = vmatprep.subr.mxu0 0.0
        %3027 = vmatpush1.msra.mxu0 0.0
        %3028 = vmatprep.subr.mxu0 0.0
        %3029 = vmatpush1.msra.mxu0 0.0
        %3030 = vmatprep.subr.mxu0 0.0
        %3031 = vmatpush1.msra.mxu0 0.0
        %3032 = vmatprep.subr.mxu0 0.0
        %3033 = vmatpush1.msra.mxu0 0.0
        %3034 = vmatprep.subr.mxu0 0.0
        %3035 = vmatpush1.msra.mxu0 0.0
        %3036 = vmatprep.subr.mxu0 0.0
        %3037 = vmatpush1.msra.mxu0 0.0
        %3038 = vmatprep.subr.mxu0 0.0
        %3039 = vmatpush1.msra.mxu0 0.0
        %3040 = vmatprep.subr.mxu0 0.0
        %3041 = vmatpush1.msra.mxu0 0.0
        %3042 = vmatprep.subr.mxu0 0.0
        %3043 = vmatpush1.msra.mxu0 0.0
        %3044 = vmatprep.subr.mxu0 0.0
        %3045 = vmatpush1.msra.mxu0 0.0
        %3046 = vmatprep.subr.mxu0 0.0
        %3047 = vmatpush1.msra.mxu0 0.0
        %3048 = vmatprep.subr.mxu0 0.0
        %3049 = vmatpush1.msra.mxu0 0.0
        %3050 = vmatprep.subr.mxu0 0.0
        %3051 = vmatpush1.msra.mxu0 0.0
        %3052 = vmatprep.subr.mxu0 0.0
        %3053 = vmatpush1.msra.mxu0 0.0
        %3054 = vmatprep.subr.mxu0 0.0
        %3055 = vmatpush1.msra.mxu0 0.0
        %3056 = vmatprep.subr.mxu0 0.0
        %3057 = vmatpush1.msra.mxu0 0.0
        %3058 = vmatprep.subr.mxu0 0.0
        %3059 = vmatpush1.msra.mxu0 0.0
        %3060 = vmatprep.subr.mxu0 0.0
        %3061 = vmatpush1.msra.mxu0 0.0
        %3062 = vmatprep.subr.mxu0 0.0
        %3063 = vmatpush1.msra.mxu0 0.0
        %3064 = vmatprep.subr.mxu0 0.0
        %3065 = vmatpush1.msra.mxu0 0.0
        %3066 = vmatprep.subr.mxu0 0.0
        %3067 = vmatpush1.msra.mxu0 0.0
        %3068 = vmatprep.subr.mxu0 0.0
        %3069 = vmatpush1.msra.mxu0 0.0
        %3070 = vmatprep.subr.mxu0 0.0
        %3071 = vmatpush1.msra.mxu0 0.0
        %3072 = vmatprep.subr.mxu0 0.0
        %3073 = vmatpush1.msra.mxu0 0.0
        %3074 = vmatprep.subr.mxu0 0.0
        %3075 = vmatpush1.msra.mxu0 0.0
        %3076 = vmatprep.subr.mxu0 0.0
        %3077 = vmatpush1.msra.mxu0 0.0
        %3078 = vmatprep.subr.mxu0 0.0
        %3079 = vmatpush1.msra.mxu0 0.0
        %3080 = vmatprep.subr.mxu0 0.0
        %3081 = vmatpush1.msra.mxu0 0.0
        %3082 = vmatprep.subr.mxu0 0.0
        %3083 = vmatpush1.msra.mxu0 0.0
        %3084 = vmatprep.subr.mxu0 0.0
        %3085 = vmatpush1.msra.mxu0 0.0
        %3086 = vmatprep.subr.mxu0 0.0
        %3087 = vmatpush1.msra.mxu0 0.0
        %3088 = vmatprep.mubr.f32.mxu0 0.0
        %3089 = vmatmul.mubr.f32.gmra.mrb[0].mxu0 %v512
        %v3090 = vpop.f32.mrb[0].mxu0
        %v3091 = vadd.f32 %v507, %v3090
        %v3092 = vpop.f32.mrb[0].mxu0
        %3093 = vmatprep.mubr.f32.mxu0 0.0
        %3094 = vmatmul.mubr.f32.gmra.mrb[0].mxu0 %v515
        %v3095 = vpop.f32.mrb[0].mxu0
        %v3096 = vadd.f32 %v508, %v3095
        %v3097 = vpop.f32.mrb[0].mxu0
        %3098 = vmatprep.mubr.f32.mxu0 0.0
        %3099 = vmatmul.mubr.f32.gmra.mrb[0].mxu0 %v518
        %v3100 = vpop.f32.mrb[0].mxu0
        %v3101 = vadd.f32 %v509, %v3100
        %v3102 = vpop.f32.mrb[0].mxu0
        %3103 = vmatprep.mubr.f32.mxu0 0.0
        %3104 = vmatmul.mubr.f32.gmra.mrb[0].mxu0 %v521
        %v3105 = vpop.f32.mrb[0].mxu0
        %v3106 = vadd.f32 %v510, %v3105
        %v3107 = vpop.f32.mrb[0].mxu0
        %3108 = vdwg.mxu0
        %v3109 = vadd.f32 %v3091, %v3012
        %v3110 = vadd.f32 %v3096, %v3014
        %v3111 = vadd.f32 %v3101, %v3016
        %v3112 = vadd.f32 %v3106, %v3018
        %v3113 = vmax.f32 %v3109, 0.0
        %v3114 = vmax.f32 %v3110, 0.0
        %v3115 = vmax.f32 %v3111, 0.0
        %v3116 = vmax.f32 %v3112, 0.0
        %3117 = vmatprep.subr.mxu0 0.0
        %3118 = vmatpush1.msra.mxu0 %v3113
        %3119 = vmatprep.subr.mxu0 0.0
        %3120 = vmatpush1.msra.mxu0 %v3114
        %3121 = vmatprep.subr.mxu0 0.0
        %3122 = vmatpush1.msra.mxu0 %v3115
        %3123 = vmatprep.subr.mxu0 0.0
        %3124 = vmatpush1.msra.mxu0 %v3116
        %3125 = vmatprep.subr.mxu0 0.0
        %3126 = vmatpush1.msra.mxu0 0.0
        %3127 = vmatprep.subr.mxu0 0.0
        %3128 = vmatpush1.msra.mxu0 0.0
        %3129 = vmatprep.subr.mxu0 0.0
        %3130 = vmatpush1.msra.mxu0 0.0
        %3131 = vmatprep.subr.mxu0 0.0
        %3132 = vmatpush1.msra.mxu0 0.0
        %3133 = vmatprep.subr.mxu0 0.0
        %3134 = vmatpush1.msra.mxu0 0.0
        %3135 = vmatprep.subr.mxu0 0.0
        %3136 = vmatpush1.msra.mxu0 0.0
        %3137 = vmatprep.subr.mxu0 0.0
        %3138 = vmatpush1.msra.mxu0 0.0
        %3139 = vmatprep.subr.mxu0 0.0
        %3140 = vmatpush1.msra.mxu0 0.0
        %3141 = vmatprep.subr.mxu0 0.0
        %3142 = vmatpush1.msra.mxu0 0.0
        %3143 = vmatprep.subr.mxu0 0.0
        %3144 = vmatpush1.msra.mxu0 0.0
        %3145 = vmatprep.subr.mxu0 0.0
        %3146 = vmatpush1.msra.mxu0 0.0
        %3147 = vmatprep.subr.mxu0 0.0
        %3148 = vmatpush1.msra.mxu0 0.0
        %3149 = vmatprep.subr.mxu0 0.0
        %3150 = vmatpush1.msra.mxu0 0.0
        %3151 = vmatprep.subr.mxu0 0.0
        %3152 = vmatpush1.msra.mxu0 0.0
        %3153 = vmatprep.subr.mxu0 0.0
        %3154 = vmatpush1.msra.mxu0 0.0
        %3155 = vmatprep.subr.mxu0 0.0
        %3156 = vmatpush1.msra.mxu0 0.0
        %3157 = vmatprep.subr.mxu0 0.0
        %3158 = vmatpush1.msra.mxu0 0.0
        %3159 = vmatprep.subr.mxu0 0.0
        %3160 = vmatpush1.msra.mxu0 0.0
        %3161 = vmatprep.subr.mxu0 0.0
        %3162 = vmatpush1.msra.mxu0 0.0
        %3163 = vmatprep.subr.mxu0 0.0
        %3164 = vmatpush1.msra.mxu0 0.0
        %3165 = vmatprep.subr.mxu0 0.0
        %3166 = vmatpush1.msra.mxu0 0.0
        %3167 = vmatprep.subr.mxu0 0.0
        %3168 = vmatpush1.msra.mxu0 0.0
        %3169 = vmatprep.subr.mxu0 0.0
        %3170 = vmatpush1.msra.mxu0 0.0
        %3171 = vmatprep.subr.mxu0 0.0
        %3172 = vmatpush1.msra.mxu0 0.0
        %3173 = vmatprep.subr.mxu0 0.0
        %3174 = vmatpush1.msra.mxu0 0.0
        %3175 = vmatprep.subr.mxu0 0.0
        %3176 = vmatpush1.msra.mxu0 0.0
        %3177 = vmatprep.subr.mxu0 0.0
        %3178 = vmatpush1.msra.mxu0 0.0
        %3179 = vmatprep.subr.mxu0 0.0
        %3180 = vmatpush1.msra.mxu0 0.0
        %3181 = vmatprep.mubr.f32.mxu0 0.0
        %3182 = vmatmul.mubr.f32.gmra.mrb[0].mxu0 %v626
        %v3183 = vpop.f32.mrb[0].mxu0
        %v3184 = vadd.f32 %v622, %v3183
        %v3185 = vpop.f32.mrb[0].mxu0
        %3186 = vdwg.mxu0
        %v3187 = vstv %s3019
        %v3188 = vmul.f32 %v3187, %v2836
        %v3189 = vstv %s3020
        %v3190 = vmul.f32 %v3189, %v3184
        %v3191 = vsub.f32 %v3188, %v3190
        %v3193 = vsel %vm376, %v3005, 0
        %3195 = vmatprep.subr.mxu0 0.0
        %3196 = vmatpush1.msra.mxu0 %v3193
        %3197 = vmatprep.subr.mxu0 0.0
        %3198 = vmatpush1.msra.mxu0 0.0
        %3199 = vmatprep.subr.mxu0 0.0
        %3200 = vmatpush1.msra.mxu0 0.0
        %3201 = vmatprep.subr.mxu0 0.0
        %3202 = vmatpush1.msra.mxu0 0.0
        %3203 = vmatprep.subr.mxu0 0.0
        %3204 = vmatpush1.msra.mxu0 0.0
        %3205 = vmatprep.subr.mxu0 0.0
        %3206 = vmatpush1.msra.mxu0 0.0
        %3207 = vmatprep.subr.mxu0 0.0
        %3208 = vmatpush1.msra.mxu0 0.0
        %3209 = vmatprep.subr.mxu0 0.0
        %3210 = vmatpush1.msra.mxu0 0.0
        %3211 = vmatprep.subr.mxu0 0.0
        %3212 = vmatpush1.msra.mxu0 0.0
        %3213 = vmatprep.subr.mxu0 0.0
        %3214 = vmatpush1.msra.mxu0 0.0
        %3215 = vmatprep.subr.mxu0 0.0
        %3216 = vmatpush1.msra.mxu0 0.0
        %3217 = vmatprep.subr.mxu0 0.0
        %3218 = vmatpush1.msra.mxu0 0.0
        %3219 = vmatprep.subr.mxu0 0.0
        %3220 = vmatpush1.msra.mxu0 0.0
        %3221 = vmatprep.subr.mxu0 0.0
        %3222 = vmatpush1.msra.mxu0 0.0
        %3223 = vmatprep.subr.mxu0 0.0
        %3224 = vmatpush1.msra.mxu0 0.0
        %3225 = vmatprep.subr.mxu0 0.0
        %3226 = vmatpush1.msra.mxu0 0.0
        %3227 = vmatprep.subr.mxu0 0.0
        %3228 = vmatpush1.msra.mxu0 0.0
        %3229 = vmatprep.subr.mxu0 0.0
        %3230 = vmatpush1.msra.mxu0 0.0
        %3231 = vmatprep.subr.mxu0 0.0
        %3232 = vmatpush1.msra.mxu0 0.0
        %3233 = vmatprep.subr.mxu0 0.0
        %3234 = vmatpush1.msra.mxu0 0.0
        %3235 = vmatprep.subr.mxu0 0.0
        %3236 = vmatpush1.msra.mxu0 0.0
        %3237 = vmatprep.subr.mxu0 0.0
        %3238 = vmatpush1.msra.mxu0 0.0
        %3239 = vmatprep.subr.mxu0 0.0
        %3240 = vmatpush1.msra.mxu0 0.0
        %3241 = vmatprep.subr.mxu0 0.0
        %3242 = vmatpush1.msra.mxu0 0.0
        %3243 = vmatprep.subr.mxu0 0.0
        %3244 = vmatpush1.msra.mxu0 0.0
        %3245 = vmatprep.subr.mxu0 0.0
        %3246 = vmatpush1.msra.mxu0 0.0
        %3247 = vmatprep.subr.mxu0 0.0
        %3248 = vmatpush1.msra.mxu0 0.0
        %3249 = vmatprep.subr.mxu0 0.0
        %3250 = vmatpush1.msra.mxu0 0.0
        %3251 = vmatprep.subr.mxu0 0.0
        %3252 = vmatpush1.msra.mxu0 0.0
        %3253 = vmatprep.subr.mxu0 0.0
        %3254 = vmatpush1.msra.mxu0 0.0
        %3255 = vmatprep.subr.mxu0 0.0
        %3256 = vmatpush1.msra.mxu0 0.0
        %3257 = vmatprep.subr.mxu0 0.0
        %3258 = vmatpush1.msra.mxu0 0.0
        %3259 = vmatprep.mubr.f32.mxu0 0.0
        %3260 = vmatmul.mubr.f32.gmra.mrb[0].mxu0 %v512
        %v3261 = vpop.f32.mrb[0].mxu0
        %v3262 = vadd.f32 %v703, %v3261
        %v3263 = vpop.f32.mrb[0].mxu0
        %3264 = vmatprep.mubr.f32.mxu0 0.0
        %3265 = vmatmul.mubr.f32.gmra.mrb[0].mxu0 %v515
        %v3266 = vpop.f32.mrb[0].mxu0
        %v3267 = vadd.f32 %v704, %v3266
        %v3268 = vpop.f32.mrb[0].mxu0
        %3269 = vmatprep.mubr.f32.mxu0 0.0
        %3270 = vmatmul.mubr.f32.gmra.mrb[0].mxu0 %v518
        %v3271 = vpop.f32.mrb[0].mxu0
        %v3272 = vadd.f32 %v705, %v3271
        %v3273 = vpop.f32.mrb[0].mxu0
        %3274 = vmatprep.mubr.f32.mxu0 0.0
        %3275 = vmatmul.mubr.f32.gmra.mrb[0].mxu0 %v521
        %v3276 = vpop.f32.mrb[0].mxu0
        %v3277 = vadd.f32 %v706, %v3276
        %v3278 = vpop.f32.mrb[0].mxu0
        %3279 = vdwg.mxu0
        %v3280 = vadd.f32 %v3262, %v3012
        %v3281 = vadd.f32 %v3267, %v3014
        %v3282 = vadd.f32 %v3272, %v3016
        %v3283 = vadd.f32 %v3277, %v3018
        %v3284 = vmax.f32 %v3280, 0.0
        %v3285 = vmax.f32 %v3281, 0.0
        %v3286 = vmax.f32 %v3282, 0.0
        %v3287 = vmax.f32 %v3283, 0.0
        %3288 = vmatprep.subr.mxu0 0.0
        %3289 = vmatpush1.msra.mxu0 %v3284
        %3290 = vmatprep.subr.mxu0 0.0
        %3291 = vmatpush1.msra.mxu0 %v3285
        %3292 = vmatprep.subr.mxu0 0.0
        %3293 = vmatpush1.msra.mxu0 %v3286
        %3294 = vmatprep.subr.mxu0 0.0
        %3295 = vmatpush1.msra.mxu0 %v3287
        %3296 = vmatprep.subr.mxu0 0.0
        %3297 = vmatpush1.msra.mxu0 0.0
        %3298 = vmatprep.subr.mxu0 0.0
        %3299 = vmatpush1.msra.mxu0 0.0
        %3300 = vmatprep.subr.mxu0 0.0
        %3301 = vmatpush1.msra.mxu0 0.0
        %3302 = vmatprep.subr.mxu0 0.0
        %3303 = vmatpush1.msra.mxu0 0.0
        %3304 = vmatprep.subr.mxu0 0.0
        %3305 = vmatpush1.msra.mxu0 0.0
        %3306 = vmatprep.subr.mxu0 0.0
        %3307 = vmatpush1.msra.mxu0 0.0
        %3308 = vmatprep.subr.mxu0 0.0
        %3309 = vmatpush1.msra.mxu0 0.0
        %3310 = vmatprep.subr.mxu0 0.0
        %3311 = vmatpush1.msra.mxu0 0.0
        %3312 = vmatprep.subr.mxu0 0.0
        %3313 = vmatpush1.msra.mxu0 0.0
        %3314 = vmatprep.subr.mxu0 0.0
        %3315 = vmatpush1.msra.mxu0 0.0
        %3316 = vmatprep.subr.mxu0 0.0
        %3317 = vmatpush1.msra.mxu0 0.0
        %3318 = vmatprep.subr.mxu0 0.0
        %3319 = vmatpush1.msra.mxu0 0.0
        %3320 = vmatprep.subr.mxu0 0.0
        %3321 = vmatpush1.msra.mxu0 0.0
        %3322 = vmatprep.subr.mxu0 0.0
        %3323 = vmatpush1.msra.mxu0 0.0
        %3324 = vmatprep.subr.mxu0 0.0
        %3325 = vmatpush1.msra.mxu0 0.0
        %3326 = vmatprep.subr.mxu0 0.0
        %3327 = vmatpush1.msra.mxu0 0.0
        %3328 = vmatprep.subr.mxu0 0.0
        %3329 = vmatpush1.msra.mxu0 0.0
        %3330 = vmatprep.subr.mxu0 0.0
        %3331 = vmatpush1.msra.mxu0 0.0
        %3332 = vmatprep.subr.mxu0 0.0
        %3333 = vmatpush1.msra.mxu0 0.0
        %3334 = vmatprep.subr.mxu0 0.0
        %3335 = vmatpush1.msra.mxu0 0.0
        %3336 = vmatprep.subr.mxu0 0.0
        %3337 = vmatpush1.msra.mxu0 0.0
        %3338 = vmatprep.subr.mxu0 0.0
        %3339 = vmatpush1.msra.mxu0 0.0
        %3340 = vmatprep.subr.mxu0 0.0
        %3341 = vmatpush1.msra.mxu0 0.0
        %3342 = vmatprep.subr.mxu0 0.0
        %3343 = vmatpush1.msra.mxu0 0.0
        %3344 = vmatprep.subr.mxu0 0.0
        %3345 = vmatpush1.msra.mxu0 0.0
        %3346 = vmatprep.subr.mxu0 0.0
        %3347 = vmatpush1.msra.mxu0 0.0
        %3348 = vmatprep.subr.mxu0 0.0
        %3349 = vmatpush1.msra.mxu0 0.0
        %3350 = vmatprep.subr.mxu0 0.0
        %3351 = vmatpush1.msra.mxu0 0.0
        %3352 = vmatprep.mubr.f32.mxu0 0.0
        %3353 = vmatmul.mubr.f32.gmra.mrb[0].mxu0 %v626
        %v3354 = vpop.f32.mrb[0].mxu0
        %v3355 = vadd.f32 %v622, %v3354
        %v3356 = vpop.f32.mrb[0].mxu0
        %3357 = vdwg.mxu0
        %v3358 = vmul.f32 %v3187, %v3005
        %v3359 = vmul.f32 %v3189, %v3355
        %v3360 = vsub.f32 %v3358, %v3359
        %3361 = vst [vmem:[%s334] sm:$0xf] %v3191
        %3362 = vst [vmem:[%s334 + $0x4] sm:$0xf] %v3360
        %s3363 = sand.u32 %s216, 1
        %s3364 = scalar_lea.sflag [#allocation7], %s3363
        %s3365 = sand.u32 %s216, 1
        %s3366 = smul.addr %s3365, 8
        %s3367 = scalar_lea.vmem [#allocation6], %s3366
        // Predicated region
        $region49: #{tpu_custom_call.1} parent=47 // pred_check
          %p3368 = pneg %p226
        $region50: #{tpu_custom_call.1} parent=47 // pred_check_branch
          %3370 = sbr.rel (%p3368) target = $region52
        $region51: #{tpu_custom_call.1} parent=47 // pred_region
          %s3371 = smul.u32 2, %s38
          %s3373 = ssub.s32 128, 128
          %3374 = vsyncadd %s3364, %s3373
          %s3375 = smul.addr %s37, 2
          %s3376 = sadd.s32 %s3371, %s3375
          %s3377 = smul.addr %s3376, 64
          %s3378 = scalar_lea.hbm %s9, %s3377
          %s3380 = sshll.u32 %s3367, 4
          %s3381 = int_to_ptr.vmem [resolvable:$true] %s3380
          %3383 = dma.vmem_to_hbm [thread:$0]  %s3381, 128, %s3378, %s3364
        $region52: #{tpu_custom_call.1} parent=47 // pred_fallthru
          _
      $region48: #{tpu_custom_call.1} parent=5 // pred_fallthru
        _
      %p3384 = scmp.le.s32.totalorder 2, %s28
      // Predicated region
      $region53: #{tpu_custom_call.1} parent=5 // pred_check
        %p3385 = pneg %p3384
      $region54: #{tpu_custom_call.1} parent=5 // pred_check_branch
        %3387 = sbr.rel (%p3385) target = $region56
      $region55: #{tpu_custom_call.1} parent=5 // pred_region
        %s3388 = ssub.s32 %s28, 2
        // Predicated region
        $region57: #{tpu_custom_call.1} parent=55 // pred_check
          %p3389 = pneg %p232
        $region58: #{tpu_custom_call.1} parent=55 // pred_check_branch
          %3391 = sbr.rel (%p3389) target = $region60
        $region59: #{tpu_custom_call.1} parent=55 // pred_region
          %s3392 = sand.u32 %s217, 1
          %s3393 = scalar_lea.sflag [#allocation7], %s3392
          %s3394 = sand.u32 %s217, 1
          %s3395 = smul.addr %s3394, 8
          %s3396 = scalar_lea.vmem [#allocation6], %s3395
          %3397 = dma.done %s3393, 128
        $region60: #{tpu_custom_call.1} parent=55 // pred_fallthru
          _
      $region56: #{tpu_custom_call.1} parent=5 // pred_fallthru
        _
    $region6: #{tpu_custom_call.1} parent=1 // loop_footer
      %s32 = sadd.s32 1, %s28
    $region7: #{tpu_custom_call.1} parent=1 // loop_footer_branch
      %27 = sbr.rel target = $region3
    $region8: #{tpu_custom_call.1} parent=1 // loop_exit
      _
    %3398 = vsyncpa [#allocation7], 1
    %s3399 = scalar_lea.sflag [#allocation7], 1
    %3400 = vsyncpa %s3399, 1

</llo_original>
